<compile_context>
chip_gen: v7x
topology: tpu7x:2x2x1
jax: 0.10.0
libtpu: 0.0.40
codegen_flags: <defaults>
</compile_context>

<pallas_src>
import math

import jax
import jax.numpy as jnp
from jax.experimental import pallas as pl
from jax.experimental.pallas import tpu as pltpu

# ----------------------------- small config ---------------------------------
CHW = (4, 16, 16)          # (C, H, W)
N_PATCHES = 4              # patches per side
N_BLOCKS = 2
HIDDEN_D = 32
N_HEADS = 2
NUM_CLASSES = 10
BATCH = 2

PATCH = CHW[1] // N_PATCHES            # 4
INPUT_D = PATCH * PATCH * CHW[0]       # 64
L = N_PATCHES * N_PATCHES              # 16 patches
SEQ = L + 1                            # +1 class token -> 17
SEQ_PAD = 24                           # tokens padded to a multiple of 8 sublanes
D_HEAD = HIDDEN_D // N_HEADS           # 16
MLP_D = 4 * HIDDEN_D                   # 128
NC_PAD = 128                           # lane-dense output slab width
CLS_OFF = 32                           # cols 32:64 of the output carry xf (cls feats)
LN_EPS = 1e-5

QKV_D = 3 * HIDDEN_D                   # 96   fused q|k|v
QKV_PAD = 128                          # fused qkv padded to a full lane tile


# ------------------------------- kernel -------------------------------------
def _layernorm(x, g, b):
    mu = jnp.mean(x, axis=-1, keepdims=True)
    var = jnp.mean((x - mu) ** 2, axis=-1, keepdims=True)
    return (x - mu) * jax.lax.rsqrt(var + LN_EPS) * g + b


def _erf(x):
    # Abramowitz & Stegun 7.1.26 (|err| <= 1.5e-7): one EUP exp + a few VPU FMAs.
    # Avoids relying on a native erf lowering while matching exact-GELU numerics.
    a1, a2, a3, a4, a5 = (0.254829592, -0.284496736, 1.421413741,
                          -1.453152027, 1.061405429)
    p = 0.3275911
    sgn = jnp.where(x >= 0.0, 1.0, -1.0)
    ax = jnp.abs(x)
    t = 1.0 / (1.0 + p * ax)
    poly = ((((a5 * t + a4) * t + a3) * t + a2) * t + a1) * t
    return sgn * (1.0 - poly * jnp.exp(-ax * ax))


def _gelu_exact(x):
    return 0.5 * x * (1.0 + _erf(x * (1.0 / math.sqrt(2.0))))


def vit_kernel(tok_ref, prefix_ref, mask_ref, emb_w_ref,
               wqkv_ref, bqkv_ref, wo_ref, bo_ref, w1_ref, b1_ref,
               w2_ref, b2_ref, ln_ref, lnf_ref, head_w_ref, head_b_ref,
               out_ref):
    f32 = jnp.float32
    bf16 = jnp.bfloat16

    # Embedding: cls token / pos-embed / emb bias folded into prefix_ref.
    x = jnp.dot(tok_ref[...], emb_w_ref[...],
                preferred_element_type=f32) + prefix_ref[...]      # (TB, D) f32
    mask = mask_ref[...]                                           # (TB, TB) f32

    for blk in range(N_BLOCKS):
        ln_p = ln_ref[blk]                                         # (4, D)

        # ---- MSA branch ----------------------------------------------------
        xn = _layernorm(x, ln_p[0:1, :], ln_p[1:2, :]).astype(bf16)
        # fused q|k|v (scale already folded into wq/bq), 128-lane aligned slab
        qkv = jnp.dot(xn, wqkv_ref[blk],
                      preferred_element_type=f32) + bqkv_ref[blk]  # (TB, 128)
        wo_b = wo_ref[blk]                                         # (D, D) bf16
        msa = bo_ref[blk]                                          # (1, D) f32
        for h in range(N_HEADS):
            qh = qkv[:, h * D_HEAD:(h + 1) * D_HEAD].astype(bf16)
            kh = qkv[:, HIDDEN_D + h * D_HEAD:
                     HIDDEN_D + (h + 1) * D_HEAD].astype(bf16)
            vh = qkv[:, 2 * HIDDEN_D + h * D_HEAD:
                     2 * HIDDEN_D + (h + 1) * D_HEAD].astype(bf16)
            s = jax.lax.dot_general(qh, kh, (((1,), (1,)), ((), ())),
                                    preferred_element_type=f32) + mask
            s = s - jnp.max(s, axis=-1, keepdims=True)
            e = jnp.exp(s)
            attn = e / jnp.sum(e, axis=-1, keepdims=True)          # exact divide
            ho = jnp.dot(attn.astype(bf16), vh,
                         preferred_element_type=f32)               # (TB, d_head)
            # chain straight into the row-split of wo (no scratch writeback)
            msa = msa + jnp.dot(ho.astype(bf16),
                                wo_b[h * D_HEAD:(h + 1) * D_HEAD, :],
                                preferred_element_type=f32)
        x = x + msa

        # ---- MLP branch ------------------------------------------------------
        xn2 = _layernorm(x, ln_p[2:3, :], ln_p[3:4, :]).astype(bf16)
        h1 = jnp.dot(xn2, w1_ref[blk],
                     preferred_element_type=f32) + b1_ref[blk]     # (TB, MLP_D)
        h1 = _gelu_exact(h1)
        h2 = jnp.dot(h1.astype(bf16), w2_ref[blk],
                     preferred_element_type=f32) + b2_ref[blk]
        x = x + h2

    # final norm + classifier; head_w's cols CLS_OFF:CLS_OFF+D hold an identity
    # so the same lane-dense matmul also emits the cls features.
    xf = _layernorm(x, lnf_ref[0:1, :], lnf_ref[1:2, :])
    out_ref[...] = jnp.dot(xf.astype(bf16), head_w_ref[...],
                           preferred_element_type=f32) + head_b_ref[...]


# ------------------------------ wrapper --------------------------------------
def patchify(images):
    # Equivalent of F.unfold(images, kernel_size=p, stride=p).transpose(1, 2)
    B, C, H, W = images.shape
    p = PATCH
    gh, gw = H // p, W // p
    x = images.reshape(B, C, gh, p, gw, p)
    x = x.transpose(0, 2, 4, 1, 3, 5)                     # (B, gh, gw, C, p, p)
    return x.reshape(B, gh * gw, C * p * p)               # (B, L, C*p*p)


def pack_vit_params(params, batch):
    """One-time packing of weights / constants (hoisted out of the call path)."""
    (cls_tok, pos, emb_w, emb_b, ln1g, ln1b, wq, bq, wk, bk, wv, bv, wo, bo,
     ln2g, ln2b, w1, b1, w2, b2, lnfg, lnfb, wc, bc) = params
    scale = 1.0 / math.sqrt(D_HEAD)        # folded into wq/bq (exact: power of 2)

    zpad_w = jnp.zeros((N_BLOCKS, HIDDEN_D, QKV_PAD - QKV_D), jnp.float32)
    zpad_b = jnp.zeros((N_BLOCKS, 1, QKV_PAD - QKV_D), jnp.float32)
    wqkv = jnp.concatenate([wq * scale, wk, wv, zpad_w], axis=-1)   # (NB, D, 128)
    bqkv = jnp.concatenate([bq * scale, bk, bv, zpad_b], axis=-1)   # (NB, 1, 128)

    ln_par = jnp.concatenate([ln1g, ln1b, ln2g, ln2b], axis=1)      # (NB, 4, D)
    lnf = jnp.concatenate([lnfg, lnfb], axis=0)                     # (2, D)

    head_w = jnp.zeros((HIDDEN_D, NC_PAD), jnp.float32)
    head_w = head_w.at[:, :NUM_CLASSES].set(wc)
    head_w = head_w.at[:, CLS_OFF:CLS_OFF + HIDDEN_D].set(jnp.eye(HIDDEN_D))
    head_b = jnp.zeros((1, NC_PAD), jnp.float32).at[:, :NUM_CLASSES].set(bc)

    # additive prefix: row0 = cls+pos[0], rows 1..16 = emb_b+pos[1:], rest 0
    prefix = jnp.zeros((SEQ_PAD, HIDDEN_D), jnp.float32)
    prefix = prefix.at[0, :].set(cls_tok[0] + pos[0])
    prefix = prefix.at[1:SEQ, :].set(emb_b + pos[1:SEQ])
    prefix = jnp.tile(prefix, (batch, 1))                           # (TB, D)

    # block-diagonal attention mask (also masks padded key rows)
    tb = batch * SEQ_PAD
    tid = jnp.arange(tb)
    same_img = (tid[:, None] // SEQ_PAD) == (tid[None, :] // SEQ_PAD)
    key_valid = (tid[None, :] % SEQ_PAD) < SEQ
    attn_mask = jnp.where(same_img & key_valid, 0.0, -1e9).astype(jnp.float32)

    bf16 = jnp.bfloat16
    return dict(
        prefix=prefix, mask=attn_mask,
        emb_w=emb_w.astype(bf16),
        wqkv=wqkv.astype(bf16), bqkv=bqkv,
        wo=wo.astype(bf16), bo=bo,
        w1=w1.astype(bf16), b1=b1,
        w2=w2.astype(bf16), b2=b2,
        ln=ln_par, lnf=lnf,
        head_w=head_w.astype(bf16), head_b=head_b,
    )


def vit_forward_pallas(images, packed):
    B = images.shape[0]
    TB = B * SEQ_PAD
    assert packed["prefix"].shape[0] == TB, "packed params built for another batch"

    # patch tokens, placed at rows 1..16 of each 24-row image stack (bf16)
    patches = patchify(images).astype(jnp.float32)                 # (B, L, 64)
    tok = jnp.pad(patches, ((0, 0), (1, SEQ_PAD - 1 - L), (0, 0)))
    tok = tok.reshape(TB, INPUT_D).astype(jnp.bfloat16)

    inputs = (tok, packed["prefix"], packed["mask"], packed["emb_w"],
              packed["wqkv"], packed["bqkv"], packed["wo"], packed["bo"],
              packed["w1"], packed["b1"], packed["w2"], packed["b2"],
              packed["ln"], packed["lnf"], packed["head_w"], packed["head_b"])

    def full_spec(shape):
        nd = len(shape)
        return pl.BlockSpec(shape, lambda i, _nd=nd: (0,) * _nd)

    out = pl.pallas_call(
        vit_kernel,
        out_shape=jax.ShapeDtypeStruct((TB, NC_PAD), jnp.float32),
        grid=(1,),
        in_specs=[full_spec(a.shape) for a in inputs],
        out_specs=full_spec((TB, NC_PAD)),
        compiler_params=pltpu.CompilerParams(
            dimension_semantics=("arbitrary",)),
    )(*inputs)

    rows = jnp.arange(B) * SEQ_PAD                   # cls-token row per image
    logits = out[rows, :NUM_CLASSES]
    cls_out = out[rows, CLS_OFF:CLS_OFF + HIDDEN_D]
    return logits, cls_out


# ---------------------- pure-JAX reference (for checking) --------------------
def vit_forward_reference(images, params, matmul_dtype=jnp.float32):
    """Reference forward; matmul_dtype lets us build a reference whose MXU-operand
    precision matches the kernel (bf16) for a tight correctness check."""
    (cls_tok, pos, emb_w, emb_b, ln1g, ln1b, wq, bq, wk, bk, wv, bv, wo, bo,
     ln2g, ln2b, w1, b1, w2, b2, lnfg, lnfb, wc, bc) = params
    B = images.shape[0]
    md = matmul_dtype

    def mm(a, b):
        return jax.lax.dot_general(
            a.astype(md), b.astype(md),
            (((a.ndim - 1,), (0,)), ((), ())),
            preferred_element_type=jnp.float32)

    patches = patchify(images).astype(jnp.float32)
    emb = mm(patches, emb_w) + emb_b
    cls = jnp.broadcast_to(cls_tok[None], (B, 1, HIDDEN_D))
    x = jnp.concatenate([cls, emb], axis=1) + pos[None]

    def ln(x, g, b):
        mu = jnp.mean(x, axis=-1, keepdims=True)
        var = jnp.mean((x - mu) ** 2, axis=-1, keepdims=True)
        return (x - mu) / jnp.sqrt(var + LN_EPS) * g + b

    scale = 1.0 / math.sqrt(D_HEAD)
    for blk in range(N_BLOCKS):
        xn = ln(x, ln1g[blk], ln1b[blk])
        q = mm(xn, wq[blk]) + bq[blk]
        k = mm(xn, wk[blk]) + bk[blk]
        v = mm(xn, wv[blk]) + bv[blk]
        outs = []
        for h in range(N_HEADS):
            sl = slice(h * D_HEAD, (h + 1) * D_HEAD)
            qh, kh, vh = q[..., sl], k[..., sl], v[..., sl]
            s = jnp.einsum("bqd,bkd->bqk", qh.astype(md), kh.astype(md),
                           preferred_element_type=jnp.float32) * scale
            a = jax.nn.softmax(s, axis=-1)
            outs.append(jnp.einsum("bqk,bkd->bqd", a.astype(md), vh.astype(md),
                                   preferred_element_type=jnp.float32))
        o = jnp.concatenate(outs, axis=-1)
        x = x + (mm(o, wo[blk]) + bo[blk])
        xn2 = ln(x, ln2g[blk], ln2b[blk])
        h1 = jax.nn.gelu(mm(xn2, w1[blk]) + b1[blk], approximate=False)
        x = x + (mm(h1, w2[blk]) + b2[blk])

    xf = ln(x, lnfg, lnfb)
    cls_vec = xf[:, 0, :]
    logits = mm(cls_vec, wc) + bc
    return logits, cls_vec


# ------------------------------- params --------------------------------------
def init_params(key):
    ks = jax.random.split(key, 16)

    def trunc(k, shape, std=0.02):
        return std * jax.random.truncated_normal(k, -2.0, 2.0, shape, jnp.float32)

    def xavier(k, shape):
        fan_in, fan_out = shape[-2], shape[-1]
        lim = math.sqrt(6.0 / (fan_in + fan_out))
        return jax.random.uniform(k, shape, jnp.float32, -lim, lim)

    def linear_default(k, shape):
        lim = 1.0 / math.sqrt(shape[-2])
        return jax.random.uniform(k, shape, jnp.float32, -lim, lim)

    cls_tok = trunc(ks[0], (1, HIDDEN_D))
    pos = jnp.zeros((SEQ, HIDDEN_D), jnp.float32)          # zeroed in _init_weights
    emb_w = trunc(ks[1], (INPUT_D, HIDDEN_D))
    emb_b = jnp.zeros((1, HIDDEN_D), jnp.float32)

    ln1g = jnp.ones((N_BLOCKS, 1, HIDDEN_D), jnp.float32)
    ln1b = jnp.zeros((N_BLOCKS, 1, HIDDEN_D), jnp.float32)
    wq = xavier(ks[2], (N_BLOCKS, HIDDEN_D, HIDDEN_D))
    wk = xavier(ks[3], (N_BLOCKS, HIDDEN_D, HIDDEN_D))
    wv = xavier(ks[4], (N_BLOCKS, HIDDEN_D, HIDDEN_D))
    wo = xavier(ks[5], (N_BLOCKS, HIDDEN_D, HIDDEN_D))
    bq = jnp.zeros((N_BLOCKS, 1, HIDDEN_D), jnp.float32)
    bk = jnp.zeros((N_BLOCKS, 1, HIDDEN_D), jnp.float32)
    bv = jnp.zeros((N_BLOCKS, 1, HIDDEN_D), jnp.float32)
    bo = jnp.zeros((N_BLOCKS, 1, HIDDEN_D), jnp.float32)
    ln2g = jnp.ones((N_BLOCKS, 1, HIDDEN_D), jnp.float32)
    ln2b = jnp.zeros((N_BLOCKS, 1, HIDDEN_D), jnp.float32)
    w1 = linear_default(ks[6], (N_BLOCKS, HIDDEN_D, MLP_D))
    b1 = jnp.zeros((N_BLOCKS, 1, MLP_D), jnp.float32)
    w2 = linear_default(ks[7], (N_BLOCKS, MLP_D, HIDDEN_D))
    b2 = jnp.zeros((N_BLOCKS, 1, HIDDEN_D), jnp.float32)

    lnfg = jnp.ones((1, HIDDEN_D), jnp.float32)
    lnfb = jnp.zeros((1, HIDDEN_D), jnp.float32)
    wc = xavier(ks[8], (HIDDEN_D, NUM_CLASSES))
    bc = jnp.zeros((1, NUM_CLASSES), jnp.float32)

    return (cls_tok, pos, emb_w, emb_b, ln1g, ln1b, wq, bq, wk, bk, wv, bv,
            wo, bo, ln2g, ln2b, w1, b1, w2, b2, lnfg, lnfb, wc, bc)


# --------------------------------- main ---------------------------------------
if __name__ == "__main__":
    key = jax.random.PRNGKey(0)
    k_img, k_par = jax.random.split(key)
    images = jax.random.normal(k_img, (BATCH, *CHW), jnp.float32)   # NCHW
    params = init_params(k_par)

    packed = pack_vit_params(params, batch=BATCH)     # one-time (hoisted) packing
    fwd = jax.jit(vit_forward_pallas)

    logits, cls_out = fwd(images, packed)
    jax.block_until_ready((logits, cls_out))

    assert logits.shape == (BATCH, NUM_CLASSES)
    assert cls_out.shape == (BATCH, HIDDEN_D)

    # Tight check vs a reference with matching bf16 matmul-operand precision
    # (validates kernel logic; residual diff is dominated by the final bf16
    # pass-through of the cls features via the identity columns).
    bf_logits, bf_cls = vit_forward_reference(images, params, jnp.bfloat16)
    assert jnp.allclose(logits, bf_logits, atol=1e-2, rtol=1e-2)
    assert jnp.allclose(cls_out, bf_cls, atol=1e-2, rtol=1e-2)

    # Sanity check vs the full-f32 reference (bf16 MXU operands -> looser tol).
    f32_logits, f32_cls = vit_forward_reference(images, params, jnp.float32)
    assert jnp.allclose(logits, f32_logits, atol=8e-2, rtol=8e-2)
    assert jnp.allclose(cls_out, f32_cls, atol=8e-2, rtol=8e-2)

    print("KERNEL_OK")
</pallas_src>

<mosaic_0001>
module attributes {stable_mosaic.version = 11 : i64} {
  func.func @vit_kernel(%arg0: i32, %arg1: memref<48x64xbf16, #tpu.memory_space<vmem>>, %arg2: memref<48x32xf32, #tpu.memory_space<vmem>>, %arg3: memref<48x48xf32, #tpu.memory_space<vmem>>, %arg4: memref<64x32xbf16, #tpu.memory_space<vmem>>, %arg5: memref<2x32x128xbf16, #tpu.memory_space<vmem>>, %arg6: memref<2x1x128xf32, #tpu.memory_space<vmem>>, %arg7: memref<2x32x32xbf16, #tpu.memory_space<vmem>>, %arg8: memref<2x1x32xf32, #tpu.memory_space<vmem>>, %arg9: memref<2x32x128xbf16, #tpu.memory_space<vmem>>, %arg10: memref<2x1x128xf32, #tpu.memory_space<vmem>>, %arg11: memref<2x128x32xbf16, #tpu.memory_space<vmem>>, %arg12: memref<2x1x32xf32, #tpu.memory_space<vmem>>, %arg13: memref<2x4x32xf32, #tpu.memory_space<vmem>>, %arg14: memref<2x32xf32, #tpu.memory_space<vmem>>, %arg15: memref<32x128xbf16, #tpu.memory_space<vmem>>, %arg16: memref<1x128xf32, #tpu.memory_space<vmem>>, %arg17: memref<48x128xf32, #tpu.memory_space<vmem>>) attributes {dimension_semantics = [#tpu.dimension_semantics<arbitrary>], iteration_bounds = array<i64: 1>, scalar_prefetch = 0 : i64, scratch_operands = 0 : i64, tpu.core_type = #tpu.core_type<tc>, window_params = [{pipeline_mode = #tpu.pipeline_mode<synchronous>, transform_indices = @transform_0, window_bounds = array<i64: 48, 64>}, {pipeline_mode = #tpu.pipeline_mode<synchronous>, transform_indices = @transform_1, window_bounds = array<i64: 48, 32>}, {pipeline_mode = #tpu.pipeline_mode<synchronous>, transform_indices = @transform_2, window_bounds = array<i64: 48, 48>}, {pipeline_mode = #tpu.pipeline_mode<synchronous>, transform_indices = @transform_3, window_bounds = array<i64: 64, 32>}, {pipeline_mode = #tpu.pipeline_mode<synchronous>, transform_indices = @transform_4, window_bounds = array<i64: 2, 32, 128>}, {pipeline_mode = #tpu.pipeline_mode<synchronous>, transform_indices = @transform_5, window_bounds = array<i64: 2, 1, 128>}, {pipeline_mode = #tpu.pipeline_mode<synchronous>, transform_indices = @transform_6, window_bounds = array<i64: 2, 32, 32>}, {pipeline_mode = #tpu.pipeline_mode<synchronous>, transform_indices = @transform_7, window_bounds = array<i64: 2, 1, 32>}, {pipeline_mode = #tpu.pipeline_mode<synchronous>, transform_indices = @transform_8, window_bounds = array<i64: 2, 32, 128>}, {pipeline_mode = #tpu.pipeline_mode<synchronous>, transform_indices = @transform_9, window_bounds = array<i64: 2, 1, 128>}, {pipeline_mode = #tpu.pipeline_mode<synchronous>, transform_indices = @transform_10, window_bounds = array<i64: 2, 128, 32>}, {pipeline_mode = #tpu.pipeline_mode<synchronous>, transform_indices = @transform_11, window_bounds = array<i64: 2, 1, 32>}, {pipeline_mode = #tpu.pipeline_mode<synchronous>, transform_indices = @transform_12, window_bounds = array<i64: 2, 4, 32>}, {pipeline_mode = #tpu.pipeline_mode<synchronous>, transform_indices = @transform_13, window_bounds = array<i64: 2, 32>}, {pipeline_mode = #tpu.pipeline_mode<synchronous>, transform_indices = @transform_14, window_bounds = array<i64: 32, 128>}, {pipeline_mode = #tpu.pipeline_mode<synchronous>, transform_indices = @transform_15, window_bounds = array<i64: 1, 128>}, {pipeline_mode = #tpu.pipeline_mode<synchronous>, transform_indices = @transform_16, window_bounds = array<i64: 48, 128>}]} {
    %c0 = arith.constant 0 : index
    %c0_0 = arith.constant 0 : index
    %0 = vector.load %arg1[%c0, %c0_0] : memref<48x64xbf16, #tpu.memory_space<vmem>>, vector<48x64xbf16>
    %c0_1 = arith.constant 0 : index
    %c0_2 = arith.constant 0 : index
    %1 = vector.load %arg4[%c0_1, %c0_2] : memref<64x32xbf16, #tpu.memory_space<vmem>>, vector<64x32xbf16>
    %cst = arith.constant dense<0.000000e+00> : vector<48x32xf32>
    %2 = tpu.matmul %0, %1, %cst {dimension_numbers = #tpu.dot_dimension_numbers<[1], [0], [0], [1], [0, 0, 1, 1], [], []>} : vector<48x64xbf16>, vector<64x32xbf16>, vector<48x32xf32> -> vector<48x32xf32>
    %c0_3 = arith.constant 0 : index
    %c0_4 = arith.constant 0 : index
    %3 = vector.load %arg2[%c0_3, %c0_4] : memref<48x32xf32, #tpu.memory_space<vmem>>, vector<48x32xf32>
    %4 = arith.addf %2, %3 : vector<48x32xf32>
    %c0_5 = arith.constant 0 : index
    %c0_6 = arith.constant 0 : index
    %5 = vector.load %arg3[%c0_5, %c0_6] : memref<48x48xf32, #tpu.memory_space<vmem>>, vector<48x48xf32>
    %c0_7 = arith.constant 0 : index
    %c0_8 = arith.constant 0 : index
    %c0_9 = arith.constant 0 : index
    %6 = vector.load %arg13[%c0_7, %c0_8, %c0_9] : memref<2x4x32xf32, #tpu.memory_space<vmem>>, vector<1x4x32xf32>
    %7 = vector.shape_cast %6 : vector<1x4x32xf32> to vector<4x32xf32>
    %8 = vector.extract_strided_slice %7 {offsets = [0, 0], sizes = [1, 32], strides = [1, 1]} : vector<4x32xf32> to vector<1x32xf32>
    %9 = vector.extract_strided_slice %7 {offsets = [1, 0], sizes = [1, 32], strides = [1, 1]} : vector<4x32xf32> to vector<1x32xf32>
    %cst_10 = arith.constant dense<0.000000e+00> : vector<48xf32>
    %10 = vector.multi_reduction <add>, %4, %cst_10 [1] : vector<48x32xf32> to vector<48xf32>
    %11 = vector.shape_cast %10 : vector<48xf32> to vector<48x1xf32>
    %cst_11 = arith.constant 3.200000e+01 : f32
    %12 = vector.broadcast %cst_11 : f32 to vector<48x1xf32>
    %13 = arith.divf %11, %12 : vector<48x1xf32>
    %14 = vector.broadcast %13 : vector<48x1xf32> to vector<48x32xf32>
    %15 = arith.subf %4, %14 : vector<48x32xf32>
    %16 = arith.mulf %15, %15 : vector<48x32xf32>
    %cst_12 = arith.constant dense<0.000000e+00> : vector<48xf32>
    %17 = vector.multi_reduction <add>, %16, %cst_12 [1] : vector<48x32xf32> to vector<48xf32>
    %18 = vector.shape_cast %17 : vector<48xf32> to vector<48x1xf32>
    %cst_13 = arith.constant 3.200000e+01 : f32
    %19 = vector.broadcast %cst_13 : f32 to vector<48x1xf32>
    %20 = arith.divf %18, %19 : vector<48x1xf32>
    %21 = vector.broadcast %13 : vector<48x1xf32> to vector<48x32xf32>
    %22 = arith.subf %4, %21 : vector<48x32xf32>
    %cst_14 = arith.constant 9.99999974E-6 : f32
    %23 = vector.broadcast %cst_14 : f32 to vector<48x1xf32>
    %24 = arith.addf %20, %23 : vector<48x1xf32>
    %25 = math.rsqrt %24 : vector<48x1xf32>
    %26 = vector.broadcast %25 : vector<48x1xf32> to vector<48x32xf32>
    %27 = arith.mulf %22, %26 : vector<48x32xf32>
    %28 = vector.broadcast %8 : vector<1x32xf32> to vector<48x32xf32>
    %29 = arith.mulf %27, %28 : vector<48x32xf32>
    %30 = vector.broadcast %9 : vector<1x32xf32> to vector<48x32xf32>
    %31 = arith.addf %29, %30 : vector<48x32xf32>
    %32 = arith.truncf %31 : vector<48x32xf32> to vector<48x32xbf16>
    %c0_15 = arith.constant 0 : index
    %c0_16 = arith.constant 0 : index
    %c0_17 = arith.constant 0 : index
    %33 = vector.load %arg5[%c0_15, %c0_16, %c0_17] : memref<2x32x128xbf16, #tpu.memory_space<vmem>>, vector<1x32x128xbf16>
    %34 = vector.shape_cast %33 : vector<1x32x128xbf16> to vector<32x128xbf16>
    %cst_18 = arith.constant dense<0.000000e+00> : vector<48x128xf32>
    %35 = tpu.matmul %32, %34, %cst_18 {dimension_numbers = #tpu.dot_dimension_numbers<[1], [0], [0], [1], [0, 0, 1, 1], [], []>} : vector<48x32xbf16>, vector<32x128xbf16>, vector<48x128xf32> -> vector<48x128xf32>
    %c0_19 = arith.constant 0 : index
    %c0_20 = arith.constant 0 : index
    %c0_21 = arith.constant 0 : index
    %36 = vector.load %arg6[%c0_19, %c0_20, %c0_21] : memref<2x1x128xf32, #tpu.memory_space<vmem>>, vector<1x1x128xf32>
    %37 = vector.shape_cast %36 : vector<1x1x128xf32> to vector<1x128xf32>
    %38 = vector.broadcast %37 : vector<1x128xf32> to vector<48x128xf32>
    %39 = arith.addf %35, %38 : vector<48x128xf32>
    %c0_22 = arith.constant 0 : index
    %c0_23 = arith.constant 0 : index
    %c0_24 = arith.constant 0 : index
    %40 = vector.load %arg7[%c0_22, %c0_23, %c0_24] : memref<2x32x32xbf16, #tpu.memory_space<vmem>>, vector<1x32x32xbf16>
    %41 = vector.shape_cast %40 : vector<1x32x32xbf16> to vector<32x32xbf16>
    %c0_25 = arith.constant 0 : index
    %c0_26 = arith.constant 0 : index
    %c0_27 = arith.constant 0 : index
    %42 = vector.load %arg8[%c0_25, %c0_26, %c0_27] : memref<2x1x32xf32, #tpu.memory_space<vmem>>, vector<1x1x32xf32>
    %43 = vector.shape_cast %42 : vector<1x1x32xf32> to vector<1x32xf32>
    %44 = vector.extract_strided_slice %39 {offsets = [0, 0], sizes = [48, 16], strides = [1, 1]} : vector<48x128xf32> to vector<48x16xf32>
    %45 = arith.truncf %44 : vector<48x16xf32> to vector<48x16xbf16>
    %46 = vector.extract_strided_slice %39 {offsets = [0, 32], sizes = [48, 16], strides = [1, 1]} : vector<48x128xf32> to vector<48x16xf32>
    %47 = arith.truncf %46 : vector<48x16xf32> to vector<48x16xbf16>
    %48 = vector.extract_strided_slice %39 {offsets = [0, 64], sizes = [48, 16], strides = [1, 1]} : vector<48x128xf32> to vector<48x16xf32>
    %49 = arith.truncf %48 : vector<48x16xf32> to vector<48x16xbf16>
    %cst_28 = arith.constant dense<0.000000e+00> : vector<48x48xf32>
    %50 = tpu.matmul %45, %47, %cst_28 {dimension_numbers = #tpu.dot_dimension_numbers<[1], [1], [0], [0], [0, 0, 1, 0], [], []>} : vector<48x16xbf16>, vector<48x16xbf16>, vector<48x48xf32> -> vector<48x48xf32>
    %51 = arith.addf %50, %5 : vector<48x48xf32>
    %cst_29 = arith.constant dense<0xFF800000> : vector<48xf32>
    %52 = vector.multi_reduction <maximumf>, %51, %cst_29 [1] : vector<48x48xf32> to vector<48xf32>
    %53 = vector.shape_cast %52 : vector<48xf32> to vector<48x1xf32>
    %54 = vector.broadcast %53 : vector<48x1xf32> to vector<48x48xf32>
    %55 = arith.subf %51, %54 : vector<48x48xf32>
    %56 = math.exp %55 : vector<48x48xf32>
    %cst_30 = arith.constant dense<0.000000e+00> : vector<48xf32>
    %57 = vector.multi_reduction <add>, %56, %cst_30 [1] : vector<48x48xf32> to vector<48xf32>
    %58 = vector.shape_cast %57 : vector<48xf32> to vector<48x1xf32>
    %59 = vector.broadcast %58 : vector<48x1xf32> to vector<48x48xf32>
    %60 = arith.divf %56, %59 : vector<48x48xf32>
    %61 = arith.truncf %60 : vector<48x48xf32> to vector<48x48xbf16>
    %cst_31 = arith.constant dense<0.000000e+00> : vector<48x16xf32>
    %62 = tpu.matmul %61, %49, %cst_31 {dimension_numbers = #tpu.dot_dimension_numbers<[1], [0], [0], [1], [0, 0, 1, 1], [], []>} : vector<48x48xbf16>, vector<48x16xbf16>, vector<48x16xf32> -> vector<48x16xf32>
    %63 = arith.truncf %62 : vector<48x16xf32> to vector<48x16xbf16>
    %64 = vector.extract_strided_slice %41 {offsets = [0, 0], sizes = [16, 32], strides = [1, 1]} : vector<32x32xbf16> to vector<16x32xbf16>
    %cst_32 = arith.constant dense<0.000000e+00> : vector<48x32xf32>
    %65 = tpu.matmul %63, %64, %cst_32 {dimension_numbers = #tpu.dot_dimension_numbers<[1], [0], [0], [1], [0, 0, 1, 1], [], []>} : vector<48x16xbf16>, vector<16x32xbf16>, vector<48x32xf32> -> vector<48x32xf32>
    %66 = vector.broadcast %43 : vector<1x32xf32> to vector<48x32xf32>
    %67 = arith.addf %66, %65 : vector<48x32xf32>
    %68 = vector.extract_strided_slice %39 {offsets = [0, 16], sizes = [48, 16], strides = [1, 1]} : vector<48x128xf32> to vector<48x16xf32>
    %69 = arith.truncf %68 : vector<48x16xf32> to vector<48x16xbf16>
    %70 = vector.extract_strided_slice %39 {offsets = [0, 48], sizes = [48, 16], strides = [1, 1]} : vector<48x128xf32> to vector<48x16xf32>
    %71 = arith.truncf %70 : vector<48x16xf32> to vector<48x16xbf16>
    %72 = vector.extract_strided_slice %39 {offsets = [0, 80], sizes = [48, 16], strides = [1, 1]} : vector<48x128xf32> to vector<48x16xf32>
    %73 = arith.truncf %72 : vector<48x16xf32> to vector<48x16xbf16>
    %cst_33 = arith.constant dense<0.000000e+00> : vector<48x48xf32>
    %74 = tpu.matmul %69, %71, %cst_33 {dimension_numbers = #tpu.dot_dimension_numbers<[1], [1], [0], [0], [0, 0, 1, 0], [], []>} : vector<48x16xbf16>, vector<48x16xbf16>, vector<48x48xf32> -> vector<48x48xf32>
    %75 = arith.addf %74, %5 : vector<48x48xf32>
    %cst_34 = arith.constant dense<0xFF800000> : vector<48xf32>
    %76 = vector.multi_reduction <maximumf>, %75, %cst_34 [1] : vector<48x48xf32> to vector<48xf32>
    %77 = vector.shape_cast %76 : vector<48xf32> to vector<48x1xf32>
    %78 = vector.broadcast %77 : vector<48x1xf32> to vector<48x48xf32>
    %79 = arith.subf %75, %78 : vector<48x48xf32>
    %80 = math.exp %79 : vector<48x48xf32>
    %cst_35 = arith.constant dense<0.000000e+00> : vector<48xf32>
    %81 = vector.multi_reduction <add>, %80, %cst_35 [1] : vector<48x48xf32> to vector<48xf32>
    %82 = vector.shape_cast %81 : vector<48xf32> to vector<48x1xf32>
    %83 = vector.broadcast %82 : vector<48x1xf32> to vector<48x48xf32>
    %84 = arith.divf %80, %83 : vector<48x48xf32>
    %85 = arith.truncf %84 : vector<48x48xf32> to vector<48x48xbf16>
    %cst_36 = arith.constant dense<0.000000e+00> : vector<48x16xf32>
    %86 = tpu.matmul %85, %73, %cst_36 {dimension_numbers = #tpu.dot_dimension_numbers<[1], [0], [0], [1], [0, 0, 1, 1], [], []>} : vector<48x48xbf16>, vector<48x16xbf16>, vector<48x16xf32> -> vector<48x16xf32>
    %87 = arith.truncf %86 : vector<48x16xf32> to vector<48x16xbf16>
    %88 = vector.extract_strided_slice %41 {offsets = [16, 0], sizes = [16, 32], strides = [1, 1]} : vector<32x32xbf16> to vector<16x32xbf16>
    %cst_37 = arith.constant dense<0.000000e+00> : vector<48x32xf32>
    %89 = tpu.matmul %87, %88, %cst_37 {dimension_numbers = #tpu.dot_dimension_numbers<[1], [0], [0], [1], [0, 0, 1, 1], [], []>} : vector<48x16xbf16>, vector<16x32xbf16>, vector<48x32xf32> -> vector<48x32xf32>
    %90 = arith.addf %67, %89 : vector<48x32xf32>
    %91 = arith.addf %4, %90 : vector<48x32xf32>
    %92 = vector.extract_strided_slice %7 {offsets = [2, 0], sizes = [1, 32], strides = [1, 1]} : vector<4x32xf32> to vector<1x32xf32>
    %93 = vector.extract_strided_slice %7 {offsets = [3, 0], sizes = [1, 32], strides = [1, 1]} : vector<4x32xf32> to vector<1x32xf32>
    %cst_38 = arith.constant dense<0.000000e+00> : vector<48xf32>
    %94 = vector.multi_reduction <add>, %91, %cst_38 [1] : vector<48x32xf32> to vector<48xf32>
    %95 = vector.shape_cast %94 : vector<48xf32> to vector<48x1xf32>
    %cst_39 = arith.constant 3.200000e+01 : f32
    %96 = vector.broadcast %cst_39 : f32 to vector<48x1xf32>
    %97 = arith.divf %95, %96 : vector<48x1xf32>
    %98 = vector.broadcast %97 : vector<48x1xf32> to vector<48x32xf32>
    %99 = arith.subf %91, %98 : vector<48x32xf32>
    %100 = arith.mulf %99, %99 : vector<48x32xf32>
    %cst_40 = arith.constant dense<0.000000e+00> : vector<48xf32>
    %101 = vector.multi_reduction <add>, %100, %cst_40 [1] : vector<48x32xf32> to vector<48xf32>
    %102 = vector.shape_cast %101 : vector<48xf32> to vector<48x1xf32>
    %cst_41 = arith.constant 3.200000e+01 : f32
    %103 = vector.broadcast %cst_41 : f32 to vector<48x1xf32>
    %104 = arith.divf %102, %103 : vector<48x1xf32>
    %105 = vector.broadcast %97 : vector<48x1xf32> to vector<48x32xf32>
    %106 = arith.subf %91, %105 : vector<48x32xf32>
    %cst_42 = arith.constant 9.99999974E-6 : f32
    %107 = vector.broadcast %cst_42 : f32 to vector<48x1xf32>
    %108 = arith.addf %104, %107 : vector<48x1xf32>
    %109 = math.rsqrt %108 : vector<48x1xf32>
    %110 = vector.broadcast %109 : vector<48x1xf32> to vector<48x32xf32>
    %111 = arith.mulf %106, %110 : vector<48x32xf32>
    %112 = vector.broadcast %92 : vector<1x32xf32> to vector<48x32xf32>
    %113 = arith.mulf %111, %112 : vector<48x32xf32>
    %114 = vector.broadcast %93 : vector<1x32xf32> to vector<48x32xf32>
    %115 = arith.addf %113, %114 : vector<48x32xf32>
    %116 = arith.truncf %115 : vector<48x32xf32> to vector<48x32xbf16>
    %c0_43 = arith.constant 0 : index
    %c0_44 = arith.constant 0 : index
    %c0_45 = arith.constant 0 : index
    %117 = vector.load %arg9[%c0_43, %c0_44, %c0_45] : memref<2x32x128xbf16, #tpu.memory_space<vmem>>, vector<1x32x128xbf16>
    %118 = vector.shape_cast %117 : vector<1x32x128xbf16> to vector<32x128xbf16>
    %cst_46 = arith.constant dense<0.000000e+00> : vector<48x128xf32>
    %119 = tpu.matmul %116, %118, %cst_46 {dimension_numbers = #tpu.dot_dimension_numbers<[1], [0], [0], [1], [0, 0, 1, 1], [], []>} : vector<48x32xbf16>, vector<32x128xbf16>, vector<48x128xf32> -> vector<48x128xf32>
    %c0_47 = arith.constant 0 : index
    %c0_48 = arith.constant 0 : index
    %c0_49 = arith.constant 0 : index
    %120 = vector.load %arg10[%c0_47, %c0_48, %c0_49] : memref<2x1x128xf32, #tpu.memory_space<vmem>>, vector<1x1x128xf32>
    %121 = vector.shape_cast %120 : vector<1x1x128xf32> to vector<1x128xf32>
    %122 = vector.broadcast %121 : vector<1x128xf32> to vector<48x128xf32>
    %123 = arith.addf %119, %122 : vector<48x128xf32>
    %cst_50 = arith.constant 5.000000e-01 : f32
    %124 = vector.broadcast %cst_50 : f32 to vector<48x128xf32>
    %125 = arith.mulf %124, %123 : vector<48x128xf32>
    %cst_51 = arith.constant 0.707106769 : f32
    %126 = vector.broadcast %cst_51 : f32 to vector<48x128xf32>
    %127 = arith.mulf %123, %126 : vector<48x128xf32>
    %cst_52 = arith.constant 0.000000e+00 : f32
    %128 = vector.broadcast %cst_52 : f32 to vector<48x128xf32>
    %129 = arith.cmpf oge, %127, %128 : vector<48x128xf32>
    %cst_53 = arith.constant 1.000000e+00 : f32
    %cst_54 = arith.constant -1.000000e+00 : f32
    %130 = vector.broadcast %cst_53 : f32 to vector<48x128xf32>
    %131 = vector.broadcast %cst_54 : f32 to vector<48x128xf32>
    %132 = arith.select %129, %130, %131 : vector<48x128xi1>, vector<48x128xf32>
    %133 = math.absf %127 : vector<48x128xf32>
    %cst_55 = arith.constant 0.327591091 : f32
    %134 = vector.broadcast %cst_55 : f32 to vector<48x128xf32>
    %135 = arith.mulf %134, %133 : vector<48x128xf32>
    %cst_56 = arith.constant 1.000000e+00 : f32
    %136 = vector.broadcast %cst_56 : f32 to vector<48x128xf32>
    %137 = arith.addf %136, %135 : vector<48x128xf32>
    %cst_57 = arith.constant 1.000000e+00 : f32
    %138 = vector.broadcast %cst_57 : f32 to vector<48x128xf32>
    %139 = arith.divf %138, %137 : vector<48x128xf32>
    %cst_58 = arith.constant 1.06140542 : f32
    %140 = vector.broadcast %cst_58 : f32 to vector<48x128xf32>
    %141 = arith.mulf %140, %139 : vector<48x128xf32>
    %cst_59 = arith.constant -1.45315206 : f32
    %142 = vector.broadcast %cst_59 : f32 to vector<48x128xf32>
    %143 = arith.addf %141, %142 : vector<48x128xf32>
    %144 = arith.mulf %143, %139 : vector<48x128xf32>
    %cst_60 = arith.constant 1.42141378 : f32
    %145 = vector.broadcast %cst_60 : f32 to vector<48x128xf32>
    %146 = arith.addf %144, %145 : vector<48x128xf32>
    %147 = arith.mulf %146, %139 : vector<48x128xf32>
    %cst_61 = arith.constant -0.284496725 : f32
    %148 = vector.broadcast %cst_61 : f32 to vector<48x128xf32>
    %149 = arith.addf %147, %148 : vector<48x128xf32>
    %150 = arith.mulf %149, %139 : vector<48x128xf32>
    %cst_62 = arith.constant 0.254829586 : f32
    %151 = vector.broadcast %cst_62 : f32 to vector<48x128xf32>
    %152 = arith.addf %150, %151 : vector<48x128xf32>
    %153 = arith.mulf %152, %139 : vector<48x128xf32>
    %cst_63 = arith.constant 0.000000e+00 : f32
    %154 = vector.broadcast %cst_63 : f32 to vector<48x128xf32>
    %155 = arith.subf %154, %133 : vector<48x128xf32>
    %156 = arith.mulf %155, %133 : vector<48x128xf32>
    %157 = math.exp %156 : vector<48x128xf32>
    %158 = arith.mulf %153, %157 : vector<48x128xf32>
    %cst_64 = arith.constant 1.000000e+00 : f32
    %159 = vector.broadcast %cst_64 : f32 to vector<48x128xf32>
    %160 = arith.subf %159, %158 : vector<48x128xf32>
    %161 = arith.mulf %132, %160 : vector<48x128xf32>
    %cst_65 = arith.constant 1.000000e+00 : f32
    %162 = vector.broadcast %cst_65 : f32 to vector<48x128xf32>
    %163 = arith.addf %162, %161 : vector<48x128xf32>
    %164 = arith.mulf %125, %163 : vector<48x128xf32>
    %165 = arith.truncf %164 : vector<48x128xf32> to vector<48x128xbf16>
    %c0_66 = arith.constant 0 : index
    %c0_67 = arith.constant 0 : index
    %c0_68 = arith.constant 0 : index
    %166 = vector.load %arg11[%c0_66, %c0_67, %c0_68] : memref<2x128x32xbf16, #tpu.memory_space<vmem>>, vector<1x128x32xbf16>
    %167 = vector.shape_cast %166 : vector<1x128x32xbf16> to vector<128x32xbf16>
    %cst_69 = arith.constant dense<0.000000e+00> : vector<48x32xf32>
    %168 = tpu.matmul %165, %167, %cst_69 {dimension_numbers = #tpu.dot_dimension_numbers<[1], [0], [0], [1], [0, 0, 1, 1], [], []>} : vector<48x128xbf16>, vector<128x32xbf16>, vector<48x32xf32> -> vector<48x32xf32>
    %c0_70 = arith.constant 0 : index
    %c0_71 = arith.constant 0 : index
    %c0_72 = arith.constant 0 : index
    %169 = vector.load %arg12[%c0_70, %c0_71, %c0_72] : memref<2x1x32xf32, #tpu.memory_space<vmem>>, vector<1x1x32xf32>
    %170 = vector.shape_cast %169 : vector<1x1x32xf32> to vector<1x32xf32>
    %171 = vector.broadcast %170 : vector<1x32xf32> to vector<48x32xf32>
    %172 = arith.addf %168, %171 : vector<48x32xf32>
    %173 = arith.addf %91, %172 : vector<48x32xf32>
    %c1 = arith.constant 1 : index
    %c0_73 = arith.constant 0 : index
    %c0_74 = arith.constant 0 : index
    %174 = vector.load %arg13[%c1, %c0_73, %c0_74] : memref<2x4x32xf32, #tpu.memory_space<vmem>>, vector<1x4x32xf32>
    %175 = vector.shape_cast %174 : vector<1x4x32xf32> to vector<4x32xf32>
    %176 = vector.extract_strided_slice %175 {offsets = [0, 0], sizes = [1, 32], strides = [1, 1]} : vector<4x32xf32> to vector<1x32xf32>
    %177 = vector.extract_strided_slice %175 {offsets = [1, 0], sizes = [1, 32], strides = [1, 1]} : vector<4x32xf32> to vector<1x32xf32>
    %cst_75 = arith.constant dense<0.000000e+00> : vector<48xf32>
    %178 = vector.multi_reduction <add>, %173, %cst_75 [1] : vector<48x32xf32> to vector<48xf32>
    %179 = vector.shape_cast %178 : vector<48xf32> to vector<48x1xf32>
    %cst_76 = arith.constant 3.200000e+01 : f32
    %180 = vector.broadcast %cst_76 : f32 to vector<48x1xf32>
    %181 = arith.divf %179, %180 : vector<48x1xf32>
    %182 = vector.broadcast %181 : vector<48x1xf32> to vector<48x32xf32>
    %183 = arith.subf %173, %182 : vector<48x32xf32>
    %184 = arith.mulf %183, %183 : vector<48x32xf32>
    %cst_77 = arith.constant dense<0.000000e+00> : vector<48xf32>
    %185 = vector.multi_reduction <add>, %184, %cst_77 [1] : vector<48x32xf32> to vector<48xf32>
    %186 = vector.shape_cast %185 : vector<48xf32> to vector<48x1xf32>
    %cst_78 = arith.constant 3.200000e+01 : f32
    %187 = vector.broadcast %cst_78 : f32 to vector<48x1xf32>
    %188 = arith.divf %186, %187 : vector<48x1xf32>
    %189 = vector.broadcast %181 : vector<48x1xf32> to vector<48x32xf32>
    %190 = arith.subf %173, %189 : vector<48x32xf32>
    %cst_79 = arith.constant 9.99999974E-6 : f32
    %191 = vector.broadcast %cst_79 : f32 to vector<48x1xf32>
    %192 = arith.addf %188, %191 : vector<48x1xf32>
    %193 = math.rsqrt %192 : vector<48x1xf32>
    %194 = vector.broadcast %193 : vector<48x1xf32> to vector<48x32xf32>
    %195 = arith.mulf %190, %194 : vector<48x32xf32>
    %196 = vector.broadcast %176 : vector<1x32xf32> to vector<48x32xf32>
    %197 = arith.mulf %195, %196 : vector<48x32xf32>
    %198 = vector.broadcast %177 : vector<1x32xf32> to vector<48x32xf32>
    %199 = arith.addf %197, %198 : vector<48x32xf32>
    %200 = arith.truncf %199 : vector<48x32xf32> to vector<48x32xbf16>
    %c1_80 = arith.constant 1 : index
    %c0_81 = arith.constant 0 : index
    %c0_82 = arith.constant 0 : index
    %201 = vector.load %arg5[%c1_80, %c0_81, %c0_82] : memref<2x32x128xbf16, #tpu.memory_space<vmem>>, vector<1x32x128xbf16>
    %202 = vector.shape_cast %201 : vector<1x32x128xbf16> to vector<32x128xbf16>
    %cst_83 = arith.constant dense<0.000000e+00> : vector<48x128xf32>
    %203 = tpu.matmul %200, %202, %cst_83 {dimension_numbers = #tpu.dot_dimension_numbers<[1], [0], [0], [1], [0, 0, 1, 1], [], []>} : vector<48x32xbf16>, vector<32x128xbf16>, vector<48x128xf32> -> vector<48x128xf32>
    %c1_84 = arith.constant 1 : index
    %c0_85 = arith.constant 0 : index
    %c0_86 = arith.constant 0 : index
    %204 = vector.load %arg6[%c1_84, %c0_85, %c0_86] : memref<2x1x128xf32, #tpu.memory_space<vmem>>, vector<1x1x128xf32>
    %205 = vector.shape_cast %204 : vector<1x1x128xf32> to vector<1x128xf32>
    %206 = vector.broadcast %205 : vector<1x128xf32> to vector<48x128xf32>
    %207 = arith.addf %203, %206 : vector<48x128xf32>
    %c1_87 = arith.constant 1 : index
    %c0_88 = arith.constant 0 : index
    %c0_89 = arith.constant 0 : index
    %208 = vector.load %arg7[%c1_87, %c0_88, %c0_89] : memref<2x32x32xbf16, #tpu.memory_space<vmem>>, vector<1x32x32xbf16>
    %209 = vector.shape_cast %208 : vector<1x32x32xbf16> to vector<32x32xbf16>
    %c1_90 = arith.constant 1 : index
    %c0_91 = arith.constant 0 : index
    %c0_92 = arith.constant 0 : index
    %210 = vector.load %arg8[%c1_90, %c0_91, %c0_92] : memref<2x1x32xf32, #tpu.memory_space<vmem>>, vector<1x1x32xf32>
    %211 = vector.shape_cast %210 : vector<1x1x32xf32> to vector<1x32xf32>
    %212 = vector.extract_strided_slice %207 {offsets = [0, 0], sizes = [48, 16], strides = [1, 1]} : vector<48x128xf32> to vector<48x16xf32>
    %213 = arith.truncf %212 : vector<48x16xf32> to vector<48x16xbf16>
    %214 = vector.extract_strided_slice %207 {offsets = [0, 32], sizes = [48, 16], strides = [1, 1]} : vector<48x128xf32> to vector<48x16xf32>
    %215 = arith.truncf %214 : vector<48x16xf32> to vector<48x16xbf16>
    %216 = vector.extract_strided_slice %207 {offsets = [0, 64], sizes = [48, 16], strides = [1, 1]} : vector<48x128xf32> to vector<48x16xf32>
    %217 = arith.truncf %216 : vector<48x16xf32> to vector<48x16xbf16>
    %cst_93 = arith.constant dense<0.000000e+00> : vector<48x48xf32>
    %218 = tpu.matmul %213, %215, %cst_93 {dimension_numbers = #tpu.dot_dimension_numbers<[1], [1], [0], [0], [0, 0, 1, 0], [], []>} : vector<48x16xbf16>, vector<48x16xbf16>, vector<48x48xf32> -> vector<48x48xf32>
    %219 = arith.addf %218, %5 : vector<48x48xf32>
    %cst_94 = arith.constant dense<0xFF800000> : vector<48xf32>
    %220 = vector.multi_reduction <maximumf>, %219, %cst_94 [1] : vector<48x48xf32> to vector<48xf32>
    %221 = vector.shape_cast %220 : vector<48xf32> to vector<48x1xf32>
    %222 = vector.broadcast %221 : vector<48x1xf32> to vector<48x48xf32>
    %223 = arith.subf %219, %222 : vector<48x48xf32>
    %224 = math.exp %223 : vector<48x48xf32>
    %cst_95 = arith.constant dense<0.000000e+00> : vector<48xf32>
    %225 = vector.multi_reduction <add>, %224, %cst_95 [1] : vector<48x48xf32> to vector<48xf32>
    %226 = vector.shape_cast %225 : vector<48xf32> to vector<48x1xf32>
    %227 = vector.broadcast %226 : vector<48x1xf32> to vector<48x48xf32>
    %228 = arith.divf %224, %227 : vector<48x48xf32>
    %229 = arith.truncf %228 : vector<48x48xf32> to vector<48x48xbf16>
    %cst_96 = arith.constant dense<0.000000e+00> : vector<48x16xf32>
    %230 = tpu.matmul %229, %217, %cst_96 {dimension_numbers = #tpu.dot_dimension_numbers<[1], [0], [0], [1], [0, 0, 1, 1], [], []>} : vector<48x48xbf16>, vector<48x16xbf16>, vector<48x16xf32> -> vector<48x16xf32>
    %231 = arith.truncf %230 : vector<48x16xf32> to vector<48x16xbf16>
    %232 = vector.extract_strided_slice %209 {offsets = [0, 0], sizes = [16, 32], strides = [1, 1]} : vector<32x32xbf16> to vector<16x32xbf16>
    %cst_97 = arith.constant dense<0.000000e+00> : vector<48x32xf32>
    %233 = tpu.matmul %231, %232, %cst_97 {dimension_numbers = #tpu.dot_dimension_numbers<[1], [0], [0], [1], [0, 0, 1, 1], [], []>} : vector<48x16xbf16>, vector<16x32xbf16>, vector<48x32xf32> -> vector<48x32xf32>
    %234 = vector.broadcast %211 : vector<1x32xf32> to vector<48x32xf32>
    %235 = arith.addf %234, %233 : vector<48x32xf32>
    %236 = vector.extract_strided_slice %207 {offsets = [0, 16], sizes = [48, 16], strides = [1, 1]} : vector<48x128xf32> to vector<48x16xf32>
    %237 = arith.truncf %236 : vector<48x16xf32> to vector<48x16xbf16>
    %238 = vector.extract_strided_slice %207 {offsets = [0, 48], sizes = [48, 16], strides = [1, 1]} : vector<48x128xf32> to vector<48x16xf32>
    %239 = arith.truncf %238 : vector<48x16xf32> to vector<48x16xbf16>
    %240 = vector.extract_strided_slice %207 {offsets = [0, 80], sizes = [48, 16], strides = [1, 1]} : vector<48x128xf32> to vector<48x16xf32>
    %241 = arith.truncf %240 : vector<48x16xf32> to vector<48x16xbf16>
    %cst_98 = arith.constant dense<0.000000e+00> : vector<48x48xf32>
    %242 = tpu.matmul %237, %239, %cst_98 {dimension_numbers = #tpu.dot_dimension_numbers<[1], [1], [0], [0], [0, 0, 1, 0], [], []>} : vector<48x16xbf16>, vector<48x16xbf16>, vector<48x48xf32> -> vector<48x48xf32>
    %243 = arith.addf %242, %5 : vector<48x48xf32>
    %cst_99 = arith.constant dense<0xFF800000> : vector<48xf32>
    %244 = vector.multi_reduction <maximumf>, %243, %cst_99 [1] : vector<48x48xf32> to vector<48xf32>
    %245 = vector.shape_cast %244 : vector<48xf32> to vector<48x1xf32>
    %246 = vector.broadcast %245 : vector<48x1xf32> to vector<48x48xf32>
    %247 = arith.subf %243, %246 : vector<48x48xf32>
    %248 = math.exp %247 : vector<48x48xf32>
    %cst_100 = arith.constant dense<0.000000e+00> : vector<48xf32>
    %249 = vector.multi_reduction <add>, %248, %cst_100 [1] : vector<48x48xf32> to vector<48xf32>
    %250 = vector.shape_cast %249 : vector<48xf32> to vector<48x1xf32>
    %251 = vector.broadcast %250 : vector<48x1xf32> to vector<48x48xf32>
    %252 = arith.divf %248, %251 : vector<48x48xf32>
    %253 = arith.truncf %252 : vector<48x48xf32> to vector<48x48xbf16>
    %cst_101 = arith.constant dense<0.000000e+00> : vector<48x16xf32>
    %254 = tpu.matmul %253, %241, %cst_101 {dimension_numbers = #tpu.dot_dimension_numbers<[1], [0], [0], [1], [0, 0, 1, 1], [], []>} : vector<48x48xbf16>, vector<48x16xbf16>, vector<48x16xf32> -> vector<48x16xf32>
    %255 = arith.truncf %254 : vector<48x16xf32> to vector<48x16xbf16>
    %256 = vector.extract_strided_slice %209 {offsets = [16, 0], sizes = [16, 32], strides = [1, 1]} : vector<32x32xbf16> to vector<16x32xbf16>
    %cst_102 = arith.constant dense<0.000000e+00> : vector<48x32xf32>
    %257 = tpu.matmul %255, %256, %cst_102 {dimension_numbers = #tpu.dot_dimension_numbers<[1], [0], [0], [1], [0, 0, 1, 1], [], []>} : vector<48x16xbf16>, vector<16x32xbf16>, vector<48x32xf32> -> vector<48x32xf32>
    %258 = arith.addf %235, %257 : vector<48x32xf32>
    %259 = arith.addf %173, %258 : vector<48x32xf32>
    %260 = vector.extract_strided_slice %175 {offsets = [2, 0], sizes = [1, 32], strides = [1, 1]} : vector<4x32xf32> to vector<1x32xf32>
    %261 = vector.extract_strided_slice %175 {offsets = [3, 0], sizes = [1, 32], strides = [1, 1]} : vector<4x32xf32> to vector<1x32xf32>
    %cst_103 = arith.constant dense<0.000000e+00> : vector<48xf32>
    %262 = vector.multi_reduction <add>, %259, %cst_103 [1] : vector<48x32xf32> to vector<48xf32>
    %263 = vector.shape_cast %262 : vector<48xf32> to vector<48x1xf32>
    %cst_104 = arith.constant 3.200000e+01 : f32
    %264 = vector.broadcast %cst_104 : f32 to vector<48x1xf32>
    %265 = arith.divf %263, %264 : vector<48x1xf32>
    %266 = vector.broadcast %265 : vector<48x1xf32> to vector<48x32xf32>
    %267 = arith.subf %259, %266 : vector<48x32xf32>
    %268 = arith.mulf %267, %267 : vector<48x32xf32>
    %cst_105 = arith.constant dense<0.000000e+00> : vector<48xf32>
    %269 = vector.multi_reduction <add>, %268, %cst_105 [1] : vector<48x32xf32> to vector<48xf32>
    %270 = vector.shape_cast %269 : vector<48xf32> to vector<48x1xf32>
    %cst_106 = arith.constant 3.200000e+01 : f32
    %271 = vector.broadcast %cst_106 : f32 to vector<48x1xf32>
    %272 = arith.divf %270, %271 : vector<48x1xf32>
    %273 = vector.broadcast %265 : vector<48x1xf32> to vector<48x32xf32>
    %274 = arith.subf %259, %273 : vector<48x32xf32>
    %cst_107 = arith.constant 9.99999974E-6 : f32
    %275 = vector.broadcast %cst_107 : f32 to vector<48x1xf32>
    %276 = arith.addf %272, %275 : vector<48x1xf32>
    %277 = math.rsqrt %276 : vector<48x1xf32>
    %278 = vector.broadcast %277 : vector<48x1xf32> to vector<48x32xf32>
    %279 = arith.mulf %274, %278 : vector<48x32xf32>
    %280 = vector.broadcast %260 : vector<1x32xf32> to vector<48x32xf32>
    %281 = arith.mulf %279, %280 : vector<48x32xf32>
    %282 = vector.broadcast %261 : vector<1x32xf32> to vector<48x32xf32>
    %283 = arith.addf %281, %282 : vector<48x32xf32>
    %284 = arith.truncf %283 : vector<48x32xf32> to vector<48x32xbf16>
    %c1_108 = arith.constant 1 : index
    %c0_109 = arith.constant 0 : index
    %c0_110 = arith.constant 0 : index
    %285 = vector.load %arg9[%c1_108, %c0_109, %c0_110] : memref<2x32x128xbf16, #tpu.memory_space<vmem>>, vector<1x32x128xbf16>
    %286 = vector.shape_cast %285 : vector<1x32x128xbf16> to vector<32x128xbf16>
    %cst_111 = arith.constant dense<0.000000e+00> : vector<48x128xf32>
    %287 = tpu.matmul %284, %286, %cst_111 {dimension_numbers = #tpu.dot_dimension_numbers<[1], [0], [0], [1], [0, 0, 1, 1], [], []>} : vector<48x32xbf16>, vector<32x128xbf16>, vector<48x128xf32> -> vector<48x128xf32>
    %c1_112 = arith.constant 1 : index
    %c0_113 = arith.constant 0 : index
    %c0_114 = arith.constant 0 : index
    %288 = vector.load %arg10[%c1_112, %c0_113, %c0_114] : memref<2x1x128xf32, #tpu.memory_space<vmem>>, vector<1x1x128xf32>
    %289 = vector.shape_cast %288 : vector<1x1x128xf32> to vector<1x128xf32>
    %290 = vector.broadcast %289 : vector<1x128xf32> to vector<48x128xf32>
    %291 = arith.addf %287, %290 : vector<48x128xf32>
    %cst_115 = arith.constant 5.000000e-01 : f32
    %292 = vector.broadcast %cst_115 : f32 to vector<48x128xf32>
    %293 = arith.mulf %292, %291 : vector<48x128xf32>
    %cst_116 = arith.constant 0.707106769 : f32
    %294 = vector.broadcast %cst_116 : f32 to vector<48x128xf32>
    %295 = arith.mulf %291, %294 : vector<48x128xf32>
    %cst_117 = arith.constant 0.000000e+00 : f32
    %296 = vector.broadcast %cst_117 : f32 to vector<48x128xf32>
    %297 = arith.cmpf oge, %295, %296 : vector<48x128xf32>
    %cst_118 = arith.constant 1.000000e+00 : f32
    %cst_119 = arith.constant -1.000000e+00 : f32
    %298 = vector.broadcast %cst_118 : f32 to vector<48x128xf32>
    %299 = vector.broadcast %cst_119 : f32 to vector<48x128xf32>
    %300 = arith.select %297, %298, %299 : vector<48x128xi1>, vector<48x128xf32>
    %301 = math.absf %295 : vector<48x128xf32>
    %cst_120 = arith.constant 0.327591091 : f32
    %302 = vector.broadcast %cst_120 : f32 to vector<48x128xf32>
    %303 = arith.mulf %302, %301 : vector<48x128xf32>
    %cst_121 = arith.constant 1.000000e+00 : f32
    %304 = vector.broadcast %cst_121 : f32 to vector<48x128xf32>
    %305 = arith.addf %304, %303 : vector<48x128xf32>
    %cst_122 = arith.constant 1.000000e+00 : f32
    %306 = vector.broadcast %cst_122 : f32 to vector<48x128xf32>
    %307 = arith.divf %306, %305 : vector<48x128xf32>
    %cst_123 = arith.constant 1.06140542 : f32
    %308 = vector.broadcast %cst_123 : f32 to vector<48x128xf32>
    %309 = arith.mulf %308, %307 : vector<48x128xf32>
    %cst_124 = arith.constant -1.45315206 : f32
    %310 = vector.broadcast %cst_124 : f32 to vector<48x128xf32>
    %311 = arith.addf %309, %310 : vector<48x128xf32>
    %312 = arith.mulf %311, %307 : vector<48x128xf32>
    %cst_125 = arith.constant 1.42141378 : f32
    %313 = vector.broadcast %cst_125 : f32 to vector<48x128xf32>
    %314 = arith.addf %312, %313 : vector<48x128xf32>
    %315 = arith.mulf %314, %307 : vector<48x128xf32>
    %cst_126 = arith.constant -0.284496725 : f32
    %316 = vector.broadcast %cst_126 : f32 to vector<48x128xf32>
    %317 = arith.addf %315, %316 : vector<48x128xf32>
    %318 = arith.mulf %317, %307 : vector<48x128xf32>
    %cst_127 = arith.constant 0.254829586 : f32
    %319 = vector.broadcast %cst_127 : f32 to vector<48x128xf32>
    %320 = arith.addf %318, %319 : vector<48x128xf32>
    %321 = arith.mulf %320, %307 : vector<48x128xf32>
    %cst_128 = arith.constant 0.000000e+00 : f32
    %322 = vector.broadcast %cst_128 : f32 to vector<48x128xf32>
    %323 = arith.subf %322, %301 : vector<48x128xf32>
    %324 = arith.mulf %323, %301 : vector<48x128xf32>
    %325 = math.exp %324 : vector<48x128xf32>
    %326 = arith.mulf %321, %325 : vector<48x128xf32>
    %cst_129 = arith.constant 1.000000e+00 : f32
    %327 = vector.broadcast %cst_129 : f32 to vector<48x128xf32>
    %328 = arith.subf %327, %326 : vector<48x128xf32>
    %329 = arith.mulf %300, %328 : vector<48x128xf32>
    %cst_130 = arith.constant 1.000000e+00 : f32
    %330 = vector.broadcast %cst_130 : f32 to vector<48x128xf32>
    %331 = arith.addf %330, %329 : vector<48x128xf32>
    %332 = arith.mulf %293, %331 : vector<48x128xf32>
    %333 = arith.truncf %332 : vector<48x128xf32> to vector<48x128xbf16>
    %c1_131 = arith.constant 1 : index
    %c0_132 = arith.constant 0 : index
    %c0_133 = arith.constant 0 : index
    %334 = vector.load %arg11[%c1_131, %c0_132, %c0_133] : memref<2x128x32xbf16, #tpu.memory_space<vmem>>, vector<1x128x32xbf16>
    %335 = vector.shape_cast %334 : vector<1x128x32xbf16> to vector<128x32xbf16>
    %cst_134 = arith.constant dense<0.000000e+00> : vector<48x32xf32>
    %336 = tpu.matmul %333, %335, %cst_134 {dimension_numbers = #tpu.dot_dimension_numbers<[1], [0], [0], [1], [0, 0, 1, 1], [], []>} : vector<48x128xbf16>, vector<128x32xbf16>, vector<48x32xf32> -> vector<48x32xf32>
    %c1_135 = arith.constant 1 : index
    %c0_136 = arith.constant 0 : index
    %c0_137 = arith.constant 0 : index
    %337 = vector.load %arg12[%c1_135, %c0_136, %c0_137] : memref<2x1x32xf32, #tpu.memory_space<vmem>>, vector<1x1x32xf32>
    %338 = vector.shape_cast %337 : vector<1x1x32xf32> to vector<1x32xf32>
    %339 = vector.broadcast %338 : vector<1x32xf32> to vector<48x32xf32>
    %340 = arith.addf %336, %339 : vector<48x32xf32>
    %341 = arith.addf %259, %340 : vector<48x32xf32>
    %c0_138 = arith.constant 0 : index
    %c0_139 = arith.constant 0 : index
    %342 = vector.load %arg14[%c0_138, %c0_139] : memref<2x32xf32, #tpu.memory_space<vmem>>, vector<1x32xf32>
    %c1_140 = arith.constant 1 : index
    %c0_141 = arith.constant 0 : index
    %343 = vector.load %arg14[%c1_140, %c0_141] : memref<2x32xf32, #tpu.memory_space<vmem>>, vector<1x32xf32>
    %cst_142 = arith.constant dense<0.000000e+00> : vector<48xf32>
    %344 = vector.multi_reduction <add>, %341, %cst_142 [1] : vector<48x32xf32> to vector<48xf32>
    %345 = vector.shape_cast %344 : vector<48xf32> to vector<48x1xf32>
    %cst_143 = arith.constant 3.200000e+01 : f32
    %346 = vector.broadcast %cst_143 : f32 to vector<48x1xf32>
    %347 = arith.divf %345, %346 : vector<48x1xf32>
    %348 = vector.broadcast %347 : vector<48x1xf32> to vector<48x32xf32>
    %349 = arith.subf %341, %348 : vector<48x32xf32>
    %350 = arith.mulf %349, %349 : vector<48x32xf32>
    %cst_144 = arith.constant dense<0.000000e+00> : vector<48xf32>
    %351 = vector.multi_reduction <add>, %350, %cst_144 [1] : vector<48x32xf32> to vector<48xf32>
    %352 = vector.shape_cast %351 : vector<48xf32> to vector<48x1xf32>
    %cst_145 = arith.constant 3.200000e+01 : f32
    %353 = vector.broadcast %cst_145 : f32 to vector<48x1xf32>
    %354 = arith.divf %352, %353 : vector<48x1xf32>
    %355 = vector.broadcast %347 : vector<48x1xf32> to vector<48x32xf32>
    %356 = arith.subf %341, %355 : vector<48x32xf32>
    %cst_146 = arith.constant 9.99999974E-6 : f32
    %357 = vector.broadcast %cst_146 : f32 to vector<48x1xf32>
    %358 = arith.addf %354, %357 : vector<48x1xf32>
    %359 = math.rsqrt %358 : vector<48x1xf32>
    %360 = vector.broadcast %359 : vector<48x1xf32> to vector<48x32xf32>
    %361 = arith.mulf %356, %360 : vector<48x32xf32>
    %362 = vector.broadcast %342 : vector<1x32xf32> to vector<48x32xf32>
    %363 = arith.mulf %361, %362 : vector<48x32xf32>
    %364 = vector.broadcast %343 : vector<1x32xf32> to vector<48x32xf32>
    %365 = arith.addf %363, %364 : vector<48x32xf32>
    %366 = arith.truncf %365 : vector<48x32xf32> to vector<48x32xbf16>
    %c0_147 = arith.constant 0 : index
    %c0_148 = arith.constant 0 : index
    %367 = vector.load %arg15[%c0_147, %c0_148] : memref<32x128xbf16, #tpu.memory_space<vmem>>, vector<32x128xbf16>
    %cst_149 = arith.constant dense<0.000000e+00> : vector<48x128xf32>
    %368 = tpu.matmul %366, %367, %cst_149 {dimension_numbers = #tpu.dot_dimension_numbers<[1], [0], [0], [1], [0, 0, 1, 1], [], []>} : vector<48x32xbf16>, vector<32x128xbf16>, vector<48x128xf32> -> vector<48x128xf32>
    %c0_150 = arith.constant 0 : index
    %c0_151 = arith.constant 0 : index
    %369 = vector.load %arg16[%c0_150, %c0_151] : memref<1x128xf32, #tpu.memory_space<vmem>>, vector<1x128xf32>
    %370 = vector.broadcast %369 : vector<1x128xf32> to vector<48x128xf32>
    %371 = arith.addf %368, %370 : vector<48x128xf32>
    %c0_152 = arith.constant 0 : index
    %c0_153 = arith.constant 0 : index
    %372 = vector.load %arg17[%c0_152, %c0_153] : memref<48x128xf32, #tpu.memory_space<vmem>>, vector<48x128xf32>
    tpu.vector_store %arg17[%c0_152, %c0_153], %371 {strides = array<i32>} : memref<48x128xf32, #tpu.memory_space<vmem>>, vector<48x128xf32>,
    return
  }
  func.func @transform_0(%arg0: i32) -> (i32, i32) {
    %c0_i32 = arith.constant 0 : i32
    %c0_i32_0 = arith.constant 0 : i32
    %c0_i32_1 = arith.constant 0 : i32
    return %c0_i32, %c0_i32_0 : i32, i32
  }
  func.func @transform_1(%arg0: i32) -> (i32, i32) {
    %c0_i32 = arith.constant 0 : i32
    %c0_i32_0 = arith.constant 0 : i32
    %c0_i32_1 = arith.constant 0 : i32
    return %c0_i32, %c0_i32_0 : i32, i32
  }
  func.func @transform_2(%arg0: i32) -> (i32, i32) {
    %c0_i32 = arith.constant 0 : i32
    %c0_i32_0 = arith.constant 0 : i32
    %c0_i32_1 = arith.constant 0 : i32
    return %c0_i32, %c0_i32_0 : i32, i32
  }
  func.func @transform_3(%arg0: i32) -> (i32, i32) {
    %c0_i32 = arith.constant 0 : i32
    %c0_i32_0 = arith.constant 0 : i32
    %c0_i32_1 = arith.constant 0 : i32
    return %c0_i32, %c0_i32_0 : i32, i32
  }
  func.func @transform_4(%arg0: i32) -> (i32, i32, i32) {
    %c0_i32 = arith.constant 0 : i32
    %c0_i32_0 = arith.constant 0 : i32
    %c0_i32_1 = arith.constant 0 : i32
    %c0_i32_2 = arith.constant 0 : i32
    return %c0_i32, %c0_i32_0, %c0_i32_1 : i32, i32, i32
  }
  func.func @transform_5(%arg0: i32) -> (i32, i32, i32) {
    %c0_i32 = arith.constant 0 : i32
    %c0_i32_0 = arith.constant 0 : i32
    %c0_i32_1 = arith.constant 0 : i32
    %c0_i32_2 = arith.constant 0 : i32
    return %c0_i32, %c0_i32_0, %c0_i32_1 : i32, i32, i32
  }
  func.func @transform_6(%arg0: i32) -> (i32, i32, i32) {
    %c0_i32 = arith.constant 0 : i32
    %c0_i32_0 = arith.constant 0 : i32
    %c0_i32_1 = arith.constant 0 : i32
    %c0_i32_2 = arith.constant 0 : i32
    return %c0_i32, %c0_i32_0, %c0_i32_1 : i32, i32, i32
  }
  func.func @transform_7(%arg0: i32) -> (i32, i32, i32) {
    %c0_i32 = arith.constant 0 : i32
    %c0_i32_0 = arith.constant 0 : i32
    %c0_i32_1 = arith.constant 0 : i32
    %c0_i32_2 = arith.constant 0 : i32
    return %c0_i32, %c0_i32_0, %c0_i32_1 : i32, i32, i32
  }
  func.func @transform_8(%arg0: i32) -> (i32, i32, i32) {
    %c0_i32 = arith.constant 0 : i32
    %c0_i32_0 = arith.constant 0 : i32
    %c0_i32_1 = arith.constant 0 : i32
    %c0_i32_2 = arith.constant 0 : i32
    return %c0_i32, %c0_i32_0, %c0_i32_1 : i32, i32, i32
  }
  func.func @transform_9(%arg0: i32) -> (i32, i32, i32) {
    %c0_i32 = arith.constant 0 : i32
    %c0_i32_0 = arith.constant 0 : i32
    %c0_i32_1 = arith.constant 0 : i32
    %c0_i32_2 = arith.constant 0 : i32
    return %c0_i32, %c0_i32_0, %c0_i32_1 : i32, i32, i32
  }
  func.func @transform_10(%arg0: i32) -> (i32, i32, i32) {
    %c0_i32 = arith.constant 0 : i32
    %c0_i32_0 = arith.constant 0 : i32
    %c0_i32_1 = arith.constant 0 : i32
    %c0_i32_2 = arith.constant 0 : i32
    return %c0_i32, %c0_i32_0, %c0_i32_1 : i32, i32, i32
  }
  func.func @transform_11(%arg0: i32) -> (i32, i32, i32) {
    %c0_i32 = arith.constant 0 : i32
    %c0_i32_0 = arith.constant 0 : i32
    %c0_i32_1 = arith.constant 0 : i32
    %c0_i32_2 = arith.constant 0 : i32
    return %c0_i32, %c0_i32_0, %c0_i32_1 : i32, i32, i32
  }
  func.func @transform_12(%arg0: i32) -> (i32, i32, i32) {
    %c0_i32 = arith.constant 0 : i32
    %c0_i32_0 = arith.constant 0 : i32
    %c0_i32_1 = arith.constant 0 : i32
    %c0_i32_2 = arith.constant 0 : i32
    return %c0_i32, %c0_i32_0, %c0_i32_1 : i32, i32, i32
  }
  func.func @transform_13(%arg0: i32) -> (i32, i32) {
    %c0_i32 = arith.constant 0 : i32
    %c0_i32_0 = arith.constant 0 : i32
    %c0_i32_1 = arith.constant 0 : i32
    return %c0_i32, %c0_i32_0 : i32, i32
  }
  func.func @transform_14(%arg0: i32) -> (i32, i32) {
    %c0_i32 = arith.constant 0 : i32
    %c0_i32_0 = arith.constant 0 : i32
    %c0_i32_1 = arith.constant 0 : i32
    return %c0_i32, %c0_i32_0 : i32, i32
  }
  func.func @transform_15(%arg0: i32) -> (i32, i32) {
    %c0_i32 = arith.constant 0 : i32
    %c0_i32_0 = arith.constant 0 : i32
    %c0_i32_1 = arith.constant 0 : i32
    return %c0_i32, %c0_i32_0 : i32, i32
  }
  func.func @transform_16(%arg0: i32) -> (i32, i32) {
    %c0_i32 = arith.constant 0 : i32
    %c0_i32_0 = arith.constant 0 : i32
    %c0_i32_1 = arith.constant 0 : i32
    return %c0_i32, %c0_i32_0 : i32, i32
  }
}

</mosaic_0001>

<llo_original>
// kernel: custom-call.1
$region0: #{custom-call.1}
  %s0 = inlined_call_operand.vmem [shape: f32[2,32], index: 0, kind: output, shape index: {}]

// kernel: custom-call
$region0: #{custom-call}
  %s0 = inlined_call_operand.vmem [shape: f32[2,10], index: 0, kind: output, shape index: {}]

// kernel: vit_forward_pallas.1
$region0: #{vit_forward_pallas.1}
  #allocation0 [shape = 'u32[]', space=smem, size = 0x4, offset = 0x4, fixed_abs, tag = 'smem constant byte address 0x4 - core index']
  #allocation1 [shape = 'u32[144,128]{1,0:T(1,128)}', space=vmem, size = 0x12000, scoped, tag = 'internal scratch']
  %s0 = inlined_call_operand.vmem [shape: bf16[48,64], index: 0, kind: input, shape index: {}]
  %s1 = inlined_call_operand.vmem [shape: f32[48,32], index: 1, kind: input, shape index: {}]
  %s2 = inlined_call_operand.vmem [shape: f32[48,48], index: 2, kind: input, shape index: {}]
  %s3 = inlined_call_operand.vmem [shape: bf16[64,32], index: 3, kind: input, shape index: {}]
  %s4 = inlined_call_operand.vmem [shape: bf16[2,32,128], index: 4, kind: input, shape index: {}]
  %s5 = inlined_call_operand.vmem [shape: f32[2,1,128], index: 5, kind: input, shape index: {}]
  %s6 = inlined_call_operand.vmem [shape: bf16[2,32,32], index: 6, kind: input, shape index: {}]
  %s7 = inlined_call_operand.vmem [shape: f32[2,1,32], index: 7, kind: input, shape index: {}]
  %s8 = inlined_call_operand.vmem [shape: bf16[2,32,128], index: 8, kind: input, shape index: {}]
  %s9 = inlined_call_operand.vmem [shape: f32[2,1,128], index: 9, kind: input, shape index: {}]
  %s10 = inlined_call_operand.vmem [shape: bf16[2,128,32], index: 10, kind: input, shape index: {}]
  %s11 = inlined_call_operand.vmem [shape: f32[2,1,32], index: 11, kind: input, shape index: {}]
  %s12 = inlined_call_operand.vmem [shape: f32[2,4,32], index: 12, kind: input, shape index: {}]
  %s13 = inlined_call_operand.vmem [shape: f32[2,32], index: 13, kind: input, shape index: {}]
  %s14 = inlined_call_operand.vmem [shape: bf16[32,128], index: 14, kind: input, shape index: {}]
  %s15 = inlined_call_operand.vmem [shape: f32[1,128], index: 15, kind: input, shape index: {}]
  %s16 = inlined_call_operand.vmem [shape: f32[48,128], index: 16, kind: output, shape index: {}]
  %s17 = sld [smem:[#allocation0]]
  $region74: #{vit_forward_pallas.1} parent=0
    _
  %s19 = ssub.s32 1, %s17
  %s20 = scalar_select 0, %s19, %s17
  // Predicated region
  $region2: #{vit_forward_pallas.1} parent=0 // pred_check
    _
  $region3: #{vit_forward_pallas.1} parent=0 // pred_check_branch
    %22 = sbr.rel (0) target = $region5
  $region4: #{vit_forward_pallas.1} parent=0 // pred_region
    _
  $region5: #{vit_forward_pallas.1} parent=0 // pred_fallthru
    _
  // Predicated region
  $region6: #{vit_forward_pallas.1} parent=0 // pred_check
    _
  $region7: #{vit_forward_pallas.1} parent=0 // pred_check_branch
    %24 = sbr.rel (0) target = $region9
  $region8: #{vit_forward_pallas.1} parent=0 // pred_region
    _
  $region9: #{vit_forward_pallas.1} parent=0 // pred_fallthru
    _
  // Predicated region
  $region10: #{vit_forward_pallas.1} parent=0 // pred_check
    _
  $region11: #{vit_forward_pallas.1} parent=0 // pred_check_branch
    %26 = sbr.rel (0) target = $region13
  $region12: #{vit_forward_pallas.1} parent=0 // pred_region
    _
  $region13: #{vit_forward_pallas.1} parent=0 // pred_fallthru
    _
  // Predicated region
  $region14: #{vit_forward_pallas.1} parent=0 // pred_check
    _
  $region15: #{vit_forward_pallas.1} parent=0 // pred_check_branch
    %28 = sbr.rel (0) target = $region17
  $region16: #{vit_forward_pallas.1} parent=0 // pred_region
    _
  $region17: #{vit_forward_pallas.1} parent=0 // pred_fallthru
    _
  // Predicated region
  $region18: #{vit_forward_pallas.1} parent=0 // pred_check
    _
  $region19: #{vit_forward_pallas.1} parent=0 // pred_check_branch
    %30 = sbr.rel (0) target = $region21
  $region20: #{vit_forward_pallas.1} parent=0 // pred_region
    _
  $region21: #{vit_forward_pallas.1} parent=0 // pred_fallthru
    _
  // Predicated region
  $region22: #{vit_forward_pallas.1} parent=0 // pred_check
    _
  $region23: #{vit_forward_pallas.1} parent=0 // pred_check_branch
    %32 = sbr.rel (0) target = $region25
  $region24: #{vit_forward_pallas.1} parent=0 // pred_region
    _
  $region25: #{vit_forward_pallas.1} parent=0 // pred_fallthru
    _
  // Predicated region
  $region26: #{vit_forward_pallas.1} parent=0 // pred_check
    _
  $region27: #{vit_forward_pallas.1} parent=0 // pred_check_branch
    %34 = sbr.rel (0) target = $region29
  $region28: #{vit_forward_pallas.1} parent=0 // pred_region
    _
  $region29: #{vit_forward_pallas.1} parent=0 // pred_fallthru
    _
  // Predicated region
  $region30: #{vit_forward_pallas.1} parent=0 // pred_check
    _
  $region31: #{vit_forward_pallas.1} parent=0 // pred_check_branch
    %36 = sbr.rel (0) target = $region33
  $region32: #{vit_forward_pallas.1} parent=0 // pred_region
    _
  $region33: #{vit_forward_pallas.1} parent=0 // pred_fallthru
    _
  // Predicated region
  $region34: #{vit_forward_pallas.1} parent=0 // pred_check
    _
  $region35: #{vit_forward_pallas.1} parent=0 // pred_check_branch
    %38 = sbr.rel (0) target = $region37
  $region36: #{vit_forward_pallas.1} parent=0 // pred_region
    _
  $region37: #{vit_forward_pallas.1} parent=0 // pred_fallthru
    _
  // Predicated region
  $region38: #{vit_forward_pallas.1} parent=0 // pred_check
    _
  $region39: #{vit_forward_pallas.1} parent=0 // pred_check_branch
    %40 = sbr.rel (0) target = $region41
  $region40: #{vit_forward_pallas.1} parent=0 // pred_region
    _
  $region41: #{vit_forward_pallas.1} parent=0 // pred_fallthru
    _
  // Predicated region
  $region42: #{vit_forward_pallas.1} parent=0 // pred_check
    _
  $region43: #{vit_forward_pallas.1} parent=0 // pred_check_branch
    %42 = sbr.rel (0) target = $region45
  $region44: #{vit_forward_pallas.1} parent=0 // pred_region
    _
  $region45: #{vit_forward_pallas.1} parent=0 // pred_fallthru
    _
  // Predicated region
  $region46: #{vit_forward_pallas.1} parent=0 // pred_check
    _
  $region47: #{vit_forward_pallas.1} parent=0 // pred_check_branch
    %44 = sbr.rel (0) target = $region49
  $region48: #{vit_forward_pallas.1} parent=0 // pred_region
    _
  $region49: #{vit_forward_pallas.1} parent=0 // pred_fallthru
    _
  // Predicated region
  $region50: #{vit_forward_pallas.1} parent=0 // pred_check
    _
  $region51: #{vit_forward_pallas.1} parent=0 // pred_check_branch
    %46 = sbr.rel (0) target = $region53
  $region52: #{vit_forward_pallas.1} parent=0 // pred_region
    _
  $region53: #{vit_forward_pallas.1} parent=0 // pred_fallthru
    _
  // Predicated region
  $region54: #{vit_forward_pallas.1} parent=0 // pred_check
    _
  $region55: #{vit_forward_pallas.1} parent=0 // pred_check_branch
    %48 = sbr.rel (0) target = $region57
  $region56: #{vit_forward_pallas.1} parent=0 // pred_region
    _
  $region57: #{vit_forward_pallas.1} parent=0 // pred_fallthru
    _
  // Predicated region
  $region58: #{vit_forward_pallas.1} parent=0 // pred_check
    _
  $region59: #{vit_forward_pallas.1} parent=0 // pred_check_branch
    %50 = sbr.rel (0) target = $region61
  $region60: #{vit_forward_pallas.1} parent=0 // pred_region
    _
  $region61: #{vit_forward_pallas.1} parent=0 // pred_fallthru
    _
  // Predicated region
  $region62: #{vit_forward_pallas.1} parent=0 // pred_check
    _
  $region63: #{vit_forward_pallas.1} parent=0 // pred_check_branch
    %52 = sbr.rel (0) target = $region65
  $region64: #{vit_forward_pallas.1} parent=0 // pred_region
    _
  $region65: #{vit_forward_pallas.1} parent=0 // pred_fallthru
    _
  %v54 = vld [vmem:[%s0] sm:$0xf]
  %v55 = vld [vmem:[%s0 + $0x4] sm:$0xf]
  %v56 = vld [vmem:[%s0 + $0x8] sm:$0xf]
  %v57 = vld [vmem:[%s0 + $0xc] sm:$0xf]
  %v58 = vld [vmem:[%s0 + $0x10] sm:$0xf]
  %v59 = vld [vmem:[%s0 + $0x14] sm:$0xf]
  %v60 = vld [vmem:[%s3] sm:$0xf]
  %v61 = vld [vmem:[%s3 + $0x4] sm:$0xf]
  %v62 = vld [vmem:[%s3 + $0x8] sm:$0xf]
  %v63 = vld [vmem:[%s3 + $0xc] sm:$0xf]
  %v64 = vld [vmem:[%s3 + $0x10] sm:$0xf]
  %v65 = vld [vmem:[%s3 + $0x14] sm:$0xf]
  %v66 = vld [vmem:[%s3 + $0x18] sm:$0xf]
  %v67 = vld [vmem:[%s3 + $0x1c] sm:$0xf]
  %v68 = vld [vmem:[%s1] sm:$0xff]
  %v69 = vld [vmem:[%s1 + $0x8] sm:$0xff]
  %v70 = vld [vmem:[%s1 + $0x10] sm:$0xff]
  %v71 = vld [vmem:[%s1 + $0x18] sm:$0xff]
  %v72 = vld [vmem:[%s1 + $0x20] sm:$0xff]
  %v73 = vld [vmem:[%s1 + $0x28] sm:$0xff]
  %v80 = vunpack.c.l.b16 %v54
  %v81 = vunpack.c.l.b16 %v55
  %v82 = vunpack.c.l.b16 %v56
  %v83 = vunpack.c.l.b16 %v57
  %v84 = vunpack.c.l.b16 %v58
  %v85 = vunpack.c.l.b16 %v59
  %v86 = vpack.c.b16 %v81, %v80
  %v87 = vpack.c.b16 %v83, %v82
  %v88 = vpack.c.b16 %v85, %v84
  %v97 = vunpack.c.l.b16 %v60
  %v98 = vunpack.c.l.b16 %v61
  %v99 = vunpack.c.l.b16 %v62
  %v100 = vunpack.c.l.b16 %v63
  %v101 = vunpack.c.l.b16 %v64
  %v102 = vunpack.c.l.b16 %v65
  %v103 = vunpack.c.l.b16 %v66
  %v104 = vunpack.c.l.b16 %v67
  %v105 = vpack.c.b16 %v98, %v97
  %v106 = vpack.c.b16 %v100, %v99
  %v107 = vpack.c.b16 %v102, %v101
  %v108 = vpack.c.b16 %v104, %v103
  %vm113 = vcmask 523264
  %v115 = vsel %vm113, %v86, 0
  %v118 = vsel %vm113, %v87, 0
  %v121 = vsel %vm113, %v88, 0
  %123 = vmatprep.subr.bf16.mxu0 0
  %124 = vmatpush1.bf16.msra.mxu0 %v105
  %125 = vmatprep.subr.bf16.mxu0 0
  %126 = vmatpush1.bf16.msra.mxu0 %v106
  %127 = vmatprep.subr.bf16.mxu0 0
  %128 = vmatpush1.bf16.msra.mxu0 %v107
  %129 = vmatprep.subr.bf16.mxu0 0
  %130 = vmatpush1.bf16.msra.mxu0 %v108
  %131 = vmatprep.subr.bf16.mxu0 0
  %132 = vmatpush1.bf16.msra.mxu0 0
  %133 = vmatprep.subr.bf16.mxu0 0
  %134 = vmatpush1.bf16.msra.mxu0 0
  %135 = vmatprep.subr.bf16.mxu0 0
  %136 = vmatpush1.bf16.msra.mxu0 0
  %137 = vmatprep.subr.bf16.mxu0 0
  %138 = vmatpush1.bf16.msra.mxu0 0
  %139 = vmatprep.subr.bf16.mxu0 0
  %140 = vmatpush1.bf16.msra.mxu0 0
  %141 = vmatprep.subr.bf16.mxu0 0
  %142 = vmatpush1.bf16.msra.mxu0 0
  %143 = vmatprep.subr.bf16.mxu0 0
  %144 = vmatpush1.bf16.msra.mxu0 0
  %145 = vmatprep.subr.bf16.mxu0 0
  %146 = vmatpush1.bf16.msra.mxu0 0
  %147 = vmatprep.subr.bf16.mxu0 0
  %148 = vmatpush1.bf16.msra.mxu0 0
  %149 = vmatprep.subr.bf16.mxu0 0
  %150 = vmatpush1.bf16.msra.mxu0 0
  %151 = vmatprep.subr.bf16.mxu0 0
  %152 = vmatpush1.bf16.msra.mxu0 0
  %153 = vmatprep.subr.bf16.mxu0 0
  %154 = vmatpush1.bf16.msra.mxu0 0
  %155 = vmatprep.mubr.bf16.mxu0 0
  %156 = vmatmul.mubr.bf16.gmra.mrb[0].mxu0 %v115
  %v157 = vpop.f32.mrb[0].mxu0
  %v158 = vadd.f32 %v68, %v157
  %v159 = vpop.f32.mrb[0].mxu0
  %v160 = vpop.f32.mrb[0].mxu0
  %v161 = vadd.f32 %v69, %v160
  %v162 = vpop.f32.mrb[0].mxu0
  %163 = vmatprep.mubr.bf16.mxu0 0
  %164 = vmatmul.mubr.bf16.gmra.mrb[0].mxu0 %v118
  %v165 = vpop.f32.mrb[0].mxu0
  %v166 = vadd.f32 %v70, %v165
  %v167 = vpop.f32.mrb[0].mxu0
  %v168 = vpop.f32.mrb[0].mxu0
  %v169 = vadd.f32 %v71, %v168
  %v170 = vpop.f32.mrb[0].mxu0
  %171 = vmatprep.mubr.bf16.mxu0 0
  %172 = vmatmul.mubr.bf16.gmra.mrb[0].mxu0 %v121
  %v173 = vpop.f32.mrb[0].mxu0
  %v174 = vadd.f32 %v72, %v173
  %v175 = vpop.f32.mrb[0].mxu0
  %v176 = vpop.f32.mrb[0].mxu0
  %v177 = vadd.f32 %v73, %v176
  %v178 = vpop.f32.mrb[0].mxu0
  %179 = vdwg.mxu0
  %v180 = vld [vmem:[%s2] sm:$0xff]
  %v181 = vld [vmem:[%s2 + $0x8] sm:$0xff]
  %v182 = vld [vmem:[%s2 + $0x10] sm:$0xff]
  %v183 = vld [vmem:[%s2 + $0x18] sm:$0xff]
  %v184 = vld [vmem:[%s2 + $0x20] sm:$0xff]
  %v185 = vld [vmem:[%s2 + $0x28] sm:$0xff]
  %v186 = vld [vmem:[%s12] sm:$0xf]
  %vm187 = vcmask 261120
  %v188 = vsel %vm187, %v158, 0.0
  %189 = vadd.xlane.f32.xlu0 %v188
  %v190 = vpop.xlane.xlu0 %189
  %v191 = vsel %vm187, %v161, 0.0
  %192 = vadd.xlane.f32.xlu0 %v191
  %v193 = vpop.xlane.xlu0 %192
  %v194 = vsel %vm187, %v166, 0.0
  %195 = vadd.xlane.f32.xlu0 %v194
  %v196 = vpop.xlane.xlu0 %195
  %v197 = vsel %vm187, %v169, 0.0
  %198 = vadd.xlane.f32.xlu0 %v197
  %v199 = vpop.xlane.xlu0 %198
  %v200 = vsel %vm187, %v174, 0.0
  %201 = vadd.xlane.f32.xlu0 %v200
  %v202 = vpop.xlane.xlu0 %201
  %v203 = vsel %vm187, %v177, 0.0
  %204 = vadd.xlane.f32.xlu0 %v203
  %v205 = vpop.xlane.xlu0 %204
  %v206 = vrcp.pop 32.0
  %v207 = vmul.f32 %v190, %v206
  %v208 = vmul.f32 %v193, %v206
  %v209 = vmul.f32 %v196, %v206
  %v210 = vmul.f32 %v199, %v206
  %v211 = vmul.f32 %v202, %v206
  %v212 = vmul.f32 %v205, %v206
  %v213 = vsub.f32 %v158, %v207
  %v214 = vsub.f32 %v161, %v208
  %v215 = vsub.f32 %v166, %v209
  %v216 = vsub.f32 %v169, %v210
  %v217 = vsub.f32 %v174, %v211
  %v218 = vsub.f32 %v177, %v212
  %v219 = vmul.f32 %v213, %v213
  %v220 = vmul.f32 %v214, %v214
  %v221 = vmul.f32 %v215, %v215
  %v222 = vmul.f32 %v216, %v216
  %v223 = vmul.f32 %v217, %v217
  %v224 = vmul.f32 %v218, %v218
  %v225 = vsel %vm187, %v219, 0.0
  %226 = vadd.xlane.f32.xlu0 %v225
  %v227 = vpop.xlane.xlu0 %226
  %v228 = vsel %vm187, %v220, 0.0
  %229 = vadd.xlane.f32.xlu0 %v228
  %v230 = vpop.xlane.xlu0 %229
  %v231 = vsel %vm187, %v221, 0.0
  %232 = vadd.xlane.f32.xlu0 %v231
  %v233 = vpop.xlane.xlu0 %232
  %v234 = vsel %vm187, %v222, 0.0
  %235 = vadd.xlane.f32.xlu0 %v234
  %v236 = vpop.xlane.xlu0 %235
  %v237 = vsel %vm187, %v223, 0.0
  %238 = vadd.xlane.f32.xlu0 %v237
  %v239 = vpop.xlane.xlu0 %238
  %v240 = vsel %vm187, %v224, 0.0
  %241 = vadd.xlane.f32.xlu0 %v240
  %v242 = vpop.xlane.xlu0 %241
  %v243 = vmul.f32 %v227, %v206
  %v244 = vmul.f32 %v230, %v206
  %v245 = vmul.f32 %v233, %v206
  %v246 = vmul.f32 %v236, %v206
  %v247 = vmul.f32 %v239, %v206
  %v248 = vmul.f32 %v242, %v206
  %v249 = vadd.f32 %v243, 1e-05
  %v250 = vadd.f32 %v244, 1e-05
  %v251 = vadd.f32 %v245, 1e-05
  %v252 = vadd.f32 %v246, 1e-05
  %v253 = vadd.f32 %v247, 1e-05
  %v254 = vadd.f32 %v248, 1e-05
  %v255 = vrsqrt.pop %v249
  %v256 = vrsqrt.pop %v250
  %v257 = vrsqrt.pop %v251
  %v258 = vrsqrt.pop %v252
  %v259 = vrsqrt.pop %v253
  %v260 = vrsqrt.pop %v254
  %v261 = vmul.f32 %v213, %v255
  %v262 = vmul.f32 %v214, %v256
  %v263 = vmul.f32 %v215, %v257
  %v264 = vmul.f32 %v216, %v258
  %v265 = vmul.f32 %v217, %v259
  %v266 = vmul.f32 %v218, %v260
  %v267 = vlaneseq
  %v268 = vshrl.u32 %v267, 7
  %v269 = vsub.s32 0, %v268
  %v270 = vrot.slane %v186, %v269
  %v271 = vmul.f32 %v261, %v270
  %v272 = vmul.f32 %v262, %v270
  %v273 = vmul.f32 %v263, %v270
  %v274 = vmul.f32 %v264, %v270
  %v275 = vmul.f32 %v265, %v270
  %v276 = vmul.f32 %v266, %v270
  %v277 = vlaneseq
  %v278 = vshrl.u32 %v277, 7
  %v279 = vsub.s32 1, %v278
  %v280 = vrot.slane %v186, %v279
  %v281 = vadd.f32 %v271, %v280
  %v282 = vadd.f32 %v272, %v280
  %v283 = vadd.f32 %v273, %v280
  %v284 = vadd.f32 %v274, %v280
  %v285 = vadd.f32 %v275, %v280
  %v286 = vadd.f32 %v276, %v280
  %v287 = vpack.c.bf16 %v282, %v281
  %v288 = vpack.c.bf16 %v284, %v283
  %v289 = vpack.c.bf16 %v286, %v285
  %v290 = vld [vmem:[%s4] sm:$0xf]
  %v291 = vld [vmem:[%s4 + $0x4] sm:$0xf]
  %v292 = vld [vmem:[%s4 + $0x8] sm:$0xf]
  %v293 = vld [vmem:[%s4 + $0xc] sm:$0xf]
  %v294 = vld [vmem:[%s5] sm:$0x1]
  %v296 = vlaneseq
  %v297 = vshrl.u32 %v296, 7
  %v298 = vsub.s32 0, %v297
  %v299 = vrot.slane %v294, %v298
  %v305 = vunpack.c.l.b16 %v290
  %v306 = vunpack.c.l.b16 %v291
  %v307 = vunpack.c.l.b16 %v292
  %v308 = vunpack.c.l.b16 %v293
  %v309 = vpack.c.b16 %v306, %v305
  %v310 = vpack.c.b16 %v308, %v307
  %v314 = vsel %vm187, %v287, 0
  %v317 = vsel %vm187, %v288, 0
  %v320 = vsel %vm187, %v289, 0
  %322 = vmatprep.subr.bf16.mxu0 0
  %323 = vmatpush1.bf16.msra.mxu0 %v309
  %324 = vmatprep.subr.bf16.mxu0 0
  %325 = vmatpush1.bf16.msra.mxu0 %v310
  %326 = vmatprep.subr.bf16.mxu0 0
  %327 = vmatpush1.bf16.msra.mxu0 0
  %328 = vmatprep.subr.bf16.mxu0 0
  %329 = vmatpush1.bf16.msra.mxu0 0
  %330 = vmatprep.subr.bf16.mxu0 0
  %331 = vmatpush1.bf16.msra.mxu0 0
  %332 = vmatprep.subr.bf16.mxu0 0
  %333 = vmatpush1.bf16.msra.mxu0 0
  %334 = vmatprep.subr.bf16.mxu0 0
  %335 = vmatpush1.bf16.msra.mxu0 0
  %336 = vmatprep.subr.bf16.mxu0 0
  %337 = vmatpush1.bf16.msra.mxu0 0
  %338 = vmatprep.subr.bf16.mxu0 0
  %339 = vmatpush1.bf16.msra.mxu0 0
  %340 = vmatprep.subr.bf16.mxu0 0
  %341 = vmatpush1.bf16.msra.mxu0 0
  %342 = vmatprep.subr.bf16.mxu0 0
  %343 = vmatpush1.bf16.msra.mxu0 0
  %344 = vmatprep.subr.bf16.mxu0 0
  %345 = vmatpush1.bf16.msra.mxu0 0
  %346 = vmatprep.subr.bf16.mxu0 0
  %347 = vmatpush1.bf16.msra.mxu0 0
  %348 = vmatprep.subr.bf16.mxu0 0
  %349 = vmatpush1.bf16.msra.mxu0 0
  %350 = vmatprep.subr.bf16.mxu0 0
  %351 = vmatpush1.bf16.msra.mxu0 0
  %352 = vmatprep.subr.bf16.mxu0 0
  %353 = vmatpush1.bf16.msra.mxu0 0
  %354 = vmatprep.mubr.bf16.mxu0 0
  %355 = vmatmul.mubr.bf16.gmra.mrb[0].mxu0 %v314
  %v356 = vpop.f32.mrb[0].mxu0
  %v357 = vadd.f32 %v299, %v356
  %v358 = vpop.f32.mrb[0].mxu0
  %v359 = vpop.f32.mrb[0].mxu0
  %v360 = vadd.f32 %v299, %v359
  %v361 = vpop.f32.mrb[0].mxu0
  %362 = vmatprep.mubr.bf16.mxu0 0
  %363 = vmatmul.mubr.bf16.gmra.mrb[0].mxu0 %v317
  %v364 = vpop.f32.mrb[0].mxu0
  %v365 = vadd.f32 %v299, %v364
  %v366 = vpop.f32.mrb[0].mxu0
  %v367 = vpop.f32.mrb[0].mxu0
  %v368 = vadd.f32 %v299, %v367
  %v369 = vpop.f32.mrb[0].mxu0
  %370 = vmatprep.mubr.bf16.mxu0 0
  %371 = vmatmul.mubr.bf16.gmra.mrb[0].mxu0 %v320
  %v372 = vpop.f32.mrb[0].mxu0
  %v373 = vadd.f32 %v299, %v372
  %v374 = vpop.f32.mrb[0].mxu0
  %v375 = vpop.f32.mrb[0].mxu0
  %v376 = vadd.f32 %v299, %v375
  %v377 = vpop.f32.mrb[0].mxu0
  %378 = vdwg.mxu0
  %v379 = vld [vmem:[%s6] sm:$0xf]
  %v380 = vld [vmem:[%s6 + $0x4] sm:$0xf]
  %v381 = vld [vmem:[%s6 + $0x8] sm:$0xf]
  %v382 = vld [vmem:[%s6 + $0xc] sm:$0xf]
  %v383 = vld [vmem:[%s7] sm:$0x1]
  %v384 = vpack.c.bf16 %v360, %v357
  %v385 = vpack.c.bf16 %v368, %v365
  %v386 = vpack.c.bf16 %v376, %v373
  %390 = vrot.lane.b32.xlu0 %v384, 96
  %v391 = vpop.permute.xlu0 %390
  %392 = vrot.lane.b32.xlu0 %v385, 96
  %v393 = vpop.permute.xlu0 %392
  %394 = vrot.lane.b32.xlu0 %v386, 96
  %v395 = vpop.permute.xlu0 %394
  %vm396 = vcmask 130048
  %v398 = vsel %vm396, %v384, 0
  %v401 = vsel %vm396, %v385, 0
  %v404 = vsel %vm396, %v386, 0
  %v407 = vsel %vm396, %v391, 0
  %v410 = vsel %vm396, %v393, 0
  %v413 = vsel %vm396, %v395, 0
  %415 = vmatprep.subr.bf16.mxu0 0
  %416 = vmatpush1.bf16.xpose.msra.mxu0 %v407
  %417 = vmatprep.subr.bf16.mxu0 0
  %418 = vmatpush1.bf16.xpose.msra.mxu0 %v410
  %419 = vmatprep.subr.bf16.mxu0 0
  %420 = vmatpush1.bf16.xpose.msra.mxu0 %v413
  %421 = vmatprep.subr.bf16.mxu0 0
  %422 = vmatpush1.bf16.xpose.msra.mxu0 0
  %423 = vmatprep.subr.bf16.mxu0 0
  %424 = vmatpush1.bf16.xpose.msra.mxu0 0
  %425 = vmatprep.subr.bf16.mxu0 0
  %426 = vmatpush1.bf16.xpose.msra.mxu0 0
  %427 = vmatprep.subr.bf16.mxu0 0
  %428 = vmatpush1.bf16.xpose.msra.mxu0 0
  %429 = vmatprep.subr.bf16.mxu0 0
  %430 = vmatpush1.bf16.xpose.msra.mxu0 0
  %431 = vmatprep.subr.bf16.mxu0 0
  %432 = vmatpush1.bf16.xpose.msra.mxu0 0
  %433 = vmatprep.subr.bf16.mxu0 0
  %434 = vmatpush1.bf16.xpose.msra.mxu0 0
  %435 = vmatprep.subr.bf16.mxu0 0
  %436 = vmatpush1.bf16.xpose.msra.mxu0 0
  %437 = vmatprep.subr.bf16.mxu0 0
  %438 = vmatpush1.bf16.xpose.msra.mxu0 0
  %439 = vmatprep.subr.bf16.mxu0 0
  %440 = vmatpush1.bf16.xpose.msra.mxu0 0
  %441 = vmatprep.subr.bf16.mxu0 0
  %442 = vmatpush1.bf16.xpose.msra.mxu0 0
  %443 = vmatprep.subr.bf16.mxu0 0
  %444 = vmatpush1.bf16.xpose.msra.mxu0 0
  %445 = vmatprep.subr.bf16.mxu0 0
  %446 = vmatpush1.bf16.xpose.msra.mxu0 0
  %447 = vmatprep.mubr.bf16.mxu0 0
  %448 = vmatmul.mubr.bf16.gmra.mrb[0].mxu0 %v398
  %v449 = vpop.f32.mrb[0].mxu0
  %v450 = vadd.f32 %v180, %v449
  %v451 = vpop.f32.mrb[0].mxu0
  %v452 = vpop.f32.mrb[0].mxu0
  %v453 = vadd.f32 %v181, %v452
  %v454 = vpop.f32.mrb[0].mxu0
  %455 = vmatprep.mubr.bf16.mxu0 0
  %456 = vmatmul.mubr.bf16.gmra.mrb[0].mxu0 %v401
  %v457 = vpop.f32.mrb[0].mxu0
  %v458 = vadd.f32 %v182, %v457
  %v459 = vpop.f32.mrb[0].mxu0
  %v460 = vpop.f32.mrb[0].mxu0
  %v461 = vadd.f32 %v183, %v460
  %v462 = vpop.f32.mrb[0].mxu0
  %463 = vmatprep.mubr.bf16.mxu0 0
  %464 = vmatmul.mubr.bf16.gmra.mrb[0].mxu0 %v404
  %v465 = vpop.f32.mrb[0].mxu0
  %v466 = vadd.f32 %v184, %v465
  %v467 = vpop.f32.mrb[0].mxu0
  %v468 = vpop.f32.mrb[0].mxu0
  %v469 = vadd.f32 %v185, %v468
  %v470 = vpop.f32.mrb[0].mxu0
  %471 = vdwg.mxu0
  %vm472 = vcmask 392192
  %v473 = vsel %vm472, %v450, -inf
  %474 = vmax.xlane.f32.xlu0 %v473
  %v475 = vpop.xlane.xlu0 %474
  %v476 = vsel %vm472, %v453, -inf
  %477 = vmax.xlane.f32.xlu0 %v476
  %v478 = vpop.xlane.xlu0 %477
  %v479 = vsel %vm472, %v458, -inf
  %480 = vmax.xlane.f32.xlu0 %v479
  %v481 = vpop.xlane.xlu0 %480
  %v482 = vsel %vm472, %v461, -inf
  %483 = vmax.xlane.f32.xlu0 %v482
  %v484 = vpop.xlane.xlu0 %483
  %v485 = vsel %vm472, %v466, -inf
  %486 = vmax.xlane.f32.xlu0 %v485
  %v487 = vpop.xlane.xlu0 %486
  %v488 = vsel %vm472, %v469, -inf
  %489 = vmax.xlane.f32.xlu0 %v488
  %v490 = vpop.xlane.xlu0 %489
  %v491 = vsub.f32 %v450, %v475
  %v492 = vsub.f32 %v453, %v478
  %v493 = vsub.f32 %v458, %v481
  %v494 = vsub.f32 %v461, %v484
  %v495 = vsub.f32 %v466, %v487
  %v496 = vsub.f32 %v469, %v490
  %v497 = vmul.f32 %v491, 1.442695
  %v498 = vpow.pop %v497
  %v499 = vmul.f32 %v492, 1.442695
  %v500 = vpow.pop %v499
  %v501 = vmul.f32 %v493, 1.442695
  %v502 = vpow.pop %v501
  %v503 = vmul.f32 %v494, 1.442695
  %v504 = vpow.pop %v503
  %v505 = vmul.f32 %v495, 1.442695
  %v506 = vpow.pop %v505
  %v507 = vmul.f32 %v496, 1.442695
  %v508 = vpow.pop %v507
  %v509 = vsel %vm472, %v498, 0.0
  %510 = vadd.xlane.f32.xlu0 %v509
  %v511 = vpop.xlane.xlu0 %510
  %v512 = vsel %vm472, %v500, 0.0
  %513 = vadd.xlane.f32.xlu0 %v512
  %v514 = vpop.xlane.xlu0 %513
  %v515 = vsel %vm472, %v502, 0.0
  %516 = vadd.xlane.f32.xlu0 %v515
  %v517 = vpop.xlane.xlu0 %516
  %v518 = vsel %vm472, %v504, 0.0
  %519 = vadd.xlane.f32.xlu0 %v518
  %v520 = vpop.xlane.xlu0 %519
  %v521 = vsel %vm472, %v506, 0.0
  %522 = vadd.xlane.f32.xlu0 %v521
  %v523 = vpop.xlane.xlu0 %522
  %v524 = vsel %vm472, %v508, 0.0
  %525 = vadd.xlane.f32.xlu0 %v524
  %v526 = vpop.xlane.xlu0 %525
  %v527 = vrcp.pop %v511
  %v528 = vmul.f32 %v498, %v527
  %v529 = vrcp.pop %v514
  %v530 = vmul.f32 %v500, %v529
  %v531 = vrcp.pop %v517
  %v532 = vmul.f32 %v502, %v531
  %v533 = vrcp.pop %v520
  %v534 = vmul.f32 %v504, %v533
  %v535 = vrcp.pop %v523
  %v536 = vmul.f32 %v506, %v535
  %v537 = vrcp.pop %v526
  %v538 = vmul.f32 %v508, %v537
  %v539 = vpack.c.bf16 %v530, %v528
  %v540 = vpack.c.bf16 %v534, %v532
  %v541 = vpack.c.bf16 %v538, %v536
  %542 = vrot.lane.b32.xlu0 %v384, 64
  %v543 = vpop.permute.xlu0 %542
  %544 = vrot.lane.b32.xlu0 %v385, 64
  %v545 = vpop.permute.xlu0 %544
  %546 = vrot.lane.b32.xlu0 %v386, 64
  %v547 = vpop.permute.xlu0 %546
  %v552 = vsel %vm472, %v539, 0
  %v555 = vsel %vm472, %v540, 0
  %v558 = vsel %vm472, %v541, 0
  %560 = vmatprep.subr.bf16.mxu0 0
  %561 = vmatpush1.bf16.msra.mxu0 %v543
  %562 = vmatprep.subr.bf16.mxu0 0
  %563 = vmatpush1.bf16.msra.mxu0 %v545
  %564 = vmatprep.subr.bf16.mxu0 0
  %565 = vmatpush1.bf16.msra.mxu0 %v547
  %566 = vmatprep.subr.bf16.mxu0 0
  %567 = vmatpush1.bf16.msra.mxu0 0
  %568 = vmatprep.subr.bf16.mxu0 0
  %569 = vmatpush1.bf16.msra.mxu0 0
  %570 = vmatprep.subr.bf16.mxu0 0
  %571 = vmatpush1.bf16.msra.mxu0 0
  %572 = vmatprep.subr.bf16.mxu0 0
  %573 = vmatpush1.bf16.msra.mxu0 0
  %574 = vmatprep.subr.bf16.mxu0 0
  %575 = vmatpush1.bf16.msra.mxu0 0
  %576 = vmatprep.subr.bf16.mxu0 0
  %577 = vmatpush1.bf16.msra.mxu0 0
  %578 = vmatprep.subr.bf16.mxu0 0
  %579 = vmatpush1.bf16.msra.mxu0 0
  %580 = vmatprep.subr.bf16.mxu0 0
  %581 = vmatpush1.bf16.msra.mxu0 0
  %582 = vmatprep.subr.bf16.mxu0 0
  %583 = vmatpush1.bf16.msra.mxu0 0
  %584 = vmatprep.subr.bf16.mxu0 0
  %585 = vmatpush1.bf16.msra.mxu0 0
  %586 = vmatprep.subr.bf16.mxu0 0
  %587 = vmatpush1.bf16.msra.mxu0 0
  %588 = vmatprep.subr.bf16.mxu0 0
  %589 = vmatpush1.bf16.msra.mxu0 0
  %590 = vmatprep.subr.bf16.mxu0 0
  %591 = vmatpush1.bf16.msra.mxu0 0
  %592 = vmatprep.mubr.bf16.mxu0 0
  %593 = vmatmul.mubr.bf16.gmra.mrb[0].mxu0 %v552
  %v594 = vpop.f32.mrb[0].mxu0
  %v595 = vadd.f32 0.0, %v594
  %v596 = vpop.f32.mrb[0].mxu0
  %v597 = vpop.f32.mrb[0].mxu0
  %v598 = vadd.f32 0.0, %v597
  %v599 = vpop.f32.mrb[0].mxu0
  %600 = vmatprep.mubr.bf16.mxu0 0
  %601 = vmatmul.mubr.bf16.gmra.mrb[0].mxu0 %v555
  %v602 = vpop.f32.mrb[0].mxu0
  %v603 = vadd.f32 0.0, %v602
  %v604 = vpop.f32.mrb[0].mxu0
  %v605 = vpop.f32.mrb[0].mxu0
  %v606 = vadd.f32 0.0, %v605
  %v607 = vpop.f32.mrb[0].mxu0
  %608 = vmatprep.mubr.bf16.mxu0 0
  %609 = vmatmul.mubr.bf16.gmra.mrb[0].mxu0 %v558
  %v610 = vpop.f32.mrb[0].mxu0
  %v611 = vadd.f32 0.0, %v610
  %v612 = vpop.f32.mrb[0].mxu0
  %v613 = vpop.f32.mrb[0].mxu0
  %v614 = vadd.f32 0.0, %v613
  %v615 = vpop.f32.mrb[0].mxu0
  %616 = vdwg.mxu0
  %v617 = vpack.c.bf16 %v598, %v595
  %v618 = vpack.c.bf16 %v606, %v603
  %v619 = vpack.c.bf16 %v614, %v611
  %v622 = vunpack.c.l.b16 %v379
  %v623 = vunpack.c.l.b16 %v380
  %v624 = vpack.c.b16 %v623, %v622
  %v627 = vsel %vm396, %v617, 0
  %v630 = vsel %vm396, %v618, 0
  %v633 = vsel %vm396, %v619, 0
  %635 = vmatprep.subr.bf16.mxu0 0
  %636 = vmatpush1.bf16.msra.mxu0 %v624
  %637 = vmatprep.subr.bf16.mxu0 0
  %638 = vmatpush1.bf16.msra.mxu0 0
  %639 = vmatprep.subr.bf16.mxu0 0
  %640 = vmatpush1.bf16.msra.mxu0 0
  %641 = vmatprep.subr.bf16.mxu0 0
  %642 = vmatpush1.bf16.msra.mxu0 0
  %643 = vmatprep.subr.bf16.mxu0 0
  %644 = vmatpush1.bf16.msra.mxu0 0
  %645 = vmatprep.subr.bf16.mxu0 0
  %646 = vmatpush1.bf16.msra.mxu0 0
  %647 = vmatprep.subr.bf16.mxu0 0
  %648 = vmatpush1.bf16.msra.mxu0 0
  %649 = vmatprep.subr.bf16.mxu0 0
  %650 = vmatpush1.bf16.msra.mxu0 0
  %651 = vmatprep.subr.bf16.mxu0 0
  %652 = vmatpush1.bf16.msra.mxu0 0
  %653 = vmatprep.subr.bf16.mxu0 0
  %654 = vmatpush1.bf16.msra.mxu0 0
  %655 = vmatprep.subr.bf16.mxu0 0
  %656 = vmatpush1.bf16.msra.mxu0 0
  %657 = vmatprep.subr.bf16.mxu0 0
  %658 = vmatpush1.bf16.msra.mxu0 0
  %659 = vmatprep.subr.bf16.mxu0 0
  %660 = vmatpush1.bf16.msra.mxu0 0
  %661 = vmatprep.subr.bf16.mxu0 0
  %662 = vmatpush1.bf16.msra.mxu0 0
  %663 = vmatprep.subr.bf16.mxu0 0
  %664 = vmatpush1.bf16.msra.mxu0 0
  %665 = vmatprep.subr.bf16.mxu0 0
  %666 = vmatpush1.bf16.msra.mxu0 0
  %667 = vmatprep.mubr.bf16.mxu0 0
  %668 = vmatmul.mubr.bf16.gmra.mrb[0].mxu0 %v627
  %v669 = vpop.f32.mrb[0].mxu0
  %v670 = vadd.f32 0.0, %v669
  %v671 = vpop.f32.mrb[0].mxu0
  %v672 = vpop.f32.mrb[0].mxu0
  %v673 = vadd.f32 0.0, %v672
  %v674 = vpop.f32.mrb[0].mxu0
  %675 = vmatprep.mubr.bf16.mxu0 0
  %676 = vmatmul.mubr.bf16.gmra.mrb[0].mxu0 %v630
  %v677 = vpop.f32.mrb[0].mxu0
  %v678 = vadd.f32 0.0, %v677
  %v679 = vpop.f32.mrb[0].mxu0
  %v680 = vpop.f32.mrb[0].mxu0
  %v681 = vadd.f32 0.0, %v680
  %v682 = vpop.f32.mrb[0].mxu0
  %683 = vmatprep.mubr.bf16.mxu0 0
  %684 = vmatmul.mubr.bf16.gmra.mrb[0].mxu0 %v633
  %v685 = vpop.f32.mrb[0].mxu0
  %v686 = vadd.f32 0.0, %v685
  %v687 = vpop.f32.mrb[0].mxu0
  %v688 = vpop.f32.mrb[0].mxu0
  %v689 = vadd.f32 0.0, %v688
  %v690 = vpop.f32.mrb[0].mxu0
  %691 = vdwg.mxu0
  %v693 = vlaneseq
  %v694 = vshrl.u32 %v693, 7
  %v695 = vsub.s32 0, %v694
  %v696 = vrot.slane %v383, %v695
  %v698 = vadd.f32 %v696, %v670
  %v699 = vadd.f32 %v696, %v673
  %v700 = vadd.f32 %v696, %v678
  %v701 = vadd.f32 %v696, %v681
  %v702 = vadd.f32 %v696, %v686
  %v703 = vadd.f32 %v696, %v689
  %704 = vrot.lane.b32.xlu0 %v384, 112
  %v705 = vpop.permute.xlu0 %704
  %706 = vrot.lane.b32.xlu0 %v385, 112
  %v707 = vpop.permute.xlu0 %706
  %708 = vrot.lane.b32.xlu0 %v386, 112
  %v709 = vpop.permute.xlu0 %708
  %710 = vrot.lane.b32.xlu0 %v384, 80
  %v711 = vpop.permute.xlu0 %710
  %712 = vrot.lane.b32.xlu0 %v385, 80
  %v713 = vpop.permute.xlu0 %712
  %714 = vrot.lane.b32.xlu0 %v386, 80
  %v715 = vpop.permute.xlu0 %714
  %v717 = vsel %vm396, %v705, 0
  %v720 = vsel %vm396, %v707, 0
  %v723 = vsel %vm396, %v709, 0
  %v726 = vsel %vm396, %v711, 0
  %v729 = vsel %vm396, %v713, 0
  %v732 = vsel %vm396, %v715, 0
  %734 = vmatprep.subr.bf16.mxu0 0
  %735 = vmatpush1.bf16.xpose.msra.mxu0 %v726
  %736 = vmatprep.subr.bf16.mxu0 0
  %737 = vmatpush1.bf16.xpose.msra.mxu0 %v729
  %738 = vmatprep.subr.bf16.mxu0 0
  %739 = vmatpush1.bf16.xpose.msra.mxu0 %v732
  %740 = vmatprep.subr.bf16.mxu0 0
  %741 = vmatpush1.bf16.xpose.msra.mxu0 0
  %742 = vmatprep.subr.bf16.mxu0 0
  %743 = vmatpush1.bf16.xpose.msra.mxu0 0
  %744 = vmatprep.subr.bf16.mxu0 0
  %745 = vmatpush1.bf16.xpose.msra.mxu0 0
  %746 = vmatprep.subr.bf16.mxu0 0
  %747 = vmatpush1.bf16.xpose.msra.mxu0 0
  %748 = vmatprep.subr.bf16.mxu0 0
  %749 = vmatpush1.bf16.xpose.msra.mxu0 0
  %750 = vmatprep.subr.bf16.mxu0 0
  %751 = vmatpush1.bf16.xpose.msra.mxu0 0
  %752 = vmatprep.subr.bf16.mxu0 0
  %753 = vmatpush1.bf16.xpose.msra.mxu0 0
  %754 = vmatprep.subr.bf16.mxu0 0
  %755 = vmatpush1.bf16.xpose.msra.mxu0 0
  %756 = vmatprep.subr.bf16.mxu0 0
  %757 = vmatpush1.bf16.xpose.msra.mxu0 0
  %758 = vmatprep.subr.bf16.mxu0 0
  %759 = vmatpush1.bf16.xpose.msra.mxu0 0
  %760 = vmatprep.subr.bf16.mxu0 0
  %761 = vmatpush1.bf16.xpose.msra.mxu0 0
  %762 = vmatprep.subr.bf16.mxu0 0
  %763 = vmatpush1.bf16.xpose.msra.mxu0 0
  %764 = vmatprep.subr.bf16.mxu0 0
  %765 = vmatpush1.bf16.xpose.msra.mxu0 0
  %766 = vmatprep.mubr.bf16.mxu0 0
  %767 = vmatmul.mubr.bf16.gmra.mrb[0].mxu0 %v717
  %v768 = vpop.f32.mrb[0].mxu0
  %v769 = vadd.f32 %v180, %v768
  %v770 = vpop.f32.mrb[0].mxu0
  %v771 = vpop.f32.mrb[0].mxu0
  %v772 = vadd.f32 %v181, %v771
  %v773 = vpop.f32.mrb[0].mxu0
  %774 = vmatprep.mubr.bf16.mxu0 0
  %775 = vmatmul.mubr.bf16.gmra.mrb[0].mxu0 %v720
  %v776 = vpop.f32.mrb[0].mxu0
  %v777 = vadd.f32 %v182, %v776
  %v778 = vpop.f32.mrb[0].mxu0
  %v779 = vpop.f32.mrb[0].mxu0
  %v780 = vadd.f32 %v183, %v779
  %v781 = vpop.f32.mrb[0].mxu0
  %782 = vmatprep.mubr.bf16.mxu0 0
  %783 = vmatmul.mubr.bf16.gmra.mrb[0].mxu0 %v723
  %v784 = vpop.f32.mrb[0].mxu0
  %v785 = vadd.f32 %v184, %v784
  %v786 = vpop.f32.mrb[0].mxu0
  %v787 = vpop.f32.mrb[0].mxu0
  %v788 = vadd.f32 %v185, %v787
  %v789 = vpop.f32.mrb[0].mxu0
  %790 = vdwg.mxu0
  %v791 = vsel %vm472, %v769, -inf
  %792 = vmax.xlane.f32.xlu0 %v791
  %v793 = vpop.xlane.xlu0 %792
  %v794 = vsel %vm472, %v772, -inf
  %795 = vmax.xlane.f32.xlu0 %v794
  %v796 = vpop.xlane.xlu0 %795
  %v797 = vsel %vm472, %v777, -inf
  %798 = vmax.xlane.f32.xlu0 %v797
  %v799 = vpop.xlane.xlu0 %798
  %v800 = vsel %vm472, %v780, -inf
  %801 = vmax.xlane.f32.xlu0 %v800
  %v802 = vpop.xlane.xlu0 %801
  %v803 = vsel %vm472, %v785, -inf
  %804 = vmax.xlane.f32.xlu0 %v803
  %v805 = vpop.xlane.xlu0 %804
  %v806 = vsel %vm472, %v788, -inf
  %807 = vmax.xlane.f32.xlu0 %v806
  %v808 = vpop.xlane.xlu0 %807
  %v809 = vsub.f32 %v769, %v793
  %v810 = vsub.f32 %v772, %v796
  %v811 = vsub.f32 %v777, %v799
  %v812 = vsub.f32 %v780, %v802
  %v813 = vsub.f32 %v785, %v805
  %v814 = vsub.f32 %v788, %v808
  %v815 = vmul.f32 %v809, 1.442695
  %v816 = vpow.pop %v815
  %v817 = vmul.f32 %v810, 1.442695
  %v818 = vpow.pop %v817
  %v819 = vmul.f32 %v811, 1.442695
  %v820 = vpow.pop %v819
  %v821 = vmul.f32 %v812, 1.442695
  %v822 = vpow.pop %v821
  %v823 = vmul.f32 %v813, 1.442695
  %v824 = vpow.pop %v823
  %v825 = vmul.f32 %v814, 1.442695
  %v826 = vpow.pop %v825
  %v827 = vsel %vm472, %v816, 0.0
  %828 = vadd.xlane.f32.xlu0 %v827
  %v829 = vpop.xlane.xlu0 %828
  %v830 = vsel %vm472, %v818, 0.0
  %831 = vadd.xlane.f32.xlu0 %v830
  %v832 = vpop.xlane.xlu0 %831
  %v833 = vsel %vm472, %v820, 0.0
  %834 = vadd.xlane.f32.xlu0 %v833
  %v835 = vpop.xlane.xlu0 %834
  %v836 = vsel %vm472, %v822, 0.0
  %837 = vadd.xlane.f32.xlu0 %v836
  %v838 = vpop.xlane.xlu0 %837
  %v839 = vsel %vm472, %v824, 0.0
  %840 = vadd.xlane.f32.xlu0 %v839
  %v841 = vpop.xlane.xlu0 %840
  %v842 = vsel %vm472, %v826, 0.0
  %843 = vadd.xlane.f32.xlu0 %v842
  %v844 = vpop.xlane.xlu0 %843
  %v845 = vrcp.pop %v829
  %v846 = vmul.f32 %v816, %v845
  %v847 = vrcp.pop %v832
  %v848 = vmul.f32 %v818, %v847
  %v849 = vrcp.pop %v835
  %v850 = vmul.f32 %v820, %v849
  %v851 = vrcp.pop %v838
  %v852 = vmul.f32 %v822, %v851
  %v853 = vrcp.pop %v841
  %v854 = vmul.f32 %v824, %v853
  %v855 = vrcp.pop %v844
  %v856 = vmul.f32 %v826, %v855
  %v857 = vpack.c.bf16 %v848, %v846
  %v858 = vpack.c.bf16 %v852, %v850
  %v859 = vpack.c.bf16 %v856, %v854
  %860 = vrot.lane.b32.xlu0 %v384, 48
  %v861 = vpop.permute.xlu0 %860
  %862 = vrot.lane.b32.xlu0 %v385, 48
  %v863 = vpop.permute.xlu0 %862
  %864 = vrot.lane.b32.xlu0 %v386, 48
  %v865 = vpop.permute.xlu0 %864
  %v870 = vsel %vm472, %v857, 0
  %v873 = vsel %vm472, %v858, 0
  %v876 = vsel %vm472, %v859, 0
  %878 = vmatprep.subr.bf16.mxu0 0
  %879 = vmatpush1.bf16.msra.mxu0 %v861
  %880 = vmatprep.subr.bf16.mxu0 0
  %881 = vmatpush1.bf16.msra.mxu0 %v863
  %882 = vmatprep.subr.bf16.mxu0 0
  %883 = vmatpush1.bf16.msra.mxu0 %v865
  %884 = vmatprep.subr.bf16.mxu0 0
  %885 = vmatpush1.bf16.msra.mxu0 0
  %886 = vmatprep.subr.bf16.mxu0 0
  %887 = vmatpush1.bf16.msra.mxu0 0
  %888 = vmatprep.subr.bf16.mxu0 0
  %889 = vmatpush1.bf16.msra.mxu0 0
  %890 = vmatprep.subr.bf16.mxu0 0
  %891 = vmatpush1.bf16.msra.mxu0 0
  %892 = vmatprep.subr.bf16.mxu0 0
  %893 = vmatpush1.bf16.msra.mxu0 0
  %894 = vmatprep.subr.bf16.mxu0 0
  %895 = vmatpush1.bf16.msra.mxu0 0
  %896 = vmatprep.subr.bf16.mxu0 0
  %897 = vmatpush1.bf16.msra.mxu0 0
  %898 = vmatprep.subr.bf16.mxu0 0
  %899 = vmatpush1.bf16.msra.mxu0 0
  %900 = vmatprep.subr.bf16.mxu0 0
  %901 = vmatpush1.bf16.msra.mxu0 0
  %902 = vmatprep.subr.bf16.mxu0 0
  %903 = vmatpush1.bf16.msra.mxu0 0
  %904 = vmatprep.subr.bf16.mxu0 0
  %905 = vmatpush1.bf16.msra.mxu0 0
  %906 = vmatprep.subr.bf16.mxu0 0
  %907 = vmatpush1.bf16.msra.mxu0 0
  %908 = vmatprep.subr.bf16.mxu0 0
  %909 = vmatpush1.bf16.msra.mxu0 0
  %910 = vmatprep.mubr.bf16.mxu0 0
  %911 = vmatmul.mubr.bf16.gmra.mrb[0].mxu0 %v870
  %v912 = vpop.f32.mrb[0].mxu0
  %v913 = vadd.f32 0.0, %v912
  %v914 = vpop.f32.mrb[0].mxu0
  %v915 = vpop.f32.mrb[0].mxu0
  %v916 = vadd.f32 0.0, %v915
  %v917 = vpop.f32.mrb[0].mxu0
  %918 = vmatprep.mubr.bf16.mxu0 0
  %919 = vmatmul.mubr.bf16.gmra.mrb[0].mxu0 %v873
  %v920 = vpop.f32.mrb[0].mxu0
  %v921 = vadd.f32 0.0, %v920
  %v922 = vpop.f32.mrb[0].mxu0
  %v923 = vpop.f32.mrb[0].mxu0
  %v924 = vadd.f32 0.0, %v923
  %v925 = vpop.f32.mrb[0].mxu0
  %926 = vmatprep.mubr.bf16.mxu0 0
  %927 = vmatmul.mubr.bf16.gmra.mrb[0].mxu0 %v876
  %v928 = vpop.f32.mrb[0].mxu0
  %v929 = vadd.f32 0.0, %v928
  %v930 = vpop.f32.mrb[0].mxu0
  %v931 = vpop.f32.mrb[0].mxu0
  %v932 = vadd.f32 0.0, %v931
  %v933 = vpop.f32.mrb[0].mxu0
  %934 = vdwg.mxu0
  %v935 = vpack.c.bf16 %v916, %v913
  %v936 = vpack.c.bf16 %v924, %v921
  %v937 = vpack.c.bf16 %v932, %v929
  %v940 = vunpack.c.l.b16 %v381
  %v941 = vunpack.c.l.b16 %v382
  %v942 = vpack.c.b16 %v941, %v940
  %v945 = vsel %vm396, %v935, 0
  %v948 = vsel %vm396, %v936, 0
  %v951 = vsel %vm396, %v937, 0
  %953 = vmatprep.subr.bf16.mxu0 0
  %954 = vmatpush1.bf16.msra.mxu0 %v942
  %955 = vmatprep.subr.bf16.mxu0 0
  %956 = vmatpush1.bf16.msra.mxu0 0
  %957 = vmatprep.subr.bf16.mxu0 0
  %958 = vmatpush1.bf16.msra.mxu0 0
  %959 = vmatprep.subr.bf16.mxu0 0
  %960 = vmatpush1.bf16.msra.mxu0 0
  %961 = vmatprep.subr.bf16.mxu0 0
  %962 = vmatpush1.bf16.msra.mxu0 0
  %963 = vmatprep.subr.bf16.mxu0 0
  %964 = vmatpush1.bf16.msra.mxu0 0
  %965 = vmatprep.subr.bf16.mxu0 0
  %966 = vmatpush1.bf16.msra.mxu0 0
  %967 = vmatprep.subr.bf16.mxu0 0
  %968 = vmatpush1.bf16.msra.mxu0 0
  %969 = vmatprep.subr.bf16.mxu0 0
  %970 = vmatpush1.bf16.msra.mxu0 0
  %971 = vmatprep.subr.bf16.mxu0 0
  %972 = vmatpush1.bf16.msra.mxu0 0
  %973 = vmatprep.subr.bf16.mxu0 0
  %974 = vmatpush1.bf16.msra.mxu0 0
  %975 = vmatprep.subr.bf16.mxu0 0
  %976 = vmatpush1.bf16.msra.mxu0 0
  %977 = vmatprep.subr.bf16.mxu0 0
  %978 = vmatpush1.bf16.msra.mxu0 0
  %979 = vmatprep.subr.bf16.mxu0 0
  %980 = vmatpush1.bf16.msra.mxu0 0
  %981 = vmatprep.subr.bf16.mxu0 0
  %982 = vmatpush1.bf16.msra.mxu0 0
  %983 = vmatprep.subr.bf16.mxu0 0
  %984 = vmatpush1.bf16.msra.mxu0 0
  %985 = vmatprep.mubr.bf16.mxu0 0
  %986 = vmatmul.mubr.bf16.gmra.mrb[0].mxu0 %v945
  %v987 = vpop.f32.mrb[0].mxu0
  %v988 = vadd.f32 0.0, %v987
  %v989 = vpop.f32.mrb[0].mxu0
  %v990 = vpop.f32.mrb[0].mxu0
  %v991 = vadd.f32 0.0, %v990
  %v992 = vpop.f32.mrb[0].mxu0
  %993 = vmatprep.mubr.bf16.mxu0 0
  %994 = vmatmul.mubr.bf16.gmra.mrb[0].mxu0 %v948
  %v995 = vpop.f32.mrb[0].mxu0
  %v996 = vadd.f32 0.0, %v995
  %v997 = vpop.f32.mrb[0].mxu0
  %v998 = vpop.f32.mrb[0].mxu0
  %v999 = vadd.f32 0.0, %v998
  %v1000 = vpop.f32.mrb[0].mxu0
  %1001 = vmatprep.mubr.bf16.mxu0 0
  %1002 = vmatmul.mubr.bf16.gmra.mrb[0].mxu0 %v951
  %v1003 = vpop.f32.mrb[0].mxu0
  %v1004 = vadd.f32 0.0, %v1003
  %v1005 = vpop.f32.mrb[0].mxu0
  %v1006 = vpop.f32.mrb[0].mxu0
  %v1007 = vadd.f32 0.0, %v1006
  %v1008 = vpop.f32.mrb[0].mxu0
  %1009 = vdwg.mxu0
  %v1010 = vadd.f32 %v698, %v988
  %v1011 = vadd.f32 %v699, %v991
  %v1012 = vadd.f32 %v700, %v996
  %v1013 = vadd.f32 %v701, %v999
  %v1014 = vadd.f32 %v702, %v1004
  %v1015 = vadd.f32 %v703, %v1007
  %v1016 = vadd.f32 %v158, %v1010
  %v1017 = vadd.f32 %v161, %v1011
  %v1018 = vadd.f32 %v166, %v1012
  %v1019 = vadd.f32 %v169, %v1013
  %v1020 = vadd.f32 %v174, %v1014
  %v1021 = vadd.f32 %v177, %v1015
  %v1022 = vsel %vm187, %v1016, 0.0
  %1023 = vadd.xlane.f32.xlu0 %v1022
  %v1024 = vpop.xlane.xlu0 %1023
  %v1025 = vsel %vm187, %v1017, 0.0
  %1026 = vadd.xlane.f32.xlu0 %v1025
  %v1027 = vpop.xlane.xlu0 %1026
  %v1028 = vsel %vm187, %v1018, 0.0
  %1029 = vadd.xlane.f32.xlu0 %v1028
  %v1030 = vpop.xlane.xlu0 %1029
  %v1031 = vsel %vm187, %v1019, 0.0
  %1032 = vadd.xlane.f32.xlu0 %v1031
  %v1033 = vpop.xlane.xlu0 %1032
  %v1034 = vsel %vm187, %v1020, 0.0
  %1035 = vadd.xlane.f32.xlu0 %v1034
  %v1036 = vpop.xlane.xlu0 %1035
  %v1037 = vsel %vm187, %v1021, 0.0
  %1038 = vadd.xlane.f32.xlu0 %v1037
  %v1039 = vpop.xlane.xlu0 %1038
  %v1040 = vmul.f32 %v1024, %v206
  %v1041 = vmul.f32 %v1027, %v206
  %v1042 = vmul.f32 %v1030, %v206
  %v1043 = vmul.f32 %v1033, %v206
  %v1044 = vmul.f32 %v1036, %v206
  %v1045 = vmul.f32 %v1039, %v206
  %v1046 = vsub.f32 %v1016, %v1040
  %v1047 = vsub.f32 %v1017, %v1041
  %v1048 = vsub.f32 %v1018, %v1042
  %v1049 = vsub.f32 %v1019, %v1043
  %v1050 = vsub.f32 %v1020, %v1044
  %v1051 = vsub.f32 %v1021, %v1045
  %v1052 = vmul.f32 %v1046, %v1046
  %v1053 = vmul.f32 %v1047, %v1047
  %v1054 = vmul.f32 %v1048, %v1048
  %v1055 = vmul.f32 %v1049, %v1049
  %v1056 = vmul.f32 %v1050, %v1050
  %v1057 = vmul.f32 %v1051, %v1051
  %v1058 = vsel %vm187, %v1052, 0.0
  %1059 = vadd.xlane.f32.xlu0 %v1058
  %v1060 = vpop.xlane.xlu0 %1059
  %v1061 = vsel %vm187, %v1053, 0.0
  %1062 = vadd.xlane.f32.xlu0 %v1061
  %v1063 = vpop.xlane.xlu0 %1062
  %v1064 = vsel %vm187, %v1054, 0.0
  %1065 = vadd.xlane.f32.xlu0 %v1064
  %v1066 = vpop.xlane.xlu0 %1065
  %v1067 = vsel %vm187, %v1055, 0.0
  %1068 = vadd.xlane.f32.xlu0 %v1067
  %v1069 = vpop.xlane.xlu0 %1068
  %v1070 = vsel %vm187, %v1056, 0.0
  %1071 = vadd.xlane.f32.xlu0 %v1070
  %v1072 = vpop.xlane.xlu0 %1071
  %v1073 = vsel %vm187, %v1057, 0.0
  %1074 = vadd.xlane.f32.xlu0 %v1073
  %v1075 = vpop.xlane.xlu0 %1074
  %v1076 = vmul.f32 %v1060, %v206
  %v1077 = vmul.f32 %v1063, %v206
  %v1078 = vmul.f32 %v1066, %v206
  %v1079 = vmul.f32 %v1069, %v206
  %v1080 = vmul.f32 %v1072, %v206
  %v1081 = vmul.f32 %v1075, %v206
  %v1082 = vadd.f32 %v1076, 1e-05
  %v1083 = vadd.f32 %v1077, 1e-05
  %v1084 = vadd.f32 %v1078, 1e-05
  %v1085 = vadd.f32 %v1079, 1e-05
  %v1086 = vadd.f32 %v1080, 1e-05
  %v1087 = vadd.f32 %v1081, 1e-05
  %v1088 = vrsqrt.pop %v1082
  %v1089 = vrsqrt.pop %v1083
  %v1090 = vrsqrt.pop %v1084
  %v1091 = vrsqrt.pop %v1085
  %v1092 = vrsqrt.pop %v1086
  %v1093 = vrsqrt.pop %v1087
  %v1094 = vmul.f32 %v1046, %v1088
  %v1095 = vmul.f32 %v1047, %v1089
  %v1096 = vmul.f32 %v1048, %v1090
  %v1097 = vmul.f32 %v1049, %v1091
  %v1098 = vmul.f32 %v1050, %v1092
  %v1099 = vmul.f32 %v1051, %v1093
  %v1100 = vlaneseq
  %v1101 = vshrl.u32 %v1100, 7
  %v1102 = vsub.s32 2, %v1101
  %v1103 = vrot.slane %v186, %v1102
  %v1104 = vmul.f32 %v1094, %v1103
  %v1105 = vmul.f32 %v1095, %v1103
  %v1106 = vmul.f32 %v1096, %v1103
  %v1107 = vmul.f32 %v1097, %v1103
  %v1108 = vmul.f32 %v1098, %v1103
  %v1109 = vmul.f32 %v1099, %v1103
  %v1110 = vlaneseq
  %v1111 = vshrl.u32 %v1110, 7
  %v1112 = vsub.s32 3, %v1111
  %v1113 = vrot.slane %v186, %v1112
  %v1114 = vadd.f32 %v1104, %v1113
  %v1115 = vadd.f32 %v1105, %v1113
  %v1116 = vadd.f32 %v1106, %v1113
  %v1117 = vadd.f32 %v1107, %v1113
  %v1118 = vadd.f32 %v1108, %v1113
  %v1119 = vadd.f32 %v1109, %v1113
  %v1120 = vpack.c.bf16 %v1115, %v1114
  %v1121 = vpack.c.bf16 %v1117, %v1116
  %v1122 = vpack.c.bf16 %v1119, %v1118
  %v1123 = vld [vmem:[%s8] sm:$0xf]
  %v1124 = vld [vmem:[%s8 + $0x4] sm:$0xf]
  %v1125 = vld [vmem:[%s8 + $0x8] sm:$0xf]
  %v1126 = vld [vmem:[%s8 + $0xc] sm:$0xf]
  %v1127 = vld [vmem:[%s9] sm:$0x1]
  %v1129 = vlaneseq
  %v1130 = vshrl.u32 %v1129, 7
  %v1131 = vsub.s32 0, %v1130
  %v1132 = vrot.slane %v1127, %v1131
  %v1138 = vunpack.c.l.b16 %v1123
  %v1139 = vunpack.c.l.b16 %v1124
  %v1140 = vunpack.c.l.b16 %v1125
  %v1141 = vunpack.c.l.b16 %v1126
  %v1142 = vpack.c.b16 %v1139, %v1138
  %v1143 = vpack.c.b16 %v1141, %v1140
  %v1147 = vsel %vm187, %v1120, 0
  %v1150 = vsel %vm187, %v1121, 0
  %v1153 = vsel %vm187, %v1122, 0
  %1155 = vmatprep.subr.bf16.mxu0 0
  %1156 = vmatpush1.bf16.msra.mxu0 %v1142
  %1157 = vmatprep.subr.bf16.mxu0 0
  %1158 = vmatpush1.bf16.msra.mxu0 %v1143
  %1159 = vmatprep.subr.bf16.mxu0 0
  %1160 = vmatpush1.bf16.msra.mxu0 0
  %1161 = vmatprep.subr.bf16.mxu0 0
  %1162 = vmatpush1.bf16.msra.mxu0 0
  %1163 = vmatprep.subr.bf16.mxu0 0
  %1164 = vmatpush1.bf16.msra.mxu0 0
  %1165 = vmatprep.subr.bf16.mxu0 0
  %1166 = vmatpush1.bf16.msra.mxu0 0
  %1167 = vmatprep.subr.bf16.mxu0 0
  %1168 = vmatpush1.bf16.msra.mxu0 0
  %1169 = vmatprep.subr.bf16.mxu0 0
  %1170 = vmatpush1.bf16.msra.mxu0 0
  %1171 = vmatprep.subr.bf16.mxu0 0
  %1172 = vmatpush1.bf16.msra.mxu0 0
  %1173 = vmatprep.subr.bf16.mxu0 0
  %1174 = vmatpush1.bf16.msra.mxu0 0
  %1175 = vmatprep.subr.bf16.mxu0 0
  %1176 = vmatpush1.bf16.msra.mxu0 0
  %1177 = vmatprep.subr.bf16.mxu0 0
  %1178 = vmatpush1.bf16.msra.mxu0 0
  %1179 = vmatprep.subr.bf16.mxu0 0
  %1180 = vmatpush1.bf16.msra.mxu0 0
  %1181 = vmatprep.subr.bf16.mxu0 0
  %1182 = vmatpush1.bf16.msra.mxu0 0
  %1183 = vmatprep.subr.bf16.mxu0 0
  %1184 = vmatpush1.bf16.msra.mxu0 0
  %1185 = vmatprep.subr.bf16.mxu0 0
  %1186 = vmatpush1.bf16.msra.mxu0 0
  %1187 = vmatprep.mubr.bf16.mxu0 0
  %1188 = vmatmul.mubr.bf16.gmra.mrb[0].mxu0 %v1147
  %v1189 = vpop.f32.mrb[0].mxu0
  %v1190 = vadd.f32 %v1132, %v1189
  %v1191 = vpop.f32.mrb[0].mxu0
  %v1192 = vpop.f32.mrb[0].mxu0
  %v1193 = vadd.f32 %v1132, %v1192
  %v1194 = vpop.f32.mrb[0].mxu0
  %1195 = vmatprep.mubr.bf16.mxu0 0
  %1196 = vmatmul.mubr.bf16.gmra.mrb[0].mxu0 %v1150
  %v1197 = vpop.f32.mrb[0].mxu0
  %v1198 = vadd.f32 %v1132, %v1197
  %v1199 = vpop.f32.mrb[0].mxu0
  %v1200 = vpop.f32.mrb[0].mxu0
  %v1201 = vadd.f32 %v1132, %v1200
  %v1202 = vpop.f32.mrb[0].mxu0
  %1203 = vmatprep.mubr.bf16.mxu0 0
  %1204 = vmatmul.mubr.bf16.gmra.mrb[0].mxu0 %v1153
  %v1205 = vpop.f32.mrb[0].mxu0
  %v1206 = vadd.f32 %v1132, %v1205
  %v1207 = vpop.f32.mrb[0].mxu0
  %v1208 = vpop.f32.mrb[0].mxu0
  %v1209 = vadd.f32 %v1132, %v1208
  %v1210 = vpop.f32.mrb[0].mxu0
  %1211 = vdwg.mxu0
  %v1212 = vmul.f32 %v1190, 0.5
  %v1213 = vmul.f32 %v1193, 0.5
  %v1214 = vmul.f32 %v1198, 0.5
  %v1215 = vmul.f32 %v1201, 0.5
  %v1216 = vmul.f32 %v1206, 0.5
  %v1217 = vmul.f32 %v1209, 0.5
  %v1218 = vmul.f32 %v1190, 0.70710677
  %v1219 = vmul.f32 %v1193, 0.70710677
  %v1220 = vmul.f32 %v1198, 0.70710677
  %v1221 = vmul.f32 %v1201, 0.70710677
  %v1222 = vmul.f32 %v1206, 0.70710677
  %v1223 = vmul.f32 %v1209, 0.70710677
  %vm1224 = vcmp.ge.f32.partialorder %v1218, 0.0
  %vm1225 = vcmp.ge.f32.partialorder %v1219, 0.0
  %vm1226 = vcmp.ge.f32.partialorder %v1220, 0.0
  %vm1227 = vcmp.ge.f32.partialorder %v1221, 0.0
  %vm1228 = vcmp.ge.f32.partialorder %v1222, 0.0
  %vm1229 = vcmp.ge.f32.partialorder %v1223, 0.0
  %v1230 = vsel %vm1224, 1.0, -1.0
  %v1231 = vsel %vm1225, 1.0, -1.0
  %v1232 = vsel %vm1226, 1.0, -1.0
  %v1233 = vsel %vm1227, 1.0, -1.0
  %v1234 = vsel %vm1228, 1.0, -1.0
  %v1235 = vsel %vm1229, 1.0, -1.0
  %v1236 = vand.u32 2147483647, %v1218
  %v1237 = vand.u32 2147483647, %v1219
  %v1238 = vand.u32 2147483647, %v1220
  %v1239 = vand.u32 2147483647, %v1221
  %v1240 = vand.u32 2147483647, %v1222
  %v1241 = vand.u32 2147483647, %v1223
  %v1242 = vmul.f32 %v1236, 0.3275911
  %v1243 = vmul.f32 %v1237, 0.3275911
  %v1244 = vmul.f32 %v1238, 0.3275911
  %v1245 = vmul.f32 %v1239, 0.3275911
  %v1246 = vmul.f32 %v1240, 0.3275911
  %v1247 = vmul.f32 %v1241, 0.3275911
  %v1248 = vadd.f32 %v1242, 1.0
  %v1249 = vadd.f32 %v1243, 1.0
  %v1250 = vadd.f32 %v1244, 1.0
  %v1251 = vadd.f32 %v1245, 1.0
  %v1252 = vadd.f32 %v1246, 1.0
  %v1253 = vadd.f32 %v1247, 1.0
  %v1254 = vrcp.pop %v1248
  %v1255 = vmul.f32 1.0, %v1254
  %v1256 = vrcp.pop %v1249
  %v1257 = vmul.f32 1.0, %v1256
  %v1258 = vrcp.pop %v1250
  %v1259 = vmul.f32 1.0, %v1258
  %v1260 = vrcp.pop %v1251
  %v1261 = vmul.f32 1.0, %v1260
  %v1262 = vrcp.pop %v1252
  %v1263 = vmul.f32 1.0, %v1262
  %v1264 = vrcp.pop %v1253
  %v1265 = vmul.f32 1.0, %v1264
  %v1266 = vmul.f32 %v1255, 1.0614054
  %v1267 = vmul.f32 %v1257, 1.0614054
  %v1268 = vmul.f32 %v1259, 1.0614054
  %v1269 = vmul.f32 %v1261, 1.0614054
  %v1270 = vmul.f32 %v1263, 1.0614054
  %v1271 = vmul.f32 %v1265, 1.0614054
  %v1272 = vadd.f32 %v1266, -1.4531521
  %v1273 = vadd.f32 %v1267, -1.4531521
  %v1274 = vadd.f32 %v1268, -1.4531521
  %v1275 = vadd.f32 %v1269, -1.4531521
  %v1276 = vadd.f32 %v1270, -1.4531521
  %v1277 = vadd.f32 %v1271, -1.4531521
  %v1278 = vmul.f32 %v1272, %v1255
  %v1279 = vmul.f32 %v1273, %v1257
  %v1280 = vmul.f32 %v1274, %v1259
  %v1281 = vmul.f32 %v1275, %v1261
  %v1282 = vmul.f32 %v1276, %v1263
  %v1283 = vmul.f32 %v1277, %v1265
  %v1284 = vadd.f32 %v1278, 1.4214138
  %v1285 = vadd.f32 %v1279, 1.4214138
  %v1286 = vadd.f32 %v1280, 1.4214138
  %v1287 = vadd.f32 %v1281, 1.4214138
  %v1288 = vadd.f32 %v1282, 1.4214138
  %v1289 = vadd.f32 %v1283, 1.4214138
  %v1290 = vmul.f32 %v1284, %v1255
  %v1291 = vmul.f32 %v1285, %v1257
  %v1292 = vmul.f32 %v1286, %v1259
  %v1293 = vmul.f32 %v1287, %v1261
  %v1294 = vmul.f32 %v1288, %v1263
  %v1295 = vmul.f32 %v1289, %v1265
  %v1296 = vadd.f32 %v1290, -0.28449672
  %v1297 = vadd.f32 %v1291, -0.28449672
  %v1298 = vadd.f32 %v1292, -0.28449672
  %v1299 = vadd.f32 %v1293, -0.28449672
  %v1300 = vadd.f32 %v1294, -0.28449672
  %v1301 = vadd.f32 %v1295, -0.28449672
  %v1302 = vmul.f32 %v1296, %v1255
  %v1303 = vmul.f32 %v1297, %v1257
  %v1304 = vmul.f32 %v1298, %v1259
  %v1305 = vmul.f32 %v1299, %v1261
  %v1306 = vmul.f32 %v1300, %v1263
  %v1307 = vmul.f32 %v1301, %v1265
  %v1308 = vadd.f32 %v1302, 0.2548296
  %v1309 = vadd.f32 %v1303, 0.2548296
  %v1310 = vadd.f32 %v1304, 0.2548296
  %v1311 = vadd.f32 %v1305, 0.2548296
  %v1312 = vadd.f32 %v1306, 0.2548296
  %v1313 = vadd.f32 %v1307, 0.2548296
  %v1314 = vmul.f32 %v1308, %v1255
  %v1315 = vmul.f32 %v1309, %v1257
  %v1316 = vmul.f32 %v1310, %v1259
  %v1317 = vmul.f32 %v1311, %v1261
  %v1318 = vmul.f32 %v1312, %v1263
  %v1319 = vmul.f32 %v1313, %v1265
  %v1320 = vsub.f32 0.0, %v1236
  %v1321 = vsub.f32 0.0, %v1237
  %v1322 = vsub.f32 0.0, %v1238
  %v1323 = vsub.f32 0.0, %v1239
  %v1324 = vsub.f32 0.0, %v1240
  %v1325 = vsub.f32 0.0, %v1241
  %v1326 = vmul.f32 %v1320, %v1236
  %v1327 = vmul.f32 %v1321, %v1237
  %v1328 = vmul.f32 %v1322, %v1238
  %v1329 = vmul.f32 %v1323, %v1239
  %v1330 = vmul.f32 %v1324, %v1240
  %v1331 = vmul.f32 %v1325, %v1241
  %v1332 = vmul.f32 %v1326, 1.442695
  %v1333 = vpow.pop %v1332
  %v1334 = vmul.f32 %v1327, 1.442695
  %v1335 = vpow.pop %v1334
  %v1336 = vmul.f32 %v1328, 1.442695
  %v1337 = vpow.pop %v1336
  %v1338 = vmul.f32 %v1329, 1.442695
  %v1339 = vpow.pop %v1338
  %v1340 = vmul.f32 %v1330, 1.442695
  %v1341 = vpow.pop %v1340
  %v1342 = vmul.f32 %v1331, 1.442695
  %v1343 = vpow.pop %v1342
  %v1344 = vmul.f32 %v1314, %v1333
  %v1345 = vmul.f32 %v1315, %v1335
  %v1346 = vmul.f32 %v1316, %v1337
  %v1347 = vmul.f32 %v1317, %v1339
  %v1348 = vmul.f32 %v1318, %v1341
  %v1349 = vmul.f32 %v1319, %v1343
  %v1350 = vsub.f32 1.0, %v1344
  %v1351 = vsub.f32 1.0, %v1345
  %v1352 = vsub.f32 1.0, %v1346
  %v1353 = vsub.f32 1.0, %v1347
  %v1354 = vsub.f32 1.0, %v1348
  %v1355 = vsub.f32 1.0, %v1349
  %v1356 = vmul.f32 %v1230, %v1350
  %v1357 = vmul.f32 %v1231, %v1351
  %v1358 = vmul.f32 %v1232, %v1352
  %v1359 = vmul.f32 %v1233, %v1353
  %v1360 = vmul.f32 %v1234, %v1354
  %v1361 = vmul.f32 %v1235, %v1355
  %v1362 = vadd.f32 %v1356, 1.0
  %v1363 = vadd.f32 %v1357, 1.0
  %v1364 = vadd.f32 %v1358, 1.0
  %v1365 = vadd.f32 %v1359, 1.0
  %v1366 = vadd.f32 %v1360, 1.0
  %v1367 = vadd.f32 %v1361, 1.0
  %v1368 = vmul.f32 %v1212, %v1362
  %v1369 = vmul.f32 %v1213, %v1363
  %v1370 = vmul.f32 %v1214, %v1364
  %v1371 = vmul.f32 %v1215, %v1365
  %v1372 = vmul.f32 %v1216, %v1366
  %v1373 = vmul.f32 %v1217, %v1367
  %v1374 = vpack.c.bf16 %v1369, %v1368
  %v1375 = vpack.c.bf16 %v1371, %v1370
  %v1376 = vpack.c.bf16 %v1373, %v1372
  %v1377 = vld [vmem:[%s10] sm:$0xf]
  %v1378 = vld [vmem:[%s10 + $0x4] sm:$0xf]
  %v1379 = vld [vmem:[%s10 + $0x8] sm:$0xf]
  %v1380 = vld [vmem:[%s10 + $0xc] sm:$0xf]
  %v1381 = vld [vmem:[%s10 + $0x10] sm:$0xf]
  %v1382 = vld [vmem:[%s10 + $0x14] sm:$0xf]
  %v1383 = vld [vmem:[%s10 + $0x18] sm:$0xf]
  %v1384 = vld [vmem:[%s10 + $0x1c] sm:$0xf]
  %v1385 = vld [vmem:[%s10 + $0x20] sm:$0xf]
  %v1386 = vld [vmem:[%s10 + $0x24] sm:$0xf]
  %v1387 = vld [vmem:[%s10 + $0x28] sm:$0xf]
  %v1388 = vld [vmem:[%s10 + $0x2c] sm:$0xf]
  %v1389 = vld [vmem:[%s10 + $0x30] sm:$0xf]
  %v1390 = vld [vmem:[%s10 + $0x34] sm:$0xf]
  %v1391 = vld [vmem:[%s10 + $0x38] sm:$0xf]
  %v1392 = vld [vmem:[%s10 + $0x3c] sm:$0xf]
  %v1393 = vld [vmem:[%s11] sm:$0x1]
  %v1395 = vlaneseq
  %v1396 = vshrl.u32 %v1395, 7
  %v1397 = vsub.s32 0, %v1396
  %v1398 = vrot.slane %v1393, %v1397
  %v1416 = vunpack.c.l.b16 %v1377
  %v1417 = vunpack.c.l.b16 %v1378
  %v1418 = vunpack.c.l.b16 %v1379
  %v1419 = vunpack.c.l.b16 %v1380
  %v1420 = vunpack.c.l.b16 %v1381
  %v1421 = vunpack.c.l.b16 %v1382
  %v1422 = vunpack.c.l.b16 %v1383
  %v1423 = vunpack.c.l.b16 %v1384
  %v1424 = vunpack.c.l.b16 %v1385
  %v1425 = vunpack.c.l.b16 %v1386
  %v1426 = vunpack.c.l.b16 %v1387
  %v1427 = vunpack.c.l.b16 %v1388
  %v1428 = vunpack.c.l.b16 %v1389
  %v1429 = vunpack.c.l.b16 %v1390
  %v1430 = vunpack.c.l.b16 %v1391
  %v1431 = vunpack.c.l.b16 %v1392
  %v1432 = vpack.c.b16 %v1417, %v1416
  %v1433 = vpack.c.b16 %v1419, %v1418
  %v1434 = vpack.c.b16 %v1421, %v1420
  %v1435 = vpack.c.b16 %v1423, %v1422
  %v1436 = vpack.c.b16 %v1425, %v1424
  %v1437 = vpack.c.b16 %v1427, %v1426
  %v1438 = vpack.c.b16 %v1429, %v1428
  %v1439 = vpack.c.b16 %v1431, %v1430
  %1448 = vmatprep.subr.bf16.mxu0 0
  %1449 = vmatpush1.bf16.msra.mxu0 %v1432
  %1450 = vmatprep.subr.bf16.mxu0 0
  %1451 = vmatpush1.bf16.msra.mxu0 %v1433
  %1452 = vmatprep.subr.bf16.mxu0 0
  %1453 = vmatpush1.bf16.msra.mxu0 %v1434
  %1454 = vmatprep.subr.bf16.mxu0 0
  %1455 = vmatpush1.bf16.msra.mxu0 %v1435
  %1456 = vmatprep.subr.bf16.mxu0 0
  %1457 = vmatpush1.bf16.msra.mxu0 %v1436
  %1458 = vmatprep.subr.bf16.mxu0 0
  %1459 = vmatpush1.bf16.msra.mxu0 %v1437
  %1460 = vmatprep.subr.bf16.mxu0 0
  %1461 = vmatpush1.bf16.msra.mxu0 %v1438
  %1462 = vmatprep.subr.bf16.mxu0 0
  %1463 = vmatpush1.bf16.msra.mxu0 %v1439
  %1464 = vmatprep.subr.bf16.mxu0 0
  %1465 = vmatpush1.bf16.msra.mxu0 0
  %1466 = vmatprep.subr.bf16.mxu0 0
  %1467 = vmatpush1.bf16.msra.mxu0 0
  %1468 = vmatprep.subr.bf16.mxu0 0
  %1469 = vmatpush1.bf16.msra.mxu0 0
  %1470 = vmatprep.subr.bf16.mxu0 0
  %1471 = vmatpush1.bf16.msra.mxu0 0
  %1472 = vmatprep.subr.bf16.mxu0 0
  %1473 = vmatpush1.bf16.msra.mxu0 0
  %1474 = vmatprep.subr.bf16.mxu0 0
  %1475 = vmatpush1.bf16.msra.mxu0 0
  %1476 = vmatprep.subr.bf16.mxu0 0
  %1477 = vmatpush1.bf16.msra.mxu0 0
  %1478 = vmatprep.subr.bf16.mxu0 0
  %1479 = vmatpush1.bf16.msra.mxu0 0
  %1480 = vmatprep.mubr.bf16.mxu0 0
  %1481 = vmatmul.mubr.bf16.gmra.mrb[0].mxu0 %v1374
  %v1482 = vpop.f32.mrb[0].mxu0
  %v1483 = vadd.f32 %v1398, %v1482
  %v1484 = vpop.f32.mrb[0].mxu0
  %v1485 = vpop.f32.mrb[0].mxu0
  %v1486 = vadd.f32 %v1398, %v1485
  %v1487 = vpop.f32.mrb[0].mxu0
  %1488 = vmatprep.mubr.bf16.mxu0 0
  %1489 = vmatmul.mubr.bf16.gmra.mrb[0].mxu0 %v1375
  %v1490 = vpop.f32.mrb[0].mxu0
  %v1491 = vadd.f32 %v1398, %v1490
  %v1492 = vpop.f32.mrb[0].mxu0
  %v1493 = vpop.f32.mrb[0].mxu0
  %v1494 = vadd.f32 %v1398, %v1493
  %v1495 = vpop.f32.mrb[0].mxu0
  %1496 = vmatprep.mubr.bf16.mxu0 0
  %1497 = vmatmul.mubr.bf16.gmra.mrb[0].mxu0 %v1376
  %v1498 = vpop.f32.mrb[0].mxu0
  %v1499 = vadd.f32 %v1398, %v1498
  %v1500 = vpop.f32.mrb[0].mxu0
  %v1501 = vpop.f32.mrb[0].mxu0
  %v1502 = vadd.f32 %v1398, %v1501
  %v1503 = vpop.f32.mrb[0].mxu0
  %1504 = vdwg.mxu0
  %v1505 = vadd.f32 %v1016, %v1483
  %v1506 = vadd.f32 %v1017, %v1486
  %v1507 = vadd.f32 %v1018, %v1491
  %v1508 = vadd.f32 %v1019, %v1494
  %v1509 = vadd.f32 %v1020, %v1499
  %v1510 = vadd.f32 %v1021, %v1502
  %s1511 = scalar_lea.vmem %s12, 4
  %v1512 = vld [vmem:[%s1511] sm:$0xf]
  %v1513 = vsel %vm187, %v1505, 0.0
  %1514 = vadd.xlane.f32.xlu0 %v1513
  %v1515 = vpop.xlane.xlu0 %1514
  %v1516 = vsel %vm187, %v1506, 0.0
  %1517 = vadd.xlane.f32.xlu0 %v1516
  %v1518 = vpop.xlane.xlu0 %1517
  %v1519 = vsel %vm187, %v1507, 0.0
  %1520 = vadd.xlane.f32.xlu0 %v1519
  %v1521 = vpop.xlane.xlu0 %1520
  %v1522 = vsel %vm187, %v1508, 0.0
  %1523 = vadd.xlane.f32.xlu0 %v1522
  %v1524 = vpop.xlane.xlu0 %1523
  %v1525 = vsel %vm187, %v1509, 0.0
  %1526 = vadd.xlane.f32.xlu0 %v1525
  %v1527 = vpop.xlane.xlu0 %1526
  %v1528 = vsel %vm187, %v1510, 0.0
  %1529 = vadd.xlane.f32.xlu0 %v1528
  %v1530 = vpop.xlane.xlu0 %1529
  %v1531 = vmul.f32 %v1515, %v206
  %v1532 = vmul.f32 %v1518, %v206
  %v1533 = vmul.f32 %v1521, %v206
  %v1534 = vmul.f32 %v1524, %v206
  %v1535 = vmul.f32 %v1527, %v206
  %v1536 = vmul.f32 %v1530, %v206
  %v1537 = vsub.f32 %v1505, %v1531
  %v1538 = vsub.f32 %v1506, %v1532
  %v1539 = vsub.f32 %v1507, %v1533
  %v1540 = vsub.f32 %v1508, %v1534
  %v1541 = vsub.f32 %v1509, %v1535
  %v1542 = vsub.f32 %v1510, %v1536
  %v1543 = vmul.f32 %v1537, %v1537
  %v1544 = vmul.f32 %v1538, %v1538
  %v1545 = vmul.f32 %v1539, %v1539
  %v1546 = vmul.f32 %v1540, %v1540
  %v1547 = vmul.f32 %v1541, %v1541
  %v1548 = vmul.f32 %v1542, %v1542
  %v1549 = vsel %vm187, %v1543, 0.0
  %1550 = vadd.xlane.f32.xlu0 %v1549
  %v1551 = vpop.xlane.xlu0 %1550
  %v1552 = vsel %vm187, %v1544, 0.0
  %1553 = vadd.xlane.f32.xlu0 %v1552
  %v1554 = vpop.xlane.xlu0 %1553
  %v1555 = vsel %vm187, %v1545, 0.0
  %1556 = vadd.xlane.f32.xlu0 %v1555
  %v1557 = vpop.xlane.xlu0 %1556
  %v1558 = vsel %vm187, %v1546, 0.0
  %1559 = vadd.xlane.f32.xlu0 %v1558
  %v1560 = vpop.xlane.xlu0 %1559
  %v1561 = vsel %vm187, %v1547, 0.0
  %1562 = vadd.xlane.f32.xlu0 %v1561
  %v1563 = vpop.xlane.xlu0 %1562
  %v1564 = vsel %vm187, %v1548, 0.0
  %1565 = vadd.xlane.f32.xlu0 %v1564
  %v1566 = vpop.xlane.xlu0 %1565
  %v1567 = vmul.f32 %v1551, %v206
  %v1568 = vmul.f32 %v1554, %v206
  %v1569 = vmul.f32 %v1557, %v206
  %v1570 = vmul.f32 %v1560, %v206
  %v1571 = vmul.f32 %v1563, %v206
  %v1572 = vmul.f32 %v1566, %v206
  %v1573 = vadd.f32 %v1567, 1e-05
  %v1574 = vadd.f32 %v1568, 1e-05
  %v1575 = vadd.f32 %v1569, 1e-05
  %v1576 = vadd.f32 %v1570, 1e-05
  %v1577 = vadd.f32 %v1571, 1e-05
  %v1578 = vadd.f32 %v1572, 1e-05
  %v1579 = vrsqrt.pop %v1573
  %v1580 = vrsqrt.pop %v1574
  %v1581 = vrsqrt.pop %v1575
  %v1582 = vrsqrt.pop %v1576
  %v1583 = vrsqrt.pop %v1577
  %v1584 = vrsqrt.pop %v1578
  %v1585 = vmul.f32 %v1537, %v1579
  %v1586 = vmul.f32 %v1538, %v1580
  %v1587 = vmul.f32 %v1539, %v1581
  %v1588 = vmul.f32 %v1540, %v1582
  %v1589 = vmul.f32 %v1541, %v1583
  %v1590 = vmul.f32 %v1542, %v1584
  %v1591 = vlaneseq
  %v1592 = vshrl.u32 %v1591, 7
  %v1593 = vsub.s32 0, %v1592
  %v1594 = vrot.slane %v1512, %v1593
  %v1595 = vmul.f32 %v1585, %v1594
  %v1596 = vmul.f32 %v1586, %v1594
  %v1597 = vmul.f32 %v1587, %v1594
  %v1598 = vmul.f32 %v1588, %v1594
  %v1599 = vmul.f32 %v1589, %v1594
  %v1600 = vmul.f32 %v1590, %v1594
  %v1601 = vlaneseq
  %v1602 = vshrl.u32 %v1601, 7
  %v1603 = vsub.s32 1, %v1602
  %v1604 = vrot.slane %v1512, %v1603
  %v1605 = vadd.f32 %v1595, %v1604
  %v1606 = vadd.f32 %v1596, %v1604
  %v1607 = vadd.f32 %v1597, %v1604
  %v1608 = vadd.f32 %v1598, %v1604
  %v1609 = vadd.f32 %v1599, %v1604
  %v1610 = vadd.f32 %v1600, %v1604
  %v1611 = vpack.c.bf16 %v1606, %v1605
  %v1612 = vpack.c.bf16 %v1608, %v1607
  %v1613 = vpack.c.bf16 %v1610, %v1609
  %s1614 = scalar_lea.vmem %s4, 16
  %v1615 = vld [vmem:[%s1614] sm:$0xf]
  %v1616 = vld [vmem:[%s1614 + $0x4] sm:$0xf]
  %v1617 = vld [vmem:[%s1614 + $0x8] sm:$0xf]
  %v1618 = vld [vmem:[%s1614 + $0xc] sm:$0xf]
  %s1619 = scalar_lea.vmem %s5, 1
  %v1620 = vld [vmem:[%s1619] sm:$0x1]
  %v1622 = vlaneseq
  %v1623 = vshrl.u32 %v1622, 7
  %v1624 = vsub.s32 0, %v1623
  %v1625 = vrot.slane %v1620, %v1624
  %v1631 = vunpack.c.l.b16 %v1615
  %v1632 = vunpack.c.l.b16 %v1616
  %v1633 = vunpack.c.l.b16 %v1617
  %v1634 = vunpack.c.l.b16 %v1618
  %v1635 = vpack.c.b16 %v1632, %v1631
  %v1636 = vpack.c.b16 %v1634, %v1633
  %v1640 = vsel %vm187, %v1611, 0
  %v1643 = vsel %vm187, %v1612, 0
  %v1646 = vsel %vm187, %v1613, 0
  %1648 = vmatprep.subr.bf16.mxu0 0
  %1649 = vmatpush1.bf16.msra.mxu0 %v1635
  %1650 = vmatprep.subr.bf16.mxu0 0
  %1651 = vmatpush1.bf16.msra.mxu0 %v1636
  %1652 = vmatprep.subr.bf16.mxu0 0
  %1653 = vmatpush1.bf16.msra.mxu0 0
  %1654 = vmatprep.subr.bf16.mxu0 0
  %1655 = vmatpush1.bf16.msra.mxu0 0
  %1656 = vmatprep.subr.bf16.mxu0 0
  %1657 = vmatpush1.bf16.msra.mxu0 0
  %1658 = vmatprep.subr.bf16.mxu0 0
  %1659 = vmatpush1.bf16.msra.mxu0 0
  %1660 = vmatprep.subr.bf16.mxu0 0
  %1661 = vmatpush1.bf16.msra.mxu0 0
  %1662 = vmatprep.subr.bf16.mxu0 0
  %1663 = vmatpush1.bf16.msra.mxu0 0
  %1664 = vmatprep.subr.bf16.mxu0 0
  %1665 = vmatpush1.bf16.msra.mxu0 0
  %1666 = vmatprep.subr.bf16.mxu0 0
  %1667 = vmatpush1.bf16.msra.mxu0 0
  %1668 = vmatprep.subr.bf16.mxu0 0
  %1669 = vmatpush1.bf16.msra.mxu0 0
  %1670 = vmatprep.subr.bf16.mxu0 0
  %1671 = vmatpush1.bf16.msra.mxu0 0
  %1672 = vmatprep.subr.bf16.mxu0 0
  %1673 = vmatpush1.bf16.msra.mxu0 0
  %1674 = vmatprep.subr.bf16.mxu0 0
  %1675 = vmatpush1.bf16.msra.mxu0 0
  %1676 = vmatprep.subr.bf16.mxu0 0
  %1677 = vmatpush1.bf16.msra.mxu0 0
  %1678 = vmatprep.subr.bf16.mxu0 0
  %1679 = vmatpush1.bf16.msra.mxu0 0
  %1680 = vmatprep.mubr.bf16.mxu0 0
  %1681 = vmatmul.mubr.bf16.gmra.mrb[0].mxu0 %v1640
  %v1682 = vpop.f32.mrb[0].mxu0
  %v1683 = vadd.f32 %v1625, %v1682
  %v1684 = vpop.f32.mrb[0].mxu0
  %v1685 = vpop.f32.mrb[0].mxu0
  %v1686 = vadd.f32 %v1625, %v1685
  %v1687 = vpop.f32.mrb[0].mxu0
  %1688 = vmatprep.mubr.bf16.mxu0 0
  %1689 = vmatmul.mubr.bf16.gmra.mrb[0].mxu0 %v1643
  %v1690 = vpop.f32.mrb[0].mxu0
  %v1691 = vadd.f32 %v1625, %v1690
  %v1692 = vpop.f32.mrb[0].mxu0
  %v1693 = vpop.f32.mrb[0].mxu0
  %v1694 = vadd.f32 %v1625, %v1693
  %v1695 = vpop.f32.mrb[0].mxu0
  %1696 = vmatprep.mubr.bf16.mxu0 0
  %1697 = vmatmul.mubr.bf16.gmra.mrb[0].mxu0 %v1646
  %v1698 = vpop.f32.mrb[0].mxu0
  %v1699 = vadd.f32 %v1625, %v1698
  %v1700 = vpop.f32.mrb[0].mxu0
  %v1701 = vpop.f32.mrb[0].mxu0
  %v1702 = vadd.f32 %v1625, %v1701
  %v1703 = vpop.f32.mrb[0].mxu0
  %1704 = vdwg.mxu0
  %s1705 = scalar_lea.vmem %s6, 16
  %v1706 = vld [vmem:[%s1705] sm:$0xf]
  %v1707 = vld [vmem:[%s1705 + $0x4] sm:$0xf]
  %v1708 = vld [vmem:[%s1705 + $0x8] sm:$0xf]
  %v1709 = vld [vmem:[%s1705 + $0xc] sm:$0xf]
  %s1710 = scalar_lea.vmem %s7, 1
  %v1711 = vld [vmem:[%s1710] sm:$0x1]
  %v1712 = vpack.c.bf16 %v1686, %v1683
  %v1713 = vpack.c.bf16 %v1694, %v1691
  %v1714 = vpack.c.bf16 %v1702, %v1699
  %1718 = vrot.lane.b32.xlu0 %v1712, 96
  %v1719 = vpop.permute.xlu0 %1718
  %1720 = vrot.lane.b32.xlu0 %v1713, 96
  %v1721 = vpop.permute.xlu0 %1720
  %1722 = vrot.lane.b32.xlu0 %v1714, 96
  %v1723 = vpop.permute.xlu0 %1722
  %v1725 = vsel %vm396, %v1712, 0
  %v1728 = vsel %vm396, %v1713, 0
  %v1731 = vsel %vm396, %v1714, 0
  %v1734 = vsel %vm396, %v1719, 0
  %v1737 = vsel %vm396, %v1721, 0
  %v1740 = vsel %vm396, %v1723, 0
  %1742 = vmatprep.subr.bf16.mxu0 0
  %1743 = vmatpush1.bf16.xpose.msra.mxu0 %v1734
  %1744 = vmatprep.subr.bf16.mxu0 0
  %1745 = vmatpush1.bf16.xpose.msra.mxu0 %v1737
  %1746 = vmatprep.subr.bf16.mxu0 0
  %1747 = vmatpush1.bf16.xpose.msra.mxu0 %v1740
  %1748 = vmatprep.subr.bf16.mxu0 0
  %1749 = vmatpush1.bf16.xpose.msra.mxu0 0
  %1750 = vmatprep.subr.bf16.mxu0 0
  %1751 = vmatpush1.bf16.xpose.msra.mxu0 0
  %1752 = vmatprep.subr.bf16.mxu0 0
  %1753 = vmatpush1.bf16.xpose.msra.mxu0 0
  %1754 = vmatprep.subr.bf16.mxu0 0
  %1755 = vmatpush1.bf16.xpose.msra.mxu0 0
  %1756 = vmatprep.subr.bf16.mxu0 0
  %1757 = vmatpush1.bf16.xpose.msra.mxu0 0
  %1758 = vmatprep.subr.bf16.mxu0 0
  %1759 = vmatpush1.bf16.xpose.msra.mxu0 0
  %1760 = vmatprep.subr.bf16.mxu0 0
  %1761 = vmatpush1.bf16.xpose.msra.mxu0 0
  %1762 = vmatprep.subr.bf16.mxu0 0
  %1763 = vmatpush1.bf16.xpose.msra.mxu0 0
  %1764 = vmatprep.subr.bf16.mxu0 0
  %1765 = vmatpush1.bf16.xpose.msra.mxu0 0
  %1766 = vmatprep.subr.bf16.mxu0 0
  %1767 = vmatpush1.bf16.xpose.msra.mxu0 0
  %1768 = vmatprep.subr.bf16.mxu0 0
  %1769 = vmatpush1.bf16.xpose.msra.mxu0 0
  %1770 = vmatprep.subr.bf16.mxu0 0
  %1771 = vmatpush1.bf16.xpose.msra.mxu0 0
  %1772 = vmatprep.subr.bf16.mxu0 0
  %1773 = vmatpush1.bf16.xpose.msra.mxu0 0
  %1774 = vmatprep.mubr.bf16.mxu0 0
  %1775 = vmatmul.mubr.bf16.gmra.mrb[0].mxu0 %v1725
  %v1776 = vpop.f32.mrb[0].mxu0
  %v1777 = vadd.f32 %v180, %v1776
  %v1778 = vpop.f32.mrb[0].mxu0
  %v1779 = vpop.f32.mrb[0].mxu0
  %v1780 = vadd.f32 %v181, %v1779
  %v1781 = vpop.f32.mrb[0].mxu0
  %1782 = vmatprep.mubr.bf16.mxu0 0
  %1783 = vmatmul.mubr.bf16.gmra.mrb[0].mxu0 %v1728
  %v1784 = vpop.f32.mrb[0].mxu0
  %v1785 = vadd.f32 %v182, %v1784
  %v1786 = vpop.f32.mrb[0].mxu0
  %v1787 = vpop.f32.mrb[0].mxu0
  %v1788 = vadd.f32 %v183, %v1787
  %v1789 = vpop.f32.mrb[0].mxu0
  %1790 = vmatprep.mubr.bf16.mxu0 0
  %1791 = vmatmul.mubr.bf16.gmra.mrb[0].mxu0 %v1731
  %v1792 = vpop.f32.mrb[0].mxu0
  %v1793 = vadd.f32 %v184, %v1792
  %v1794 = vpop.f32.mrb[0].mxu0
  %v1795 = vpop.f32.mrb[0].mxu0
  %v1796 = vadd.f32 %v185, %v1795
  %v1797 = vpop.f32.mrb[0].mxu0
  %1798 = vdwg.mxu0
  %v1799 = vsel %vm472, %v1777, -inf
  %1800 = vmax.xlane.f32.xlu0 %v1799
  %v1801 = vpop.xlane.xlu0 %1800
  %v1802 = vsel %vm472, %v1780, -inf
  %1803 = vmax.xlane.f32.xlu0 %v1802
  %v1804 = vpop.xlane.xlu0 %1803
  %v1805 = vsel %vm472, %v1785, -inf
  %1806 = vmax.xlane.f32.xlu0 %v1805
  %v1807 = vpop.xlane.xlu0 %1806
  %v1808 = vsel %vm472, %v1788, -inf
  %1809 = vmax.xlane.f32.xlu0 %v1808
  %v1810 = vpop.xlane.xlu0 %1809
  %v1811 = vsel %vm472, %v1793, -inf
  %1812 = vmax.xlane.f32.xlu0 %v1811
  %v1813 = vpop.xlane.xlu0 %1812
  %v1814 = vsel %vm472, %v1796, -inf
  %1815 = vmax.xlane.f32.xlu0 %v1814
  %v1816 = vpop.xlane.xlu0 %1815
  %v1817 = vsub.f32 %v1777, %v1801
  %v1818 = vsub.f32 %v1780, %v1804
  %v1819 = vsub.f32 %v1785, %v1807
  %v1820 = vsub.f32 %v1788, %v1810
  %v1821 = vsub.f32 %v1793, %v1813
  %v1822 = vsub.f32 %v1796, %v1816
  %v1823 = vmul.f32 %v1817, 1.442695
  %v1824 = vpow.pop %v1823
  %v1825 = vmul.f32 %v1818, 1.442695
  %v1826 = vpow.pop %v1825
  %v1827 = vmul.f32 %v1819, 1.442695
  %v1828 = vpow.pop %v1827
  %v1829 = vmul.f32 %v1820, 1.442695
  %v1830 = vpow.pop %v1829
  %v1831 = vmul.f32 %v1821, 1.442695
  %v1832 = vpow.pop %v1831
  %v1833 = vmul.f32 %v1822, 1.442695
  %v1834 = vpow.pop %v1833
  %v1835 = vsel %vm472, %v1824, 0.0
  %1836 = vadd.xlane.f32.xlu0 %v1835
  %v1837 = vpop.xlane.xlu0 %1836
  %v1838 = vsel %vm472, %v1826, 0.0
  %1839 = vadd.xlane.f32.xlu0 %v1838
  %v1840 = vpop.xlane.xlu0 %1839
  %v1841 = vsel %vm472, %v1828, 0.0
  %1842 = vadd.xlane.f32.xlu0 %v1841
  %v1843 = vpop.xlane.xlu0 %1842
  %v1844 = vsel %vm472, %v1830, 0.0
  %1845 = vadd.xlane.f32.xlu0 %v1844
  %v1846 = vpop.xlane.xlu0 %1845
  %v1847 = vsel %vm472, %v1832, 0.0
  %1848 = vadd.xlane.f32.xlu0 %v1847
  %v1849 = vpop.xlane.xlu0 %1848
  %v1850 = vsel %vm472, %v1834, 0.0
  %1851 = vadd.xlane.f32.xlu0 %v1850
  %v1852 = vpop.xlane.xlu0 %1851
  %v1853 = vrcp.pop %v1837
  %v1854 = vmul.f32 %v1824, %v1853
  %v1855 = vrcp.pop %v1840
  %v1856 = vmul.f32 %v1826, %v1855
  %v1857 = vrcp.pop %v1843
  %v1858 = vmul.f32 %v1828, %v1857
  %v1859 = vrcp.pop %v1846
  %v1860 = vmul.f32 %v1830, %v1859
  %v1861 = vrcp.pop %v1849
  %v1862 = vmul.f32 %v1832, %v1861
  %v1863 = vrcp.pop %v1852
  %v1864 = vmul.f32 %v1834, %v1863
  %v1865 = vpack.c.bf16 %v1856, %v1854
  %v1866 = vpack.c.bf16 %v1860, %v1858
  %v1867 = vpack.c.bf16 %v1864, %v1862
  %1868 = vrot.lane.b32.xlu0 %v1712, 64
  %v1869 = vpop.permute.xlu0 %1868
  %1870 = vrot.lane.b32.xlu0 %v1713, 64
  %v1871 = vpop.permute.xlu0 %1870
  %1872 = vrot.lane.b32.xlu0 %v1714, 64
  %v1873 = vpop.permute.xlu0 %1872
  %v1878 = vsel %vm472, %v1865, 0
  %v1881 = vsel %vm472, %v1866, 0
  %v1884 = vsel %vm472, %v1867, 0
  %1886 = vmatprep.subr.bf16.mxu0 0
  %1887 = vmatpush1.bf16.msra.mxu0 %v1869
  %1888 = vmatprep.subr.bf16.mxu0 0
  %1889 = vmatpush1.bf16.msra.mxu0 %v1871
  %1890 = vmatprep.subr.bf16.mxu0 0
  %1891 = vmatpush1.bf16.msra.mxu0 %v1873
  %1892 = vmatprep.subr.bf16.mxu0 0
  %1893 = vmatpush1.bf16.msra.mxu0 0
  %1894 = vmatprep.subr.bf16.mxu0 0
  %1895 = vmatpush1.bf16.msra.mxu0 0
  %1896 = vmatprep.subr.bf16.mxu0 0
  %1897 = vmatpush1.bf16.msra.mxu0 0
  %1898 = vmatprep.subr.bf16.mxu0 0
  %1899 = vmatpush1.bf16.msra.mxu0 0
  %1900 = vmatprep.subr.bf16.mxu0 0
  %1901 = vmatpush1.bf16.msra.mxu0 0
  %1902 = vmatprep.subr.bf16.mxu0 0
  %1903 = vmatpush1.bf16.msra.mxu0 0
  %1904 = vmatprep.subr.bf16.mxu0 0
  %1905 = vmatpush1.bf16.msra.mxu0 0
  %1906 = vmatprep.subr.bf16.mxu0 0
  %1907 = vmatpush1.bf16.msra.mxu0 0
  %1908 = vmatprep.subr.bf16.mxu0 0
  %1909 = vmatpush1.bf16.msra.mxu0 0
  %1910 = vmatprep.subr.bf16.mxu0 0
  %1911 = vmatpush1.bf16.msra.mxu0 0
  %1912 = vmatprep.subr.bf16.mxu0 0
  %1913 = vmatpush1.bf16.msra.mxu0 0
  %1914 = vmatprep.subr.bf16.mxu0 0
  %1915 = vmatpush1.bf16.msra.mxu0 0
  %1916 = vmatprep.subr.bf16.mxu0 0
  %1917 = vmatpush1.bf16.msra.mxu0 0
  %1918 = vmatprep.mubr.bf16.mxu0 0
  %1919 = vmatmul.mubr.bf16.gmra.mrb[0].mxu0 %v1878
  %v1920 = vpop.f32.mrb[0].mxu0
  %v1921 = vadd.f32 0.0, %v1920
  %v1922 = vpop.f32.mrb[0].mxu0
  %v1923 = vpop.f32.mrb[0].mxu0
  %v1924 = vadd.f32 0.0, %v1923
  %v1925 = vpop.f32.mrb[0].mxu0
  %1926 = vmatprep.mubr.bf16.mxu0 0
  %1927 = vmatmul.mubr.bf16.gmra.mrb[0].mxu0 %v1881
  %v1928 = vpop.f32.mrb[0].mxu0
  %v1929 = vadd.f32 0.0, %v1928
  %v1930 = vpop.f32.mrb[0].mxu0
  %v1931 = vpop.f32.mrb[0].mxu0
  %v1932 = vadd.f32 0.0, %v1931
  %v1933 = vpop.f32.mrb[0].mxu0
  %1934 = vmatprep.mubr.bf16.mxu0 0
  %1935 = vmatmul.mubr.bf16.gmra.mrb[0].mxu0 %v1884
  %v1936 = vpop.f32.mrb[0].mxu0
  %v1937 = vadd.f32 0.0, %v1936
  %v1938 = vpop.f32.mrb[0].mxu0
  %v1939 = vpop.f32.mrb[0].mxu0
  %v1940 = vadd.f32 0.0, %v1939
  %v1941 = vpop.f32.mrb[0].mxu0
  %1942 = vdwg.mxu0
  %v1943 = vpack.c.bf16 %v1924, %v1921
  %v1944 = vpack.c.bf16 %v1932, %v1929
  %v1945 = vpack.c.bf16 %v1940, %v1937
  %v1948 = vunpack.c.l.b16 %v1706
  %v1949 = vunpack.c.l.b16 %v1707
  %v1950 = vpack.c.b16 %v1949, %v1948
  %v1953 = vsel %vm396, %v1943, 0
  %v1956 = vsel %vm396, %v1944, 0
  %v1959 = vsel %vm396, %v1945, 0
  %1961 = vmatprep.subr.bf16.mxu0 0
  %1962 = vmatpush1.bf16.msra.mxu0 %v1950
  %1963 = vmatprep.subr.bf16.mxu0 0
  %1964 = vmatpush1.bf16.msra.mxu0 0
  %1965 = vmatprep.subr.bf16.mxu0 0
  %1966 = vmatpush1.bf16.msra.mxu0 0
  %1967 = vmatprep.subr.bf16.mxu0 0
  %1968 = vmatpush1.bf16.msra.mxu0 0
  %1969 = vmatprep.subr.bf16.mxu0 0
  %1970 = vmatpush1.bf16.msra.mxu0 0
  %1971 = vmatprep.subr.bf16.mxu0 0
  %1972 = vmatpush1.bf16.msra.mxu0 0
  %1973 = vmatprep.subr.bf16.mxu0 0
  %1974 = vmatpush1.bf16.msra.mxu0 0
  %1975 = vmatprep.subr.bf16.mxu0 0
  %1976 = vmatpush1.bf16.msra.mxu0 0
  %1977 = vmatprep.subr.bf16.mxu0 0
  %1978 = vmatpush1.bf16.msra.mxu0 0
  %1979 = vmatprep.subr.bf16.mxu0 0
  %1980 = vmatpush1.bf16.msra.mxu0 0
  %1981 = vmatprep.subr.bf16.mxu0 0
  %1982 = vmatpush1.bf16.msra.mxu0 0
  %1983 = vmatprep.subr.bf16.mxu0 0
  %1984 = vmatpush1.bf16.msra.mxu0 0
  %1985 = vmatprep.subr.bf16.mxu0 0
  %1986 = vmatpush1.bf16.msra.mxu0 0
  %1987 = vmatprep.subr.bf16.mxu0 0
  %1988 = vmatpush1.bf16.msra.mxu0 0
  %1989 = vmatprep.subr.bf16.mxu0 0
  %1990 = vmatpush1.bf16.msra.mxu0 0
  %1991 = vmatprep.subr.bf16.mxu0 0
  %1992 = vmatpush1.bf16.msra.mxu0 0
  %1993 = vmatprep.mubr.bf16.mxu0 0
  %1994 = vmatmul.mubr.bf16.gmra.mrb[0].mxu0 %v1953
  %v1995 = vpop.f32.mrb[0].mxu0
  %v1996 = vadd.f32 0.0, %v1995
  %v1997 = vpop.f32.mrb[0].mxu0
  %v1998 = vpop.f32.mrb[0].mxu0
  %v1999 = vadd.f32 0.0, %v1998
  %v2000 = vpop.f32.mrb[0].mxu0
  %2001 = vmatprep.mubr.bf16.mxu0 0
  %2002 = vmatmul.mubr.bf16.gmra.mrb[0].mxu0 %v1956
  %v2003 = vpop.f32.mrb[0].mxu0
  %v2004 = vadd.f32 0.0, %v2003
  %v2005 = vpop.f32.mrb[0].mxu0
  %v2006 = vpop.f32.mrb[0].mxu0
  %v2007 = vadd.f32 0.0, %v2006
  %v2008 = vpop.f32.mrb[0].mxu0
  %2009 = vmatprep.mubr.bf16.mxu0 0
  %2010 = vmatmul.mubr.bf16.gmra.mrb[0].mxu0 %v1959
  %v2011 = vpop.f32.mrb[0].mxu0
  %v2012 = vadd.f32 0.0, %v2011
  %v2013 = vpop.f32.mrb[0].mxu0
  %v2014 = vpop.f32.mrb[0].mxu0
  %v2015 = vadd.f32 0.0, %v2014
  %v2016 = vpop.f32.mrb[0].mxu0
  %2017 = vdwg.mxu0
  %v2019 = vlaneseq
  %v2020 = vshrl.u32 %v2019, 7
  %v2021 = vsub.s32 0, %v2020
  %v2022 = vrot.slane %v1711, %v2021
  %v2024 = vadd.f32 %v2022, %v1996
  %v2025 = vadd.f32 %v2022, %v1999
  %v2026 = vadd.f32 %v2022, %v2004
  %v2027 = vadd.f32 %v2022, %v2007
  %v2028 = vadd.f32 %v2022, %v2012
  %v2029 = vadd.f32 %v2022, %v2015
  %2030 = vrot.lane.b32.xlu0 %v1712, 112
  %v2031 = vpop.permute.xlu0 %2030
  %2032 = vrot.lane.b32.xlu0 %v1713, 112
  %v2033 = vpop.permute.xlu0 %2032
  %2034 = vrot.lane.b32.xlu0 %v1714, 112
  %v2035 = vpop.permute.xlu0 %2034
  %2036 = vrot.lane.b32.xlu0 %v1712, 80
  %v2037 = vpop.permute.xlu0 %2036
  %2038 = vrot.lane.b32.xlu0 %v1713, 80
  %v2039 = vpop.permute.xlu0 %2038
  %2040 = vrot.lane.b32.xlu0 %v1714, 80
  %v2041 = vpop.permute.xlu0 %2040
  %v2043 = vsel %vm396, %v2031, 0
  %v2046 = vsel %vm396, %v2033, 0
  %v2049 = vsel %vm396, %v2035, 0
  %v2052 = vsel %vm396, %v2037, 0
  %v2055 = vsel %vm396, %v2039, 0
  %v2058 = vsel %vm396, %v2041, 0
  %2060 = vmatprep.subr.bf16.mxu0 0
  %2061 = vmatpush1.bf16.xpose.msra.mxu0 %v2052
  %2062 = vmatprep.subr.bf16.mxu0 0
  %2063 = vmatpush1.bf16.xpose.msra.mxu0 %v2055
  %2064 = vmatprep.subr.bf16.mxu0 0
  %2065 = vmatpush1.bf16.xpose.msra.mxu0 %v2058
  %2066 = vmatprep.subr.bf16.mxu0 0
  %2067 = vmatpush1.bf16.xpose.msra.mxu0 0
  %2068 = vmatprep.subr.bf16.mxu0 0
  %2069 = vmatpush1.bf16.xpose.msra.mxu0 0
  %2070 = vmatprep.subr.bf16.mxu0 0
  %2071 = vmatpush1.bf16.xpose.msra.mxu0 0
  %2072 = vmatprep.subr.bf16.mxu0 0
  %2073 = vmatpush1.bf16.xpose.msra.mxu0 0
  %2074 = vmatprep.subr.bf16.mxu0 0
  %2075 = vmatpush1.bf16.xpose.msra.mxu0 0
  %2076 = vmatprep.subr.bf16.mxu0 0
  %2077 = vmatpush1.bf16.xpose.msra.mxu0 0
  %2078 = vmatprep.subr.bf16.mxu0 0
  %2079 = vmatpush1.bf16.xpose.msra.mxu0 0
  %2080 = vmatprep.subr.bf16.mxu0 0
  %2081 = vmatpush1.bf16.xpose.msra.mxu0 0
  %2082 = vmatprep.subr.bf16.mxu0 0
  %2083 = vmatpush1.bf16.xpose.msra.mxu0 0
  %2084 = vmatprep.subr.bf16.mxu0 0
  %2085 = vmatpush1.bf16.xpose.msra.mxu0 0
  %2086 = vmatprep.subr.bf16.mxu0 0
  %2087 = vmatpush1.bf16.xpose.msra.mxu0 0
  %2088 = vmatprep.subr.bf16.mxu0 0
  %2089 = vmatpush1.bf16.xpose.msra.mxu0 0
  %2090 = vmatprep.subr.bf16.mxu0 0
  %2091 = vmatpush1.bf16.xpose.msra.mxu0 0
  %2092 = vmatprep.mubr.bf16.mxu0 0
  %2093 = vmatmul.mubr.bf16.gmra.mrb[0].mxu0 %v2043
  %v2094 = vpop.f32.mrb[0].mxu0
  %v2095 = vadd.f32 %v180, %v2094
  %v2096 = vpop.f32.mrb[0].mxu0
  %v2097 = vpop.f32.mrb[0].mxu0
  %v2098 = vadd.f32 %v181, %v2097
  %v2099 = vpop.f32.mrb[0].mxu0
  %2100 = vmatprep.mubr.bf16.mxu0 0
  %2101 = vmatmul.mubr.bf16.gmra.mrb[0].mxu0 %v2046
  %v2102 = vpop.f32.mrb[0].mxu0
  %v2103 = vadd.f32 %v182, %v2102
  %v2104 = vpop.f32.mrb[0].mxu0
  %v2105 = vpop.f32.mrb[0].mxu0
  %v2106 = vadd.f32 %v183, %v2105
  %v2107 = vpop.f32.mrb[0].mxu0
  %2108 = vmatprep.mubr.bf16.mxu0 0
  %2109 = vmatmul.mubr.bf16.gmra.mrb[0].mxu0 %v2049
  %v2110 = vpop.f32.mrb[0].mxu0
  %v2111 = vadd.f32 %v184, %v2110
  %v2112 = vpop.f32.mrb[0].mxu0
  %v2113 = vpop.f32.mrb[0].mxu0
  %v2114 = vadd.f32 %v185, %v2113
  %v2115 = vpop.f32.mrb[0].mxu0
  %2116 = vdwg.mxu0
  %v2117 = vsel %vm472, %v2095, -inf
  %2118 = vmax.xlane.f32.xlu0 %v2117
  %v2119 = vpop.xlane.xlu0 %2118
  %v2120 = vsel %vm472, %v2098, -inf
  %2121 = vmax.xlane.f32.xlu0 %v2120
  %v2122 = vpop.xlane.xlu0 %2121
  %v2123 = vsel %vm472, %v2103, -inf
  %2124 = vmax.xlane.f32.xlu0 %v2123
  %v2125 = vpop.xlane.xlu0 %2124
  %v2126 = vsel %vm472, %v2106, -inf
  %2127 = vmax.xlane.f32.xlu0 %v2126
  %v2128 = vpop.xlane.xlu0 %2127
  %v2129 = vsel %vm472, %v2111, -inf
  %2130 = vmax.xlane.f32.xlu0 %v2129
  %v2131 = vpop.xlane.xlu0 %2130
  %v2132 = vsel %vm472, %v2114, -inf
  %2133 = vmax.xlane.f32.xlu0 %v2132
  %v2134 = vpop.xlane.xlu0 %2133
  %v2135 = vsub.f32 %v2095, %v2119
  %v2136 = vsub.f32 %v2098, %v2122
  %v2137 = vsub.f32 %v2103, %v2125
  %v2138 = vsub.f32 %v2106, %v2128
  %v2139 = vsub.f32 %v2111, %v2131
  %v2140 = vsub.f32 %v2114, %v2134
  %v2141 = vmul.f32 %v2135, 1.442695
  %v2142 = vpow.pop %v2141
  %v2143 = vmul.f32 %v2136, 1.442695
  %v2144 = vpow.pop %v2143
  %v2145 = vmul.f32 %v2137, 1.442695
  %v2146 = vpow.pop %v2145
  %v2147 = vmul.f32 %v2138, 1.442695
  %v2148 = vpow.pop %v2147
  %v2149 = vmul.f32 %v2139, 1.442695
  %v2150 = vpow.pop %v2149
  %v2151 = vmul.f32 %v2140, 1.442695
  %v2152 = vpow.pop %v2151
  %v2153 = vsel %vm472, %v2142, 0.0
  %2154 = vadd.xlane.f32.xlu0 %v2153
  %v2155 = vpop.xlane.xlu0 %2154
  %v2156 = vsel %vm472, %v2144, 0.0
  %2157 = vadd.xlane.f32.xlu0 %v2156
  %v2158 = vpop.xlane.xlu0 %2157
  %v2159 = vsel %vm472, %v2146, 0.0
  %2160 = vadd.xlane.f32.xlu0 %v2159
  %v2161 = vpop.xlane.xlu0 %2160
  %v2162 = vsel %vm472, %v2148, 0.0
  %2163 = vadd.xlane.f32.xlu0 %v2162
  %v2164 = vpop.xlane.xlu0 %2163
  %v2165 = vsel %vm472, %v2150, 0.0
  %2166 = vadd.xlane.f32.xlu0 %v2165
  %v2167 = vpop.xlane.xlu0 %2166
  %v2168 = vsel %vm472, %v2152, 0.0
  %2169 = vadd.xlane.f32.xlu0 %v2168
  %v2170 = vpop.xlane.xlu0 %2169
  %v2171 = vrcp.pop %v2155
  %v2172 = vmul.f32 %v2142, %v2171
  %v2173 = vrcp.pop %v2158
  %v2174 = vmul.f32 %v2144, %v2173
  %v2175 = vrcp.pop %v2161
  %v2176 = vmul.f32 %v2146, %v2175
  %v2177 = vrcp.pop %v2164
  %v2178 = vmul.f32 %v2148, %v2177
  %v2179 = vrcp.pop %v2167
  %v2180 = vmul.f32 %v2150, %v2179
  %v2181 = vrcp.pop %v2170
  %v2182 = vmul.f32 %v2152, %v2181
  %v2183 = vpack.c.bf16 %v2174, %v2172
  %v2184 = vpack.c.bf16 %v2178, %v2176
  %v2185 = vpack.c.bf16 %v2182, %v2180
  %2186 = vrot.lane.b32.xlu0 %v1712, 48
  %v2187 = vpop.permute.xlu0 %2186
  %2188 = vrot.lane.b32.xlu0 %v1713, 48
  %v2189 = vpop.permute.xlu0 %2188
  %2190 = vrot.lane.b32.xlu0 %v1714, 48
  %v2191 = vpop.permute.xlu0 %2190
  %v2196 = vsel %vm472, %v2183, 0
  %v2199 = vsel %vm472, %v2184, 0
  %v2202 = vsel %vm472, %v2185, 0
  %2204 = vmatprep.subr.bf16.mxu0 0
  %2205 = vmatpush1.bf16.msra.mxu0 %v2187
  %2206 = vmatprep.subr.bf16.mxu0 0
  %2207 = vmatpush1.bf16.msra.mxu0 %v2189
  %2208 = vmatprep.subr.bf16.mxu0 0
  %2209 = vmatpush1.bf16.msra.mxu0 %v2191
  %2210 = vmatprep.subr.bf16.mxu0 0
  %2211 = vmatpush1.bf16.msra.mxu0 0
  %2212 = vmatprep.subr.bf16.mxu0 0
  %2213 = vmatpush1.bf16.msra.mxu0 0
  %2214 = vmatprep.subr.bf16.mxu0 0
  %2215 = vmatpush1.bf16.msra.mxu0 0
  %2216 = vmatprep.subr.bf16.mxu0 0
  %2217 = vmatpush1.bf16.msra.mxu0 0
  %2218 = vmatprep.subr.bf16.mxu0 0
  %2219 = vmatpush1.bf16.msra.mxu0 0
  %2220 = vmatprep.subr.bf16.mxu0 0
  %2221 = vmatpush1.bf16.msra.mxu0 0
  %2222 = vmatprep.subr.bf16.mxu0 0
  %2223 = vmatpush1.bf16.msra.mxu0 0
  %2224 = vmatprep.subr.bf16.mxu0 0
  %2225 = vmatpush1.bf16.msra.mxu0 0
  %2226 = vmatprep.subr.bf16.mxu0 0
  %2227 = vmatpush1.bf16.msra.mxu0 0
  %2228 = vmatprep.subr.bf16.mxu0 0
  %2229 = vmatpush1.bf16.msra.mxu0 0
  %2230 = vmatprep.subr.bf16.mxu0 0
  %2231 = vmatpush1.bf16.msra.mxu0 0
  %2232 = vmatprep.subr.bf16.mxu0 0
  %2233 = vmatpush1.bf16.msra.mxu0 0
  %2234 = vmatprep.subr.bf16.mxu0 0
  %2235 = vmatpush1.bf16.msra.mxu0 0
  %2236 = vmatprep.mubr.bf16.mxu0 0
  %2237 = vmatmul.mubr.bf16.gmra.mrb[0].mxu0 %v2196
  %v2238 = vpop.f32.mrb[0].mxu0
  %v2239 = vadd.f32 0.0, %v2238
  %v2240 = vpop.f32.mrb[0].mxu0
  %v2241 = vpop.f32.mrb[0].mxu0
  %v2242 = vadd.f32 0.0, %v2241
  %v2243 = vpop.f32.mrb[0].mxu0
  %2244 = vmatprep.mubr.bf16.mxu0 0
  %2245 = vmatmul.mubr.bf16.gmra.mrb[0].mxu0 %v2199
  %v2246 = vpop.f32.mrb[0].mxu0
  %v2247 = vadd.f32 0.0, %v2246
  %v2248 = vpop.f32.mrb[0].mxu0
  %v2249 = vpop.f32.mrb[0].mxu0
  %v2250 = vadd.f32 0.0, %v2249
  %v2251 = vpop.f32.mrb[0].mxu0
  %2252 = vmatprep.mubr.bf16.mxu0 0
  %2253 = vmatmul.mubr.bf16.gmra.mrb[0].mxu0 %v2202
  %v2254 = vpop.f32.mrb[0].mxu0
  %v2255 = vadd.f32 0.0, %v2254
  %v2256 = vpop.f32.mrb[0].mxu0
  %v2257 = vpop.f32.mrb[0].mxu0
  %v2258 = vadd.f32 0.0, %v2257
  %v2259 = vpop.f32.mrb[0].mxu0
  %2260 = vdwg.mxu0
  %v2261 = vpack.c.bf16 %v2242, %v2239
  %v2262 = vpack.c.bf16 %v2250, %v2247
  %v2263 = vpack.c.bf16 %v2258, %v2255
  %v2266 = vunpack.c.l.b16 %v1708
  %v2267 = vunpack.c.l.b16 %v1709
  %v2268 = vpack.c.b16 %v2267, %v2266
  %v2271 = vsel %vm396, %v2261, 0
  %v2274 = vsel %vm396, %v2262, 0
  %v2277 = vsel %vm396, %v2263, 0
  %2279 = vmatprep.subr.bf16.mxu0 0
  %2280 = vmatpush1.bf16.msra.mxu0 %v2268
  %2281 = vmatprep.subr.bf16.mxu0 0
  %2282 = vmatpush1.bf16.msra.mxu0 0
  %2283 = vmatprep.subr.bf16.mxu0 0
  %2284 = vmatpush1.bf16.msra.mxu0 0
  %2285 = vmatprep.subr.bf16.mxu0 0
  %2286 = vmatpush1.bf16.msra.mxu0 0
  %2287 = vmatprep.subr.bf16.mxu0 0
  %2288 = vmatpush1.bf16.msra.mxu0 0
  %2289 = vmatprep.subr.bf16.mxu0 0
  %2290 = vmatpush1.bf16.msra.mxu0 0
  %2291 = vmatprep.subr.bf16.mxu0 0
  %2292 = vmatpush1.bf16.msra.mxu0 0
  %2293 = vmatprep.subr.bf16.mxu0 0
  %2294 = vmatpush1.bf16.msra.mxu0 0
  %2295 = vmatprep.subr.bf16.mxu0 0
  %2296 = vmatpush1.bf16.msra.mxu0 0
  %2297 = vmatprep.subr.bf16.mxu0 0
  %2298 = vmatpush1.bf16.msra.mxu0 0
  %2299 = vmatprep.subr.bf16.mxu0 0
  %2300 = vmatpush1.bf16.msra.mxu0 0
  %2301 = vmatprep.subr.bf16.mxu0 0
  %2302 = vmatpush1.bf16.msra.mxu0 0
  %2303 = vmatprep.subr.bf16.mxu0 0
  %2304 = vmatpush1.bf16.msra.mxu0 0
  %2305 = vmatprep.subr.bf16.mxu0 0
  %2306 = vmatpush1.bf16.msra.mxu0 0
  %2307 = vmatprep.subr.bf16.mxu0 0
  %2308 = vmatpush1.bf16.msra.mxu0 0
  %2309 = vmatprep.subr.bf16.mxu0 0
  %2310 = vmatpush1.bf16.msra.mxu0 0
  %2311 = vmatprep.mubr.bf16.mxu0 0
  %2312 = vmatmul.mubr.bf16.gmra.mrb[0].mxu0 %v2271
  %v2313 = vpop.f32.mrb[0].mxu0
  %v2314 = vadd.f32 0.0, %v2313
  %v2315 = vpop.f32.mrb[0].mxu0
  %v2316 = vpop.f32.mrb[0].mxu0
  %v2317 = vadd.f32 0.0, %v2316
  %v2318 = vpop.f32.mrb[0].mxu0
  %2319 = vmatprep.mubr.bf16.mxu0 0
  %2320 = vmatmul.mubr.bf16.gmra.mrb[0].mxu0 %v2274
  %v2321 = vpop.f32.mrb[0].mxu0
  %v2322 = vadd.f32 0.0, %v2321
  %v2323 = vpop.f32.mrb[0].mxu0
  %v2324 = vpop.f32.mrb[0].mxu0
  %v2325 = vadd.f32 0.0, %v2324
  %v2326 = vpop.f32.mrb[0].mxu0
  %2327 = vmatprep.mubr.bf16.mxu0 0
  %2328 = vmatmul.mubr.bf16.gmra.mrb[0].mxu0 %v2277
  %v2329 = vpop.f32.mrb[0].mxu0
  %v2330 = vadd.f32 0.0, %v2329
  %v2331 = vpop.f32.mrb[0].mxu0
  %v2332 = vpop.f32.mrb[0].mxu0
  %v2333 = vadd.f32 0.0, %v2332
  %v2334 = vpop.f32.mrb[0].mxu0
  %2335 = vdwg.mxu0
  %v2336 = vadd.f32 %v2024, %v2314
  %v2337 = vadd.f32 %v2025, %v2317
  %v2338 = vadd.f32 %v2026, %v2322
  %v2339 = vadd.f32 %v2027, %v2325
  %v2340 = vadd.f32 %v2028, %v2330
  %v2341 = vadd.f32 %v2029, %v2333
  %v2342 = vadd.f32 %v1505, %v2336
  %v2343 = vadd.f32 %v1506, %v2337
  %v2344 = vadd.f32 %v1507, %v2338
  %v2345 = vadd.f32 %v1508, %v2339
  %v2346 = vadd.f32 %v1509, %v2340
  %v2347 = vadd.f32 %v1510, %v2341
  %v2348 = vsel %vm187, %v2342, 0.0
  %2349 = vadd.xlane.f32.xlu0 %v2348
  %v2350 = vpop.xlane.xlu0 %2349
  %v2351 = vsel %vm187, %v2343, 0.0
  %2352 = vadd.xlane.f32.xlu0 %v2351
  %v2353 = vpop.xlane.xlu0 %2352
  %v2354 = vsel %vm187, %v2344, 0.0
  %2355 = vadd.xlane.f32.xlu0 %v2354
  %v2356 = vpop.xlane.xlu0 %2355
  %v2357 = vsel %vm187, %v2345, 0.0
  %2358 = vadd.xlane.f32.xlu0 %v2357
  %v2359 = vpop.xlane.xlu0 %2358
  %v2360 = vsel %vm187, %v2346, 0.0
  %2361 = vadd.xlane.f32.xlu0 %v2360
  %v2362 = vpop.xlane.xlu0 %2361
  %v2363 = vsel %vm187, %v2347, 0.0
  %2364 = vadd.xlane.f32.xlu0 %v2363
  %v2365 = vpop.xlane.xlu0 %2364
  %v2366 = vmul.f32 %v2350, %v206
  %v2367 = vmul.f32 %v2353, %v206
  %v2368 = vmul.f32 %v2356, %v206
  %v2369 = vmul.f32 %v2359, %v206
  %v2370 = vmul.f32 %v2362, %v206
  %v2371 = vmul.f32 %v2365, %v206
  %v2372 = vsub.f32 %v2342, %v2366
  %v2373 = vsub.f32 %v2343, %v2367
  %v2374 = vsub.f32 %v2344, %v2368
  %v2375 = vsub.f32 %v2345, %v2369
  %v2376 = vsub.f32 %v2346, %v2370
  %v2377 = vsub.f32 %v2347, %v2371
  %v2378 = vmul.f32 %v2372, %v2372
  %v2379 = vmul.f32 %v2373, %v2373
  %v2380 = vmul.f32 %v2374, %v2374
  %v2381 = vmul.f32 %v2375, %v2375
  %v2382 = vmul.f32 %v2376, %v2376
  %v2383 = vmul.f32 %v2377, %v2377
  %v2384 = vsel %vm187, %v2378, 0.0
  %2385 = vadd.xlane.f32.xlu0 %v2384
  %v2386 = vpop.xlane.xlu0 %2385
  %v2387 = vsel %vm187, %v2379, 0.0
  %2388 = vadd.xlane.f32.xlu0 %v2387
  %v2389 = vpop.xlane.xlu0 %2388
  %v2390 = vsel %vm187, %v2380, 0.0
  %2391 = vadd.xlane.f32.xlu0 %v2390
  %v2392 = vpop.xlane.xlu0 %2391
  %v2393 = vsel %vm187, %v2381, 0.0
  %2394 = vadd.xlane.f32.xlu0 %v2393
  %v2395 = vpop.xlane.xlu0 %2394
  %v2396 = vsel %vm187, %v2382, 0.0
  %2397 = vadd.xlane.f32.xlu0 %v2396
  %v2398 = vpop.xlane.xlu0 %2397
  %v2399 = vsel %vm187, %v2383, 0.0
  %2400 = vadd.xlane.f32.xlu0 %v2399
  %v2401 = vpop.xlane.xlu0 %2400
  %v2402 = vmul.f32 %v2386, %v206
  %v2403 = vmul.f32 %v2389, %v206
  %v2404 = vmul.f32 %v2392, %v206
  %v2405 = vmul.f32 %v2395, %v206
  %v2406 = vmul.f32 %v2398, %v206
  %v2407 = vmul.f32 %v2401, %v206
  %v2408 = vadd.f32 %v2402, 1e-05
  %v2409 = vadd.f32 %v2403, 1e-05
  %v2410 = vadd.f32 %v2404, 1e-05
  %v2411 = vadd.f32 %v2405, 1e-05
  %v2412 = vadd.f32 %v2406, 1e-05
  %v2413 = vadd.f32 %v2407, 1e-05
  %v2414 = vrsqrt.pop %v2408
  %v2415 = vrsqrt.pop %v2409
  %v2416 = vrsqrt.pop %v2410
  %v2417 = vrsqrt.pop %v2411
  %v2418 = vrsqrt.pop %v2412
  %v2419 = vrsqrt.pop %v2413
  %v2420 = vmul.f32 %v2372, %v2414
  %v2421 = vmul.f32 %v2373, %v2415
  %v2422 = vmul.f32 %v2374, %v2416
  %v2423 = vmul.f32 %v2375, %v2417
  %v2424 = vmul.f32 %v2376, %v2418
  %v2425 = vmul.f32 %v2377, %v2419
  %v2426 = vlaneseq
  %v2427 = vshrl.u32 %v2426, 7
  %v2428 = vsub.s32 2, %v2427
  %v2429 = vrot.slane %v1512, %v2428
  %v2430 = vmul.f32 %v2420, %v2429
  %v2431 = vmul.f32 %v2421, %v2429
  %v2432 = vmul.f32 %v2422, %v2429
  %v2433 = vmul.f32 %v2423, %v2429
  %v2434 = vmul.f32 %v2424, %v2429
  %v2435 = vmul.f32 %v2425, %v2429
  %v2436 = vlaneseq
  %v2437 = vshrl.u32 %v2436, 7
  %v2438 = vsub.s32 3, %v2437
  %v2439 = vrot.slane %v1512, %v2438
  %v2440 = vadd.f32 %v2430, %v2439
  %v2441 = vadd.f32 %v2431, %v2439
  %v2442 = vadd.f32 %v2432, %v2439
  %v2443 = vadd.f32 %v2433, %v2439
  %v2444 = vadd.f32 %v2434, %v2439
  %v2445 = vadd.f32 %v2435, %v2439
  %v2446 = vpack.c.bf16 %v2441, %v2440
  %v2447 = vpack.c.bf16 %v2443, %v2442
  %v2448 = vpack.c.bf16 %v2445, %v2444
  %s2449 = scalar_lea.vmem %s8, 16
  %v2450 = vld [vmem:[%s2449] sm:$0xf]
  %v2451 = vld [vmem:[%s2449 + $0x4] sm:$0xf]
  %v2452 = vld [vmem:[%s2449 + $0x8] sm:$0xf]
  %v2453 = vld [vmem:[%s2449 + $0xc] sm:$0xf]
  %s2454 = scalar_lea.vmem %s9, 1
  %v2455 = vld [vmem:[%s2454] sm:$0x1]
  %v2457 = vlaneseq
  %v2458 = vshrl.u32 %v2457, 7
  %v2459 = vsub.s32 0, %v2458
  %v2460 = vrot.slane %v2455, %v2459
  %v2466 = vunpack.c.l.b16 %v2450
  %v2467 = vunpack.c.l.b16 %v2451
  %v2468 = vunpack.c.l.b16 %v2452
  %v2469 = vunpack.c.l.b16 %v2453
  %v2470 = vpack.c.b16 %v2467, %v2466
  %v2471 = vpack.c.b16 %v2469, %v2468
  %v2475 = vsel %vm187, %v2446, 0
  %v2478 = vsel %vm187, %v2447, 0
  %v2481 = vsel %vm187, %v2448, 0
  %2483 = vmatprep.subr.bf16.mxu0 0
  %2484 = vmatpush1.bf16.msra.mxu0 %v2470
  %2485 = vmatprep.subr.bf16.mxu0 0
  %2486 = vmatpush1.bf16.msra.mxu0 %v2471
  %2487 = vmatprep.subr.bf16.mxu0 0
  %2488 = vmatpush1.bf16.msra.mxu0 0
  %2489 = vmatprep.subr.bf16.mxu0 0
  %2490 = vmatpush1.bf16.msra.mxu0 0
  %2491 = vmatprep.subr.bf16.mxu0 0
  %2492 = vmatpush1.bf16.msra.mxu0 0
  %2493 = vmatprep.subr.bf16.mxu0 0
  %2494 = vmatpush1.bf16.msra.mxu0 0
  %2495 = vmatprep.subr.bf16.mxu0 0
  %2496 = vmatpush1.bf16.msra.mxu0 0
  %2497 = vmatprep.subr.bf16.mxu0 0
  %2498 = vmatpush1.bf16.msra.mxu0 0
  %2499 = vmatprep.subr.bf16.mxu0 0
  %2500 = vmatpush1.bf16.msra.mxu0 0
  %2501 = vmatprep.subr.bf16.mxu0 0
  %2502 = vmatpush1.bf16.msra.mxu0 0
  %2503 = vmatprep.subr.bf16.mxu0 0
  %2504 = vmatpush1.bf16.msra.mxu0 0
  %2505 = vmatprep.subr.bf16.mxu0 0
  %2506 = vmatpush1.bf16.msra.mxu0 0
  %2507 = vmatprep.subr.bf16.mxu0 0
  %2508 = vmatpush1.bf16.msra.mxu0 0
  %2509 = vmatprep.subr.bf16.mxu0 0
  %2510 = vmatpush1.bf16.msra.mxu0 0
  %2511 = vmatprep.subr.bf16.mxu0 0
  %2512 = vmatpush1.bf16.msra.mxu0 0
  %2513 = vmatprep.subr.bf16.mxu0 0
  %2514 = vmatpush1.bf16.msra.mxu0 0
  %2515 = vmatprep.mubr.bf16.mxu0 0
  %2516 = vmatmul.mubr.bf16.gmra.mrb[0].mxu0 %v2475
  %v2517 = vpop.f32.mrb[0].mxu0
  %v2518 = vadd.f32 %v2460, %v2517
  %v2519 = vpop.f32.mrb[0].mxu0
  %v2520 = vpop.f32.mrb[0].mxu0
  %v2521 = vadd.f32 %v2460, %v2520
  %v2522 = vpop.f32.mrb[0].mxu0
  %2523 = vmatprep.mubr.bf16.mxu0 0
  %2524 = vmatmul.mubr.bf16.gmra.mrb[0].mxu0 %v2478
  %v2525 = vpop.f32.mrb[0].mxu0
  %v2526 = vadd.f32 %v2460, %v2525
  %v2527 = vpop.f32.mrb[0].mxu0
  %v2528 = vpop.f32.mrb[0].mxu0
  %v2529 = vadd.f32 %v2460, %v2528
  %v2530 = vpop.f32.mrb[0].mxu0
  %2531 = vmatprep.mubr.bf16.mxu0 0
  %2532 = vmatmul.mubr.bf16.gmra.mrb[0].mxu0 %v2481
  %v2533 = vpop.f32.mrb[0].mxu0
  %v2534 = vadd.f32 %v2460, %v2533
  %v2535 = vpop.f32.mrb[0].mxu0
  %v2536 = vpop.f32.mrb[0].mxu0
  %v2537 = vadd.f32 %v2460, %v2536
  %v2538 = vpop.f32.mrb[0].mxu0
  %2539 = vdwg.mxu0
  %v2540 = vmul.f32 %v2518, 0.5
  %v2541 = vmul.f32 %v2521, 0.5
  %v2542 = vmul.f32 %v2526, 0.5
  %v2543 = vmul.f32 %v2529, 0.5
  %v2544 = vmul.f32 %v2534, 0.5
  %v2545 = vmul.f32 %v2537, 0.5
  %v2546 = vmul.f32 %v2518, 0.70710677
  %v2547 = vmul.f32 %v2521, 0.70710677
  %v2548 = vmul.f32 %v2526, 0.70710677
  %v2549 = vmul.f32 %v2529, 0.70710677
  %v2550 = vmul.f32 %v2534, 0.70710677
  %v2551 = vmul.f32 %v2537, 0.70710677
  %vm2552 = vcmp.ge.f32.partialorder %v2546, 0.0
  %vm2553 = vcmp.ge.f32.partialorder %v2547, 0.0
  %vm2554 = vcmp.ge.f32.partialorder %v2548, 0.0
  %vm2555 = vcmp.ge.f32.partialorder %v2549, 0.0
  %vm2556 = vcmp.ge.f32.partialorder %v2550, 0.0
  %vm2557 = vcmp.ge.f32.partialorder %v2551, 0.0
  %v2558 = vsel %vm2552, 1.0, -1.0
  %v2559 = vsel %vm2553, 1.0, -1.0
  %v2560 = vsel %vm2554, 1.0, -1.0
  %v2561 = vsel %vm2555, 1.0, -1.0
  %v2562 = vsel %vm2556, 1.0, -1.0
  %v2563 = vsel %vm2557, 1.0, -1.0
  %v2564 = vand.u32 2147483647, %v2546
  %v2565 = vand.u32 2147483647, %v2547
  %v2566 = vand.u32 2147483647, %v2548
  %v2567 = vand.u32 2147483647, %v2549
  %v2568 = vand.u32 2147483647, %v2550
  %v2569 = vand.u32 2147483647, %v2551
  %v2570 = vmul.f32 %v2564, 0.3275911
  %v2571 = vmul.f32 %v2565, 0.3275911
  %v2572 = vmul.f32 %v2566, 0.3275911
  %v2573 = vmul.f32 %v2567, 0.3275911
  %v2574 = vmul.f32 %v2568, 0.3275911
  %v2575 = vmul.f32 %v2569, 0.3275911
  %v2576 = vadd.f32 %v2570, 1.0
  %v2577 = vadd.f32 %v2571, 1.0
  %v2578 = vadd.f32 %v2572, 1.0
  %v2579 = vadd.f32 %v2573, 1.0
  %v2580 = vadd.f32 %v2574, 1.0
  %v2581 = vadd.f32 %v2575, 1.0
  %v2582 = vrcp.pop %v2576
  %v2583 = vmul.f32 1.0, %v2582
  %v2584 = vrcp.pop %v2577
  %v2585 = vmul.f32 1.0, %v2584
  %v2586 = vrcp.pop %v2578
  %v2587 = vmul.f32 1.0, %v2586
  %v2588 = vrcp.pop %v2579
  %v2589 = vmul.f32 1.0, %v2588
  %v2590 = vrcp.pop %v2580
  %v2591 = vmul.f32 1.0, %v2590
  %v2592 = vrcp.pop %v2581
  %v2593 = vmul.f32 1.0, %v2592
  %v2594 = vmul.f32 %v2583, 1.0614054
  %v2595 = vmul.f32 %v2585, 1.0614054
  %v2596 = vmul.f32 %v2587, 1.0614054
  %v2597 = vmul.f32 %v2589, 1.0614054
  %v2598 = vmul.f32 %v2591, 1.0614054
  %v2599 = vmul.f32 %v2593, 1.0614054
  %v2600 = vadd.f32 %v2594, -1.4531521
  %v2601 = vadd.f32 %v2595, -1.4531521
  %v2602 = vadd.f32 %v2596, -1.4531521
  %v2603 = vadd.f32 %v2597, -1.4531521
  %v2604 = vadd.f32 %v2598, -1.4531521
  %v2605 = vadd.f32 %v2599, -1.4531521
  %v2606 = vmul.f32 %v2600, %v2583
  %v2607 = vmul.f32 %v2601, %v2585
  %v2608 = vmul.f32 %v2602, %v2587
  %v2609 = vmul.f32 %v2603, %v2589
  %v2610 = vmul.f32 %v2604, %v2591
  %v2611 = vmul.f32 %v2605, %v2593
  %v2612 = vadd.f32 %v2606, 1.4214138
  %v2613 = vadd.f32 %v2607, 1.4214138
  %v2614 = vadd.f32 %v2608, 1.4214138
  %v2615 = vadd.f32 %v2609, 1.4214138
  %v2616 = vadd.f32 %v2610, 1.4214138
  %v2617 = vadd.f32 %v2611, 1.4214138
  %v2618 = vmul.f32 %v2612, %v2583
  %v2619 = vmul.f32 %v2613, %v2585
  %v2620 = vmul.f32 %v2614, %v2587
  %v2621 = vmul.f32 %v2615, %v2589
  %v2622 = vmul.f32 %v2616, %v2591
  %v2623 = vmul.f32 %v2617, %v2593
  %v2624 = vadd.f32 %v2618, -0.28449672
  %v2625 = vadd.f32 %v2619, -0.28449672
  %v2626 = vadd.f32 %v2620, -0.28449672
  %v2627 = vadd.f32 %v2621, -0.28449672
  %v2628 = vadd.f32 %v2622, -0.28449672
  %v2629 = vadd.f32 %v2623, -0.28449672
  %v2630 = vmul.f32 %v2624, %v2583
  %v2631 = vmul.f32 %v2625, %v2585
  %v2632 = vmul.f32 %v2626, %v2587
  %v2633 = vmul.f32 %v2627, %v2589
  %v2634 = vmul.f32 %v2628, %v2591
  %v2635 = vmul.f32 %v2629, %v2593
  %v2636 = vadd.f32 %v2630, 0.2548296
  %v2637 = vadd.f32 %v2631, 0.2548296
  %v2638 = vadd.f32 %v2632, 0.2548296
  %v2639 = vadd.f32 %v2633, 0.2548296
  %v2640 = vadd.f32 %v2634, 0.2548296
  %v2641 = vadd.f32 %v2635, 0.2548296
  %v2642 = vmul.f32 %v2636, %v2583
  %v2643 = vmul.f32 %v2637, %v2585
  %v2644 = vmul.f32 %v2638, %v2587
  %v2645 = vmul.f32 %v2639, %v2589
  %v2646 = vmul.f32 %v2640, %v2591
  %v2647 = vmul.f32 %v2641, %v2593
  %v2648 = vsub.f32 0.0, %v2564
  %v2649 = vsub.f32 0.0, %v2565
  %v2650 = vsub.f32 0.0, %v2566
  %v2651 = vsub.f32 0.0, %v2567
  %v2652 = vsub.f32 0.0, %v2568
  %v2653 = vsub.f32 0.0, %v2569
  %v2654 = vmul.f32 %v2648, %v2564
  %v2655 = vmul.f32 %v2649, %v2565
  %v2656 = vmul.f32 %v2650, %v2566
  %v2657 = vmul.f32 %v2651, %v2567
  %v2658 = vmul.f32 %v2652, %v2568
  %v2659 = vmul.f32 %v2653, %v2569
  %v2660 = vmul.f32 %v2654, 1.442695
  %v2661 = vpow.pop %v2660
  %v2662 = vmul.f32 %v2655, 1.442695
  %v2663 = vpow.pop %v2662
  %v2664 = vmul.f32 %v2656, 1.442695
  %v2665 = vpow.pop %v2664
  %v2666 = vmul.f32 %v2657, 1.442695
  %v2667 = vpow.pop %v2666
  %v2668 = vmul.f32 %v2658, 1.442695
  %v2669 = vpow.pop %v2668
  %v2670 = vmul.f32 %v2659, 1.442695
  %v2671 = vpow.pop %v2670
  %v2672 = vmul.f32 %v2642, %v2661
  %v2673 = vmul.f32 %v2643, %v2663
  %v2674 = vmul.f32 %v2644, %v2665
  %v2675 = vmul.f32 %v2645, %v2667
  %v2676 = vmul.f32 %v2646, %v2669
  %v2677 = vmul.f32 %v2647, %v2671
  %v2678 = vsub.f32 1.0, %v2672
  %v2679 = vsub.f32 1.0, %v2673
  %v2680 = vsub.f32 1.0, %v2674
  %v2681 = vsub.f32 1.0, %v2675
  %v2682 = vsub.f32 1.0, %v2676
  %v2683 = vsub.f32 1.0, %v2677
  %v2684 = vmul.f32 %v2558, %v2678
  %v2685 = vmul.f32 %v2559, %v2679
  %v2686 = vmul.f32 %v2560, %v2680
  %v2687 = vmul.f32 %v2561, %v2681
  %v2688 = vmul.f32 %v2562, %v2682
  %v2689 = vmul.f32 %v2563, %v2683
  %v2690 = vadd.f32 %v2684, 1.0
  %v2691 = vadd.f32 %v2685, 1.0
  %v2692 = vadd.f32 %v2686, 1.0
  %v2693 = vadd.f32 %v2687, 1.0
  %v2694 = vadd.f32 %v2688, 1.0
  %v2695 = vadd.f32 %v2689, 1.0
  %v2696 = vmul.f32 %v2540, %v2690
  %v2697 = vmul.f32 %v2541, %v2691
  %v2698 = vmul.f32 %v2542, %v2692
  %v2699 = vmul.f32 %v2543, %v2693
  %v2700 = vmul.f32 %v2544, %v2694
  %v2701 = vmul.f32 %v2545, %v2695
  %v2702 = vpack.c.bf16 %v2697, %v2696
  %v2703 = vpack.c.bf16 %v2699, %v2698
  %v2704 = vpack.c.bf16 %v2701, %v2700
  %s2705 = scalar_lea.vmem %s10, 64
  %v2706 = vld [vmem:[%s2705] sm:$0xf]
  %v2707 = vld [vmem:[%s2705 + $0x4] sm:$0xf]
  %v2708 = vld [vmem:[%s2705 + $0x8] sm:$0xf]
  %v2709 = vld [vmem:[%s2705 + $0xc] sm:$0xf]
  %v2710 = vld [vmem:[%s2705 + $0x10] sm:$0xf]
  %v2711 = vld [vmem:[%s2705 + $0x14] sm:$0xf]
  %v2712 = vld [vmem:[%s2705 + $0x18] sm:$0xf]
  %v2713 = vld [vmem:[%s2705 + $0x1c] sm:$0xf]
  %v2714 = vld [vmem:[%s2705 + $0x20] sm:$0xf]
  %v2715 = vld [vmem:[%s2705 + $0x24] sm:$0xf]
  %v2716 = vld [vmem:[%s2705 + $0x28] sm:$0xf]
  %v2717 = vld [vmem:[%s2705 + $0x2c] sm:$0xf]
  %v2718 = vld [vmem:[%s2705 + $0x30] sm:$0xf]
  %v2719 = vld [vmem:[%s2705 + $0x34] sm:$0xf]
  %v2720 = vld [vmem:[%s2705 + $0x38] sm:$0xf]
  %v2721 = vld [vmem:[%s2705 + $0x3c] sm:$0xf]
  %s2722 = scalar_lea.vmem %s11, 1
  %v2723 = vld [vmem:[%s2722] sm:$0x1]
  %v2725 = vlaneseq
  %v2726 = vshrl.u32 %v2725, 7
  %v2727 = vsub.s32 0, %v2726
  %v2728 = vrot.slane %v2723, %v2727
  %v2746 = vunpack.c.l.b16 %v2706
  %v2747 = vunpack.c.l.b16 %v2707
  %v2748 = vunpack.c.l.b16 %v2708
  %v2749 = vunpack.c.l.b16 %v2709
  %v2750 = vunpack.c.l.b16 %v2710
  %v2751 = vunpack.c.l.b16 %v2711
  %v2752 = vunpack.c.l.b16 %v2712
  %v2753 = vunpack.c.l.b16 %v2713
  %v2754 = vunpack.c.l.b16 %v2714
  %v2755 = vunpack.c.l.b16 %v2715
  %v2756 = vunpack.c.l.b16 %v2716
  %v2757 = vunpack.c.l.b16 %v2717
  %v2758 = vunpack.c.l.b16 %v2718
  %v2759 = vunpack.c.l.b16 %v2719
  %v2760 = vunpack.c.l.b16 %v2720
  %v2761 = vunpack.c.l.b16 %v2721
  %v2762 = vpack.c.b16 %v2747, %v2746
  %v2763 = vpack.c.b16 %v2749, %v2748
  %v2764 = vpack.c.b16 %v2751, %v2750
  %v2765 = vpack.c.b16 %v2753, %v2752
  %v2766 = vpack.c.b16 %v2755, %v2754
  %v2767 = vpack.c.b16 %v2757, %v2756
  %v2768 = vpack.c.b16 %v2759, %v2758
  %v2769 = vpack.c.b16 %v2761, %v2760
  %2778 = vmatprep.subr.bf16.mxu0 0
  %2779 = vmatpush1.bf16.msra.mxu0 %v2762
  %2780 = vmatprep.subr.bf16.mxu0 0
  %2781 = vmatpush1.bf16.msra.mxu0 %v2763
  %2782 = vmatprep.subr.bf16.mxu0 0
  %2783 = vmatpush1.bf16.msra.mxu0 %v2764
  %2784 = vmatprep.subr.bf16.mxu0 0
  %2785 = vmatpush1.bf16.msra.mxu0 %v2765
  %2786 = vmatprep.subr.bf16.mxu0 0
  %2787 = vmatpush1.bf16.msra.mxu0 %v2766
  %2788 = vmatprep.subr.bf16.mxu0 0
  %2789 = vmatpush1.bf16.msra.mxu0 %v2767
  %2790 = vmatprep.subr.bf16.mxu0 0
  %2791 = vmatpush1.bf16.msra.mxu0 %v2768
  %2792 = vmatprep.subr.bf16.mxu0 0
  %2793 = vmatpush1.bf16.msra.mxu0 %v2769
  %2794 = vmatprep.subr.bf16.mxu0 0
  %2795 = vmatpush1.bf16.msra.mxu0 0
  %2796 = vmatprep.subr.bf16.mxu0 0
  %2797 = vmatpush1.bf16.msra.mxu0 0
  %2798 = vmatprep.subr.bf16.mxu0 0
  %2799 = vmatpush1.bf16.msra.mxu0 0
  %2800 = vmatprep.subr.bf16.mxu0 0
  %2801 = vmatpush1.bf16.msra.mxu0 0
  %2802 = vmatprep.subr.bf16.mxu0 0
  %2803 = vmatpush1.bf16.msra.mxu0 0
  %2804 = vmatprep.subr.bf16.mxu0 0
  %2805 = vmatpush1.bf16.msra.mxu0 0
  %2806 = vmatprep.subr.bf16.mxu0 0
  %2807 = vmatpush1.bf16.msra.mxu0 0
  %2808 = vmatprep.subr.bf16.mxu0 0
  %2809 = vmatpush1.bf16.msra.mxu0 0
  %2810 = vmatprep.mubr.bf16.mxu0 0
  %2811 = vmatmul.mubr.bf16.gmra.mrb[0].mxu0 %v2702
  %v2812 = vpop.f32.mrb[0].mxu0
  %v2813 = vadd.f32 %v2728, %v2812
  %v2814 = vpop.f32.mrb[0].mxu0
  %v2815 = vpop.f32.mrb[0].mxu0
  %v2816 = vadd.f32 %v2728, %v2815
  %v2817 = vpop.f32.mrb[0].mxu0
  %2818 = vmatprep.mubr.bf16.mxu0 0
  %2819 = vmatmul.mubr.bf16.gmra.mrb[0].mxu0 %v2703
  %v2820 = vpop.f32.mrb[0].mxu0
  %v2821 = vadd.f32 %v2728, %v2820
  %v2822 = vpop.f32.mrb[0].mxu0
  %v2823 = vpop.f32.mrb[0].mxu0
  %v2824 = vadd.f32 %v2728, %v2823
  %v2825 = vpop.f32.mrb[0].mxu0
  %2826 = vmatprep.mubr.bf16.mxu0 0
  %2827 = vmatmul.mubr.bf16.gmra.mrb[0].mxu0 %v2704
  %v2828 = vpop.f32.mrb[0].mxu0
  %v2829 = vadd.f32 %v2728, %v2828
  %v2830 = vpop.f32.mrb[0].mxu0
  %v2831 = vpop.f32.mrb[0].mxu0
  %v2832 = vadd.f32 %v2728, %v2831
  %v2833 = vpop.f32.mrb[0].mxu0
  %2834 = vdwg.mxu0
  %v2835 = vadd.f32 %v2342, %v2813
  %v2836 = vadd.f32 %v2343, %v2816
  %v2837 = vadd.f32 %v2344, %v2821
  %v2838 = vadd.f32 %v2345, %v2824
  %v2839 = vadd.f32 %v2346, %v2829
  %v2840 = vadd.f32 %v2347, %v2832
  %v2841 = vld [vmem:[%s13] sm:$0x1]
  %v2842 = vld [vmem:[%s13 + $0x1] sm:$0x1]
  %v2843 = vsel %vm187, %v2835, 0.0
  %2844 = vadd.xlane.f32.xlu0 %v2843
  %v2845 = vpop.xlane.xlu0 %2844
  %v2846 = vsel %vm187, %v2836, 0.0
  %2847 = vadd.xlane.f32.xlu0 %v2846
  %v2848 = vpop.xlane.xlu0 %2847
  %v2849 = vsel %vm187, %v2837, 0.0
  %2850 = vadd.xlane.f32.xlu0 %v2849
  %v2851 = vpop.xlane.xlu0 %2850
  %v2852 = vsel %vm187, %v2838, 0.0
  %2853 = vadd.xlane.f32.xlu0 %v2852
  %v2854 = vpop.xlane.xlu0 %2853
  %v2855 = vsel %vm187, %v2839, 0.0
  %2856 = vadd.xlane.f32.xlu0 %v2855
  %v2857 = vpop.xlane.xlu0 %2856
  %v2858 = vsel %vm187, %v2840, 0.0
  %2859 = vadd.xlane.f32.xlu0 %v2858
  %v2860 = vpop.xlane.xlu0 %2859
  %v2861 = vmul.f32 %v2845, %v206
  %v2862 = vmul.f32 %v2848, %v206
  %v2863 = vmul.f32 %v2851, %v206
  %v2864 = vmul.f32 %v2854, %v206
  %v2865 = vmul.f32 %v2857, %v206
  %v2866 = vmul.f32 %v2860, %v206
  %v2867 = vsub.f32 %v2835, %v2861
  %v2868 = vsub.f32 %v2836, %v2862
  %v2869 = vsub.f32 %v2837, %v2863
  %v2870 = vsub.f32 %v2838, %v2864
  %v2871 = vsub.f32 %v2839, %v2865
  %v2872 = vsub.f32 %v2840, %v2866
  %v2873 = vmul.f32 %v2867, %v2867
  %v2874 = vmul.f32 %v2868, %v2868
  %v2875 = vmul.f32 %v2869, %v2869
  %v2876 = vmul.f32 %v2870, %v2870
  %v2877 = vmul.f32 %v2871, %v2871
  %v2878 = vmul.f32 %v2872, %v2872
  %v2879 = vsel %vm187, %v2873, 0.0
  %2880 = vadd.xlane.f32.xlu0 %v2879
  %v2881 = vpop.xlane.xlu0 %2880
  %v2882 = vsel %vm187, %v2874, 0.0
  %2883 = vadd.xlane.f32.xlu0 %v2882
  %v2884 = vpop.xlane.xlu0 %2883
  %v2885 = vsel %vm187, %v2875, 0.0
  %2886 = vadd.xlane.f32.xlu0 %v2885
  %v2887 = vpop.xlane.xlu0 %2886
  %v2888 = vsel %vm187, %v2876, 0.0
  %2889 = vadd.xlane.f32.xlu0 %v2888
  %v2890 = vpop.xlane.xlu0 %2889
  %v2891 = vsel %vm187, %v2877, 0.0
  %2892 = vadd.xlane.f32.xlu0 %v2891
  %v2893 = vpop.xlane.xlu0 %2892
  %v2894 = vsel %vm187, %v2878, 0.0
  %2895 = vadd.xlane.f32.xlu0 %v2894
  %v2896 = vpop.xlane.xlu0 %2895
  %v2897 = vmul.f32 %v2881, %v206
  %v2898 = vmul.f32 %v2884, %v206
  %v2899 = vmul.f32 %v2887, %v206
  %v2900 = vmul.f32 %v2890, %v206
  %v2901 = vmul.f32 %v2893, %v206
  %v2902 = vmul.f32 %v2896, %v206
  %v2903 = vadd.f32 %v2897, 1e-05
  %v2904 = vadd.f32 %v2898, 1e-05
  %v2905 = vadd.f32 %v2899, 1e-05
  %v2906 = vadd.f32 %v2900, 1e-05
  %v2907 = vadd.f32 %v2901, 1e-05
  %v2908 = vadd.f32 %v2902, 1e-05
  %v2909 = vrsqrt.pop %v2903
  %v2910 = vrsqrt.pop %v2904
  %v2911 = vrsqrt.pop %v2905
  %v2912 = vrsqrt.pop %v2906
  %v2913 = vrsqrt.pop %v2907
  %v2914 = vrsqrt.pop %v2908
  %v2915 = vmul.f32 %v2867, %v2909
  %v2916 = vmul.f32 %v2868, %v2910
  %v2917 = vmul.f32 %v2869, %v2911
  %v2918 = vmul.f32 %v2870, %v2912
  %v2919 = vmul.f32 %v2871, %v2913
  %v2920 = vmul.f32 %v2872, %v2914
  %v2921 = vlaneseq
  %v2922 = vshrl.u32 %v2921, 7
  %v2923 = vsub.s32 0, %v2922
  %v2924 = vrot.slane %v2841, %v2923
  %v2925 = vmul.f32 %v2915, %v2924
  %v2926 = vmul.f32 %v2916, %v2924
  %v2927 = vmul.f32 %v2917, %v2924
  %v2928 = vmul.f32 %v2918, %v2924
  %v2929 = vmul.f32 %v2919, %v2924
  %v2930 = vmul.f32 %v2920, %v2924
  %v2931 = vlaneseq
  %v2932 = vshrl.u32 %v2931, 7
  %v2933 = vsub.s32 0, %v2932
  %v2934 = vrot.slane %v2842, %v2933
  %v2935 = vadd.f32 %v2925, %v2934
  %v2936 = vadd.f32 %v2926, %v2934
  %v2937 = vadd.f32 %v2927, %v2934
  %v2938 = vadd.f32 %v2928, %v2934
  %v2939 = vadd.f32 %v2929, %v2934
  %v2940 = vadd.f32 %v2930, %v2934
  %v2941 = vpack.c.bf16 %v2936, %v2935
  %v2942 = vpack.c.bf16 %v2938, %v2937
  %v2943 = vpack.c.bf16 %v2940, %v2939
  %v2944 = vld [vmem:[%s14] sm:$0xf]
  %v2945 = vld [vmem:[%s14 + $0x4] sm:$0xf]
  %v2946 = vld [vmem:[%s14 + $0x8] sm:$0xf]
  %v2947 = vld [vmem:[%s14 + $0xc] sm:$0xf]
  %v2948 = vld [vmem:[%s15] sm:$0x1]
  %v2950 = vlaneseq
  %v2951 = vshrl.u32 %v2950, 7
  %v2952 = vsub.s32 0, %v2951
  %v2953 = vrot.slane %v2948, %v2952
  %v2959 = vunpack.c.l.b16 %v2944
  %v2960 = vunpack.c.l.b16 %v2945
  %v2961 = vunpack.c.l.b16 %v2946
  %v2962 = vunpack.c.l.b16 %v2947
  %v2963 = vpack.c.b16 %v2960, %v2959
  %v2964 = vpack.c.b16 %v2962, %v2961
  %v2968 = vsel %vm187, %v2941, 0
  %v2971 = vsel %vm187, %v2942, 0
  %v2974 = vsel %vm187, %v2943, 0
  %2976 = vmatprep.subr.bf16.mxu0 0
  %2977 = vmatpush1.bf16.msra.mxu0 %v2963
  %2978 = vmatprep.subr.bf16.mxu0 0
  %2979 = vmatpush1.bf16.msra.mxu0 %v2964
  %2980 = vmatprep.subr.bf16.mxu0 0
  %2981 = vmatpush1.bf16.msra.mxu0 0
  %2982 = vmatprep.subr.bf16.mxu0 0
  %2983 = vmatpush1.bf16.msra.mxu0 0
  %2984 = vmatprep.subr.bf16.mxu0 0
  %2985 = vmatpush1.bf16.msra.mxu0 0
  %2986 = vmatprep.subr.bf16.mxu0 0
  %2987 = vmatpush1.bf16.msra.mxu0 0
  %2988 = vmatprep.subr.bf16.mxu0 0
  %2989 = vmatpush1.bf16.msra.mxu0 0
  %2990 = vmatprep.subr.bf16.mxu0 0
  %2991 = vmatpush1.bf16.msra.mxu0 0
  %2992 = vmatprep.subr.bf16.mxu0 0
  %2993 = vmatpush1.bf16.msra.mxu0 0
  %2994 = vmatprep.subr.bf16.mxu0 0
  %2995 = vmatpush1.bf16.msra.mxu0 0
  %2996 = vmatprep.subr.bf16.mxu0 0
  %2997 = vmatpush1.bf16.msra.mxu0 0
  %2998 = vmatprep.subr.bf16.mxu0 0
  %2999 = vmatpush1.bf16.msra.mxu0 0
  %3000 = vmatprep.subr.bf16.mxu0 0
  %3001 = vmatpush1.bf16.msra.mxu0 0
  %3002 = vmatprep.subr.bf16.mxu0 0
  %3003 = vmatpush1.bf16.msra.mxu0 0
  %3004 = vmatprep.subr.bf16.mxu0 0
  %3005 = vmatpush1.bf16.msra.mxu0 0
  %3006 = vmatprep.subr.bf16.mxu0 0
  %3007 = vmatpush1.bf16.msra.mxu0 0
  %3008 = vmatprep.mubr.bf16.mxu0 0
  %3009 = vmatmul.mubr.bf16.gmra.mrb[0].mxu0 %v2968
  %v3010 = vpop.f32.mrb[0].mxu0
  %v3011 = vadd.f32 %v2953, %v3010
  %v3012 = vpop.f32.mrb[0].mxu0
  %v3013 = vpop.f32.mrb[0].mxu0
  %v3014 = vadd.f32 %v2953, %v3013
  %v3015 = vpop.f32.mrb[0].mxu0
  %3016 = vmatprep.mubr.bf16.mxu0 0
  %3017 = vmatmul.mubr.bf16.gmra.mrb[0].mxu0 %v2971
  %v3018 = vpop.f32.mrb[0].mxu0
  %v3019 = vadd.f32 %v2953, %v3018
  %v3020 = vpop.f32.mrb[0].mxu0
  %v3021 = vpop.f32.mrb[0].mxu0
  %v3022 = vadd.f32 %v2953, %v3021
  %v3023 = vpop.f32.mrb[0].mxu0
  %3024 = vmatprep.mubr.bf16.mxu0 0
  %3025 = vmatmul.mubr.bf16.gmra.mrb[0].mxu0 %v2974
  %v3026 = vpop.f32.mrb[0].mxu0
  %v3027 = vadd.f32 %v2953, %v3026
  %v3028 = vpop.f32.mrb[0].mxu0
  %v3029 = vpop.f32.mrb[0].mxu0
  %v3030 = vadd.f32 %v2953, %v3029
  %v3031 = vpop.f32.mrb[0].mxu0
  %3032 = vdwg.mxu0
  %3033 = vst [vmem:[%s16] sm:$0xff] %v3011
  %3034 = vst [vmem:[%s16 + $0x8] sm:$0xff] %v3014
  %3035 = vst [vmem:[%s16 + $0x10] sm:$0xff] %v3019
  %3036 = vst [vmem:[%s16 + $0x18] sm:$0xff] %v3022
  %3037 = vst [vmem:[%s16 + $0x20] sm:$0xff] %v3027
  %3038 = vst [vmem:[%s16 + $0x28] sm:$0xff] %v3030
  // Predicated region
  $region66: #{vit_forward_pallas.1} parent=0 // pred_check
    _
  $region67: #{vit_forward_pallas.1} parent=0 // pred_check_branch
    %3040 = sbr.rel (0) target = $region69
  $region68: #{vit_forward_pallas.1} parent=0 // pred_region
    _
  $region69: #{vit_forward_pallas.1} parent=0 // pred_fallthru
    _
  // Predicated region
  $region70: #{vit_forward_pallas.1} parent=0 // pred_check
    _
  $region71: #{vit_forward_pallas.1} parent=0 // pred_check_branch
    %3042 = sbr.rel (0) target = $region73
  $region72: #{vit_forward_pallas.1} parent=0 // pred_region
    _
  $region73: #{vit_forward_pallas.1} parent=0 // pred_fallthru
    _

</llo_original>
